<compile_context>
chip_gen: v7x
topology: tpu7x:2x2x1
jax: 0.10.0
libtpu: 0.0.40
codegen_flags: <defaults>
</compile_context>

<pallas_src>
import numpy as np
import jax
import jax.numpy as jnp
from jax.experimental import pallas as pl
from jax.experimental.pallas import tpu as pltpu

LANE = 128


def _round_up(x, m):
    return (x + m - 1) // m * m


def _pick_nb(n):
    """Images per grid step: multiple of 8, <= 64, >= 2 grid steps when the batch allows."""
    half = _round_up(n, 8) // 2
    return int(min(64, max(8, _round_up(half, 8))))


# Input image rows are pre-permuted (cheap XLA gather on the raw 28x28 input) so that the
# rows feeding conv1 output row y = 4t + s (s = 2q + p + dy) form a CONTIGUOUS row slice
# inside the kernel: permuted row index r = (s % 4) * 7 + s // 4 + t.
_PERM_Y = np.array([4 * (r % 7) + (r // 7) for r in range(28)], dtype=np.int32)


# ---------------------------------------------------------------------------
# One-time weight re-layout (model-load time; hoisted out of the jitted path)
# ---------------------------------------------------------------------------
def prepare_params(params):
    w1 = np.asarray(params["conv1_w"], np.float32)   # (10, 1, 5, 5)
    b1 = np.asarray(params["conv1_b"], np.float32)   # (10,)
    w2 = np.asarray(params["conv2_w"], np.float32)   # (20, 10, 5, 5)
    b2 = np.asarray(params["conv2_b"], np.float32)   # (20,)
    f1w = np.asarray(params["fc1_w"], np.float32)    # (50, 320)
    f1b = np.asarray(params["fc1_b"], np.float32)
    f2w = np.asarray(params["fc2_w"], np.float32)    # (10, 50)
    f2b = np.asarray(params["fc2_b"], np.float32)

    # conv1 Toeplitz: T1[dy*28 + x_in, xpar*192 + x1*16 + c] = w1[c, 0, dy, x_in - (2*x1 + xpar)]
    t1 = np.zeros((5, 28, 2, 12, 16), np.float32)
    for dy in range(5):
        for dx in range(5):
            for xpar in range(2):
                x1 = np.arange(12)
                x_in = 2 * x1 + xpar + dx
                t1[dy, x_in, xpar, x1, :10] = w1[:, 0, dy, dx][None, :]
    t1 = t1.reshape(140, 384)
    b1t = np.zeros((1, 12, 16), np.float32)
    b1t[0, :, :10] = b1[None, :]
    b1t = b1t.reshape(1, 192)

    # conv2 Toeplitz: T2[dy*192 + x1*16 + ci, x2par*128 + j*32 + c2] = w2[c2, ci, dy, x1 - (2*j + x2par)]
    t2 = np.zeros((5, 12, 16, 2, 4, 32), np.float32)
    for dy in range(5):
        for dx in range(5):
            for xpar in range(2):
                j = np.arange(4)
                x1 = 2 * j + xpar + dx
                t2[dy, x1, :10, xpar, j, :20] = w2[:, :, dy, dx].T
    t2 = t2.reshape(960, 256)
    b2t = np.zeros((1, 4, 32), np.float32)
    b2t[0, :, :20] = b2[None, :]
    b2t = b2t.reshape(1, 128)

    # fc1 consumes the pooled conv2 tile as (nb, 512) with lane index i*128 + j*32 + c2;
    # PyTorch's NCHW .view(-1, 320) order (f = c2*16 + i*4 + j) is folded in here.
    fw1 = np.zeros((4, 4, 32, 128), np.float32)
    fw1[:, :, :20, :50] = f1w.reshape(50, 20, 4, 4).transpose(2, 3, 1, 0)
    fw1 = fw1.reshape(512, 128)
    fb1 = np.zeros((1, 128), np.float32)
    fb1[0, :50] = f1b

    fw2 = np.zeros((128, 128), np.float32)
    fw2[:50, :10] = f2w.T
    fb2 = np.zeros((1, 128), np.float32)
    fb2[0, :10] = f2b

    return {
        "t1": jnp.asarray(t1, jnp.bfloat16), "b1": jnp.asarray(b1t),
        "t2": jnp.asarray(t2, jnp.bfloat16), "b2": jnp.asarray(b2t),
        "fw1": jnp.asarray(fw1, jnp.bfloat16), "fb1": jnp.asarray(fb1),
        "fw2": jnp.asarray(fw2, jnp.bfloat16), "fb2": jnp.asarray(fb2),
    }


# ---------------------------------------------------------------------------
# Fused whole-network kernel (one batch tile of nb images per grid step)
# ---------------------------------------------------------------------------
def _make_kernel(nb):
    def kernel(x_ref, t1_ref, b1_ref, t2_ref, b2_ref,
               fw1_ref, fb1_ref, fw2_ref, fb2_ref, o_ref):
        x = x_ref[...]                                      # (28*nb, 28) bf16, rows = (m*7+t)*nb + n

        # ---- conv1 (5x5, 1->10) + 2x2 max-pool + ReLU: 5 Toeplitz matmuls over width ----
        acc1 = None
        for dy in range(5):
            blocks = []
            for p in range(2):                              # p: conv-row pool parity
                for q in range(2):                          # q: pooled-row parity (conv2 slicing)
                    s = 2 * q + p + dy
                    start = ((s % 4) * 7 + s // 4) * nb
                    blocks.append(x[start:start + 6 * nb, :])
            lhs = jnp.concatenate(blocks, axis=0)           # (24*nb, 28), rows = (p, q, t, n)
            part = jnp.dot(lhs, t1_ref[dy * 28:(dy + 1) * 28, :],
                           preferred_element_type=jnp.float32)
            acc1 = part if acc1 is None else acc1 + part    # (24*nb, 384)
        acc1 = jnp.maximum(acc1[:12 * nb, :], acc1[12 * nb:, :])   # pool over row parity p
        acc1 = jnp.maximum(acc1[:, :192], acc1[:, 192:])           # pool over col parity
        h1 = jnp.maximum(acc1 + b1_ref[...], 0.0).astype(jnp.bfloat16)  # (12*nb, 192)

        # ---- conv2 (5x5, 10->20) + 2x2 max-pool + ReLU -----------------------------------
        # TODO(synk): Dropout2d is treated as identity (inference mode).
        acc2 = None
        for dy in range(5):
            blocks = []
            for p2 in range(2):
                s = p2 + dy
                start = ((s % 2) * 6 + s // 2) * nb
                blocks.append(h1[start:start + 4 * nb, :])
            lhs = jnp.concatenate(blocks, axis=0)           # (8*nb, 192), rows = (p2, i, n)
            part = jnp.dot(lhs, t2_ref[dy * 192:(dy + 1) * 192, :],
                           preferred_element_type=jnp.float32)
            acc2 = part if acc2 is None else acc2 + part    # (8*nb, 256)
        acc2 = jnp.maximum(acc2[:4 * nb, :], acc2[4 * nb:, :])
        acc2 = jnp.maximum(acc2[:, :128], acc2[:, 128:])
        h2 = jnp.maximum(acc2 + b2_ref[...], 0.0).astype(jnp.bfloat16)  # (4*nb, 128)

        # ---- fc1 + ReLU + (F.dropout == identity in eval) + fc2 --------------------------
        hcat = jnp.concatenate([h2[i * nb:(i + 1) * nb, :] for i in range(4)], axis=1)  # (nb, 512)
        a1 = jnp.dot(hcat, fw1_ref[...], preferred_element_type=jnp.float32) + fb1_ref[...]
        a1 = jnp.maximum(a1, 0.0).astype(jnp.bfloat16)
        logits = jnp.dot(a1, fw2_ref[...], preferred_element_type=jnp.float32) + fb2_ref[...]
        o_ref[...] = logits                                 # (nb, 128) f32, cols >= 10 are padding
    return kernel


# ---------------------------------------------------------------------------
# SimpleNet forward
# ---------------------------------------------------------------------------
@jax.jit
def simplenet_forward(x, prep):
    # x: (N, 1, 28, 28) float32, prep: output of prepare_params (already padded/bf16)
    n = x.shape[0]
    nb = _pick_nb(n)
    n_pad = _round_up(n, nb)
    g = n_pad // nb

    xs = x.reshape(n, 28, 28)
    if n_pad != n:
        xs = jnp.pad(xs, ((0, n_pad - n), (0, 0), (0, 0)))
    xs = xs[:, _PERM_Y, :]                                  # rows -> (mod-4, quarter) order
    xs = xs.reshape(g, nb, 28, 28).transpose(0, 2, 1, 3)    # image index innermost
    xin = xs.reshape(g * 28 * nb, 28).astype(jnp.bfloat16)  # only per-call HBM activation traffic

    out = pl.pallas_call(
        _make_kernel(nb),
        out_shape=jax.ShapeDtypeStruct((n_pad, LANE), jnp.float32),
        grid=(g,),
        in_specs=[
            pl.BlockSpec((28 * nb, 28), lambda i: (i, 0)),   # raw input tile (nb images)
            pl.BlockSpec((140, 384), lambda i: (0, 0)),      # conv1 Toeplitz weights (resident)
            pl.BlockSpec((1, 192), lambda i: (0, 0)),
            pl.BlockSpec((960, 256), lambda i: (0, 0)),      # conv2 Toeplitz weights (resident)
            pl.BlockSpec((1, 128), lambda i: (0, 0)),
            pl.BlockSpec((512, 128), lambda i: (0, 0)),      # fc1 weights (resident)
            pl.BlockSpec((1, 128), lambda i: (0, 0)),
            pl.BlockSpec((128, 128), lambda i: (0, 0)),      # fc2 weights (resident)
            pl.BlockSpec((1, 128), lambda i: (0, 0)),
        ],
        out_specs=pl.BlockSpec((nb, LANE), lambda i: (i, 0)),
        compiler_params=pltpu.CompilerParams(dimension_semantics=("parallel",)),
    )(xin, prep["t1"], prep["b1"], prep["t2"], prep["b2"],
      prep["fw1"], prep["fb1"], prep["fw2"], prep["fb2"])
    return out[:n, :10]                                      # (N, 10) f32


# ---------------------------------------------------------------------------
# Deterministic parameter init (PyTorch default shapes, uniform(-1/sqrt(fan_in)))
# ---------------------------------------------------------------------------
def init_params(key):
    ks = jax.random.split(key, 8)

    def u(k, shape, fan_in):
        bound = 1.0 / jnp.sqrt(float(fan_in))
        return jax.random.uniform(k, shape, jnp.float32, -bound, bound)

    return {
        "conv1_w": u(ks[0], (10, 1, 5, 5), 1 * 5 * 5),
        "conv1_b": u(ks[1], (10,), 1 * 5 * 5),
        "conv2_w": u(ks[2], (20, 10, 5, 5), 10 * 5 * 5),
        "conv2_b": u(ks[3], (20,), 10 * 5 * 5),
        "fc1_w":   u(ks[4], (50, 320), 320),
        "fc1_b":   u(ks[5], (50,), 320),
        "fc2_w":   u(ks[6], (10, 50), 50),
        "fc2_b":   u(ks[7], (10,), 50),
    }


if __name__ == "__main__":
    root = jax.random.PRNGKey(0)
    k_params, k_x = jax.random.split(root)
    params = init_params(k_params)
    prep = prepare_params(params)          # one-time weight re-layout (out of the jitted path)
    # 320 = 20 * 4 * 4 forces a 28x28 single-channel input (MNIST).
    x = jax.random.normal(k_x, (2, 1, 28, 28), dtype=jnp.float32)

    out = simplenet_forward(x, prep)
    out = jax.block_until_ready(out)
    assert out.shape == (2, 10) and out.dtype == jnp.float32
    assert bool(jnp.all(jnp.isfinite(out)))
    print("KERNEL_OK")
</pallas_src>

<mosaic_0001>
module attributes {stable_mosaic.version = 11 : i64} {
  func.func @kernel(%arg0: i32, %arg1: memref<224x28xbf16, #tpu.memory_space<vmem>>, %arg2: memref<140x384xbf16, #tpu.memory_space<vmem>>, %arg3: memref<1x192xf32, #tpu.memory_space<vmem>>, %arg4: memref<960x256xbf16, #tpu.memory_space<vmem>>, %arg5: memref<1x128xf32, #tpu.memory_space<vmem>>, %arg6: memref<512x128xbf16, #tpu.memory_space<vmem>>, %arg7: memref<1x128xf32, #tpu.memory_space<vmem>>, %arg8: memref<128x128xbf16, #tpu.memory_space<vmem>>, %arg9: memref<1x128xf32, #tpu.memory_space<vmem>>, %arg10: memref<8x128xf32, #tpu.memory_space<vmem>>) attributes {dimension_semantics = [#tpu.dimension_semantics<parallel>], iteration_bounds = array<i64: 1>, scalar_prefetch = 0 : i64, scratch_operands = 0 : i64, tpu.core_type = #tpu.core_type<tc>, window_params = [{transform_indices = @transform_0, window_bounds = array<i64: 224, 28>}, {pipeline_mode = #tpu.pipeline_mode<synchronous>, transform_indices = @transform_1, window_bounds = array<i64: 140, 384>}, {pipeline_mode = #tpu.pipeline_mode<synchronous>, transform_indices = @transform_2, window_bounds = array<i64: 1, 192>}, {pipeline_mode = #tpu.pipeline_mode<synchronous>, transform_indices = @transform_3, window_bounds = array<i64: 960, 256>}, {pipeline_mode = #tpu.pipeline_mode<synchronous>, transform_indices = @transform_4, window_bounds = array<i64: 1, 128>}, {pipeline_mode = #tpu.pipeline_mode<synchronous>, transform_indices = @transform_5, window_bounds = array<i64: 512, 128>}, {pipeline_mode = #tpu.pipeline_mode<synchronous>, transform_indices = @transform_6, window_bounds = array<i64: 1, 128>}, {pipeline_mode = #tpu.pipeline_mode<synchronous>, transform_indices = @transform_7, window_bounds = array<i64: 128, 128>}, {pipeline_mode = #tpu.pipeline_mode<synchronous>, transform_indices = @transform_8, window_bounds = array<i64: 1, 128>}, {transform_indices = @transform_9, window_bounds = array<i64: 8, 128>}]} {
    %c0 = arith.constant 0 : index
    %c0_0 = arith.constant 0 : index
    %0 = vector.load %arg1[%c0, %c0_0] : memref<224x28xbf16, #tpu.memory_space<vmem>>, vector<224x28xbf16>
    %1 = vector.extract_strided_slice %0 {offsets = [0, 0], sizes = [48, 28], strides = [1, 1]} : vector<224x28xbf16> to vector<48x28xbf16>
    %2 = vector.extract_strided_slice %0 {offsets = [112, 0], sizes = [48, 28], strides = [1, 1]} : vector<224x28xbf16> to vector<48x28xbf16>
    %3 = vector.extract_strided_slice %0 {offsets = [56, 0], sizes = [48, 28], strides = [1, 1]} : vector<224x28xbf16> to vector<48x28xbf16>
    %4 = vector.extract_strided_slice %0 {offsets = [168, 0], sizes = [48, 28], strides = [1, 1]} : vector<224x28xbf16> to vector<48x28xbf16>
    %5 = tpu.concatenate %1, %2, %3, %4 in 0 : vector<48x28xbf16>, vector<48x28xbf16>, vector<48x28xbf16>, vector<48x28xbf16> -> vector<192x28xbf16>
    %c0_1 = arith.constant 0 : index
    %c0_2 = arith.constant 0 : index
    %6 = vector.load %arg2[%c0_1, %c0_2] : memref<140x384xbf16, #tpu.memory_space<vmem>>, vector<28x384xbf16>
    %cst = arith.constant dense<0.000000e+00> : vector<192x384xf32>
    %7 = tpu.matmul %5, %6, %cst {dimension_numbers = #tpu.dot_dimension_numbers<[1], [0], [0], [1], [0, 0, 1, 1], [], []>} : vector<192x28xbf16>, vector<28x384xbf16>, vector<192x384xf32> -> vector<192x384xf32>
    %8 = vector.extract_strided_slice %0 {offsets = [56, 0], sizes = [48, 28], strides = [1, 1]} : vector<224x28xbf16> to vector<48x28xbf16>
    %9 = vector.extract_strided_slice %0 {offsets = [168, 0], sizes = [48, 28], strides = [1, 1]} : vector<224x28xbf16> to vector<48x28xbf16>
    %10 = vector.extract_strided_slice %0 {offsets = [112, 0], sizes = [48, 28], strides = [1, 1]} : vector<224x28xbf16> to vector<48x28xbf16>
    %11 = vector.extract_strided_slice %0 {offsets = [8, 0], sizes = [48, 28], strides = [1, 1]} : vector<224x28xbf16> to vector<48x28xbf16>
    %12 = tpu.concatenate %8, %9, %10, %11 in 0 : vector<48x28xbf16>, vector<48x28xbf16>, vector<48x28xbf16>, vector<48x28xbf16> -> vector<192x28xbf16>
    %c28 = arith.constant 28 : index
    %c0_3 = arith.constant 0 : index
    %13 = vector.load %arg2[%c28, %c0_3] : memref<140x384xbf16, #tpu.memory_space<vmem>>, vector<28x384xbf16>
    %cst_4 = arith.constant dense<0.000000e+00> : vector<192x384xf32>
    %14 = tpu.matmul %12, %13, %cst_4 {dimension_numbers = #tpu.dot_dimension_numbers<[1], [0], [0], [1], [0, 0, 1, 1], [], []>} : vector<192x28xbf16>, vector<28x384xbf16>, vector<192x384xf32> -> vector<192x384xf32>
    %15 = arith.addf %7, %14 : vector<192x384xf32>
    %16 = vector.extract_strided_slice %0 {offsets = [112, 0], sizes = [48, 28], strides = [1, 1]} : vector<224x28xbf16> to vector<48x28xbf16>
    %17 = vector.extract_strided_slice %0 {offsets = [8, 0], sizes = [48, 28], strides = [1, 1]} : vector<224x28xbf16> to vector<48x28xbf16>
    %18 = vector.extract_strided_slice %0 {offsets = [168, 0], sizes = [48, 28], strides = [1, 1]} : vector<224x28xbf16> to vector<48x28xbf16>
    %19 = vector.extract_strided_slice %0 {offsets = [64, 0], sizes = [48, 28], strides = [1, 1]} : vector<224x28xbf16> to vector<48x28xbf16>
    %20 = tpu.concatenate %16, %17, %18, %19 in 0 : vector<48x28xbf16>, vector<48x28xbf16>, vector<48x28xbf16>, vector<48x28xbf16> -> vector<192x28xbf16>
    %c56 = arith.constant 56 : index
    %c0_5 = arith.constant 0 : index
    %21 = vector.load %arg2[%c56, %c0_5] : memref<140x384xbf16, #tpu.memory_space<vmem>>, vector<28x384xbf16>
    %cst_6 = arith.constant dense<0.000000e+00> : vector<192x384xf32>
    %22 = tpu.matmul %20, %21, %cst_6 {dimension_numbers = #tpu.dot_dimension_numbers<[1], [0], [0], [1], [0, 0, 1, 1], [], []>} : vector<192x28xbf16>, vector<28x384xbf16>, vector<192x384xf32> -> vector<192x384xf32>
    %23 = arith.addf %15, %22 : vector<192x384xf32>
    %24 = vector.extract_strided_slice %0 {offsets = [168, 0], sizes = [48, 28], strides = [1, 1]} : vector<224x28xbf16> to vector<48x28xbf16>
    %25 = vector.extract_strided_slice %0 {offsets = [64, 0], sizes = [48, 28], strides = [1, 1]} : vector<224x28xbf16> to vector<48x28xbf16>
    %26 = vector.extract_strided_slice %0 {offsets = [8, 0], sizes = [48, 28], strides = [1, 1]} : vector<224x28xbf16> to vector<48x28xbf16>
    %27 = vector.extract_strided_slice %0 {offsets = [120, 0], sizes = [48, 28], strides = [1, 1]} : vector<224x28xbf16> to vector<48x28xbf16>
    %28 = tpu.concatenate %24, %25, %26, %27 in 0 : vector<48x28xbf16>, vector<48x28xbf16>, vector<48x28xbf16>, vector<48x28xbf16> -> vector<192x28xbf16>
    %c84 = arith.constant 84 : index
    %c0_7 = arith.constant 0 : index
    %29 = vector.load %arg2[%c84, %c0_7] : memref<140x384xbf16, #tpu.memory_space<vmem>>, vector<28x384xbf16>
    %cst_8 = arith.constant dense<0.000000e+00> : vector<192x384xf32>
    %30 = tpu.matmul %28, %29, %cst_8 {dimension_numbers = #tpu.dot_dimension_numbers<[1], [0], [0], [1], [0, 0, 1, 1], [], []>} : vector<192x28xbf16>, vector<28x384xbf16>, vector<192x384xf32> -> vector<192x384xf32>
    %31 = arith.addf %23, %30 : vector<192x384xf32>
    %32 = vector.extract_strided_slice %0 {offsets = [8, 0], sizes = [48, 28], strides = [1, 1]} : vector<224x28xbf16> to vector<48x28xbf16>
    %33 = vector.extract_strided_slice %0 {offsets = [120, 0], sizes = [48, 28], strides = [1, 1]} : vector<224x28xbf16> to vector<48x28xbf16>
    %34 = vector.extract_strided_slice %0 {offsets = [64, 0], sizes = [48, 28], strides = [1, 1]} : vector<224x28xbf16> to vector<48x28xbf16>
    %35 = vector.extract_strided_slice %0 {offsets = [176, 0], sizes = [48, 28], strides = [1, 1]} : vector<224x28xbf16> to vector<48x28xbf16>
    %36 = tpu.concatenate %32, %33, %34, %35 in 0 : vector<48x28xbf16>, vector<48x28xbf16>, vector<48x28xbf16>, vector<48x28xbf16> -> vector<192x28xbf16>
    %c112 = arith.constant 112 : index
    %c0_9 = arith.constant 0 : index
    %37 = vector.load %arg2[%c112, %c0_9] : memref<140x384xbf16, #tpu.memory_space<vmem>>, vector<28x384xbf16>
    %cst_10 = arith.constant dense<0.000000e+00> : vector<192x384xf32>
    %38 = tpu.matmul %36, %37, %cst_10 {dimension_numbers = #tpu.dot_dimension_numbers<[1], [0], [0], [1], [0, 0, 1, 1], [], []>} : vector<192x28xbf16>, vector<28x384xbf16>, vector<192x384xf32> -> vector<192x384xf32>
    %39 = arith.addf %31, %38 : vector<192x384xf32>
    %40 = vector.extract_strided_slice %39 {offsets = [0, 0], sizes = [96, 384], strides = [1, 1]} : vector<192x384xf32> to vector<96x384xf32>
    %41 = vector.extract_strided_slice %39 {offsets = [96, 0], sizes = [96, 384], strides = [1, 1]} : vector<192x384xf32> to vector<96x384xf32>
    %42 = arith.maximumf %40, %41 : vector<96x384xf32>
    %43 = vector.extract_strided_slice %42 {offsets = [0, 0], sizes = [96, 192], strides = [1, 1]} : vector<96x384xf32> to vector<96x192xf32>
    %44 = vector.extract_strided_slice %42 {offsets = [0, 192], sizes = [96, 192], strides = [1, 1]} : vector<96x384xf32> to vector<96x192xf32>
    %45 = arith.maximumf %43, %44 : vector<96x192xf32>
    %c0_11 = arith.constant 0 : index
    %c0_12 = arith.constant 0 : index
    %46 = vector.load %arg3[%c0_11, %c0_12] : memref<1x192xf32, #tpu.memory_space<vmem>>, vector<1x192xf32>
    %47 = vector.broadcast %46 : vector<1x192xf32> to vector<96x192xf32>
    %48 = arith.addf %45, %47 : vector<96x192xf32>
    %cst_13 = arith.constant 0.000000e+00 : f32
    %49 = vector.broadcast %cst_13 : f32 to vector<96x192xf32>
    %50 = arith.maximumf %48, %49 : vector<96x192xf32>
    %51 = arith.truncf %50 : vector<96x192xf32> to vector<96x192xbf16>
    %52 = vector.extract_strided_slice %51 {offsets = [0, 0], sizes = [32, 192], strides = [1, 1]} : vector<96x192xbf16> to vector<32x192xbf16>
    %53 = vector.extract_strided_slice %51 {offsets = [48, 0], sizes = [32, 192], strides = [1, 1]} : vector<96x192xbf16> to vector<32x192xbf16>
    %54 = tpu.concatenate %52, %53 in 0 : vector<32x192xbf16>, vector<32x192xbf16> -> vector<64x192xbf16>
    %c0_14 = arith.constant 0 : index
    %c0_15 = arith.constant 0 : index
    %55 = vector.load %arg4[%c0_14, %c0_15] : memref<960x256xbf16, #tpu.memory_space<vmem>>, vector<192x256xbf16>
    %cst_16 = arith.constant dense<0.000000e+00> : vector<64x256xf32>
    %56 = tpu.matmul %54, %55, %cst_16 {dimension_numbers = #tpu.dot_dimension_numbers<[1], [0], [0], [1], [0, 0, 1, 1], [], []>} : vector<64x192xbf16>, vector<192x256xbf16>, vector<64x256xf32> -> vector<64x256xf32>
    %57 = vector.extract_strided_slice %51 {offsets = [48, 0], sizes = [32, 192], strides = [1, 1]} : vector<96x192xbf16> to vector<32x192xbf16>
    %58 = vector.extract_strided_slice %51 {offsets = [8, 0], sizes = [32, 192], strides = [1, 1]} : vector<96x192xbf16> to vector<32x192xbf16>
    %59 = tpu.concatenate %57, %58 in 0 : vector<32x192xbf16>, vector<32x192xbf16> -> vector<64x192xbf16>
    %c192 = arith.constant 192 : index
    %c0_17 = arith.constant 0 : index
    %60 = vector.load %arg4[%c192, %c0_17] : memref<960x256xbf16, #tpu.memory_space<vmem>>, vector<192x256xbf16>
    %cst_18 = arith.constant dense<0.000000e+00> : vector<64x256xf32>
    %61 = tpu.matmul %59, %60, %cst_18 {dimension_numbers = #tpu.dot_dimension_numbers<[1], [0], [0], [1], [0, 0, 1, 1], [], []>} : vector<64x192xbf16>, vector<192x256xbf16>, vector<64x256xf32> -> vector<64x256xf32>
    %62 = arith.addf %56, %61 : vector<64x256xf32>
    %63 = vector.extract_strided_slice %51 {offsets = [8, 0], sizes = [32, 192], strides = [1, 1]} : vector<96x192xbf16> to vector<32x192xbf16>
    %64 = vector.extract_strided_slice %51 {offsets = [56, 0], sizes = [32, 192], strides = [1, 1]} : vector<96x192xbf16> to vector<32x192xbf16>
    %65 = tpu.concatenate %63, %64 in 0 : vector<32x192xbf16>, vector<32x192xbf16> -> vector<64x192xbf16>
    %c384 = arith.constant 384 : index
    %c0_19 = arith.constant 0 : index
    %66 = vector.load %arg4[%c384, %c0_19] : memref<960x256xbf16, #tpu.memory_space<vmem>>, vector<192x256xbf16>
    %cst_20 = arith.constant dense<0.000000e+00> : vector<64x256xf32>
    %67 = tpu.matmul %65, %66, %cst_20 {dimension_numbers = #tpu.dot_dimension_numbers<[1], [0], [0], [1], [0, 0, 1, 1], [], []>} : vector<64x192xbf16>, vector<192x256xbf16>, vector<64x256xf32> -> vector<64x256xf32>
    %68 = arith.addf %62, %67 : vector<64x256xf32>
    %69 = vector.extract_strided_slice %51 {offsets = [56, 0], sizes = [32, 192], strides = [1, 1]} : vector<96x192xbf16> to vector<32x192xbf16>
    %70 = vector.extract_strided_slice %51 {offsets = [16, 0], sizes = [32, 192], strides = [1, 1]} : vector<96x192xbf16> to vector<32x192xbf16>
    %71 = tpu.concatenate %69, %70 in 0 : vector<32x192xbf16>, vector<32x192xbf16> -> vector<64x192xbf16>
    %c576 = arith.constant 576 : index
    %c0_21 = arith.constant 0 : index
    %72 = vector.load %arg4[%c576, %c0_21] : memref<960x256xbf16, #tpu.memory_space<vmem>>, vector<192x256xbf16>
    %cst_22 = arith.constant dense<0.000000e+00> : vector<64x256xf32>
    %73 = tpu.matmul %71, %72, %cst_22 {dimension_numbers = #tpu.dot_dimension_numbers<[1], [0], [0], [1], [0, 0, 1, 1], [], []>} : vector<64x192xbf16>, vector<192x256xbf16>, vector<64x256xf32> -> vector<64x256xf32>
    %74 = arith.addf %68, %73 : vector<64x256xf32>
    %75 = vector.extract_strided_slice %51 {offsets = [16, 0], sizes = [32, 192], strides = [1, 1]} : vector<96x192xbf16> to vector<32x192xbf16>
    %76 = vector.extract_strided_slice %51 {offsets = [64, 0], sizes = [32, 192], strides = [1, 1]} : vector<96x192xbf16> to vector<32x192xbf16>
    %77 = tpu.concatenate %75, %76 in 0 : vector<32x192xbf16>, vector<32x192xbf16> -> vector<64x192xbf16>
    %c768 = arith.constant 768 : index
    %c0_23 = arith.constant 0 : index
    %78 = vector.load %arg4[%c768, %c0_23] : memref<960x256xbf16, #tpu.memory_space<vmem>>, vector<192x256xbf16>
    %cst_24 = arith.constant dense<0.000000e+00> : vector<64x256xf32>
    %79 = tpu.matmul %77, %78, %cst_24 {dimension_numbers = #tpu.dot_dimension_numbers<[1], [0], [0], [1], [0, 0, 1, 1], [], []>} : vector<64x192xbf16>, vector<192x256xbf16>, vector<64x256xf32> -> vector<64x256xf32>
    %80 = arith.addf %74, %79 : vector<64x256xf32>
    %81 = vector.extract_strided_slice %80 {offsets = [0, 0], sizes = [32, 256], strides = [1, 1]} : vector<64x256xf32> to vector<32x256xf32>
    %82 = vector.extract_strided_slice %80 {offsets = [32, 0], sizes = [32, 256], strides = [1, 1]} : vector<64x256xf32> to vector<32x256xf32>
    %83 = arith.maximumf %81, %82 : vector<32x256xf32>
    %84 = vector.extract_strided_slice %83 {offsets = [0, 0], sizes = [32, 128], strides = [1, 1]} : vector<32x256xf32> to vector<32x128xf32>
    %85 = vector.extract_strided_slice %83 {offsets = [0, 128], sizes = [32, 128], strides = [1, 1]} : vector<32x256xf32> to vector<32x128xf32>
    %86 = arith.maximumf %84, %85 : vector<32x128xf32>
    %c0_25 = arith.constant 0 : index
    %c0_26 = arith.constant 0 : index
    %87 = vector.load %arg5[%c0_25, %c0_26] : memref<1x128xf32, #tpu.memory_space<vmem>>, vector<1x128xf32>
    %88 = vector.broadcast %87 : vector<1x128xf32> to vector<32x128xf32>
    %89 = arith.addf %86, %88 : vector<32x128xf32>
    %cst_27 = arith.constant 0.000000e+00 : f32
    %90 = vector.broadcast %cst_27 : f32 to vector<32x128xf32>
    %91 = arith.maximumf %89, %90 : vector<32x128xf32>
    %92 = arith.truncf %91 : vector<32x128xf32> to vector<32x128xbf16>
    %93 = vector.extract_strided_slice %92 {offsets = [0, 0], sizes = [8, 128], strides = [1, 1]} : vector<32x128xbf16> to vector<8x128xbf16>
    %94 = vector.extract_strided_slice %92 {offsets = [8, 0], sizes = [8, 128], strides = [1, 1]} : vector<32x128xbf16> to vector<8x128xbf16>
    %95 = vector.extract_strided_slice %92 {offsets = [16, 0], sizes = [8, 128], strides = [1, 1]} : vector<32x128xbf16> to vector<8x128xbf16>
    %96 = vector.extract_strided_slice %92 {offsets = [24, 0], sizes = [8, 128], strides = [1, 1]} : vector<32x128xbf16> to vector<8x128xbf16>
    %97 = tpu.concatenate %93, %94, %95, %96 in 1 : vector<8x128xbf16>, vector<8x128xbf16>, vector<8x128xbf16>, vector<8x128xbf16> -> vector<8x512xbf16>
    %c0_28 = arith.constant 0 : index
    %c0_29 = arith.constant 0 : index
    %98 = vector.load %arg6[%c0_28, %c0_29] : memref<512x128xbf16, #tpu.memory_space<vmem>>, vector<512x128xbf16>
    %cst_30 = arith.constant dense<0.000000e+00> : vector<8x128xf32>
    %99 = tpu.matmul %97, %98, %cst_30 {dimension_numbers = #tpu.dot_dimension_numbers<[1], [0], [0], [1], [0, 0, 1, 1], [], []>} : vector<8x512xbf16>, vector<512x128xbf16>, vector<8x128xf32> -> vector<8x128xf32>
    %c0_31 = arith.constant 0 : index
    %c0_32 = arith.constant 0 : index
    %100 = vector.load %arg7[%c0_31, %c0_32] : memref<1x128xf32, #tpu.memory_space<vmem>>, vector<1x128xf32>
    %101 = vector.broadcast %100 : vector<1x128xf32> to vector<8x128xf32>
    %102 = arith.addf %99, %101 : vector<8x128xf32>
    %cst_33 = arith.constant 0.000000e+00 : f32
    %103 = vector.broadcast %cst_33 : f32 to vector<8x128xf32>
    %104 = arith.maximumf %102, %103 : vector<8x128xf32>
    %105 = arith.truncf %104 : vector<8x128xf32> to vector<8x128xbf16>
    %c0_34 = arith.constant 0 : index
    %c0_35 = arith.constant 0 : index
    %106 = vector.load %arg8[%c0_34, %c0_35] : memref<128x128xbf16, #tpu.memory_space<vmem>>, vector<128x128xbf16>
    %cst_36 = arith.constant dense<0.000000e+00> : vector<8x128xf32>
    %107 = tpu.matmul %105, %106, %cst_36 {dimension_numbers = #tpu.dot_dimension_numbers<[1], [0], [0], [1], [0, 0, 1, 1], [], []>} : vector<8x128xbf16>, vector<128x128xbf16>, vector<8x128xf32> -> vector<8x128xf32>
    %c0_37 = arith.constant 0 : index
    %c0_38 = arith.constant 0 : index
    %108 = vector.load %arg9[%c0_37, %c0_38] : memref<1x128xf32, #tpu.memory_space<vmem>>, vector<1x128xf32>
    %109 = vector.broadcast %108 : vector<1x128xf32> to vector<8x128xf32>
    %110 = arith.addf %107, %109 : vector<8x128xf32>
    %c0_39 = arith.constant 0 : index
    %c0_40 = arith.constant 0 : index
    %111 = vector.load %arg10[%c0_39, %c0_40] : memref<8x128xf32, #tpu.memory_space<vmem>>, vector<8x128xf32>
    tpu.vector_store %arg10[%c0_39, %c0_40], %110 {strides = array<i32>} : memref<8x128xf32, #tpu.memory_space<vmem>>, vector<8x128xf32>,
    return
  }
  func.func @transform_0(%arg0: i32) -> (i32, i32) {
    %c0_i32 = arith.constant 0 : i32
    %c0_i32_0 = arith.constant 0 : i32
    return %arg0, %c0_i32 : i32, i32
  }
  func.func @transform_1(%arg0: i32) -> (i32, i32) {
    %c0_i32 = arith.constant 0 : i32
    %c0_i32_0 = arith.constant 0 : i32
    %c0_i32_1 = arith.constant 0 : i32
    return %c0_i32, %c0_i32_0 : i32, i32
  }
  func.func @transform_2(%arg0: i32) -> (i32, i32) {
    %c0_i32 = arith.constant 0 : i32
    %c0_i32_0 = arith.constant 0 : i32
    %c0_i32_1 = arith.constant 0 : i32
    return %c0_i32, %c0_i32_0 : i32, i32
  }
  func.func @transform_3(%arg0: i32) -> (i32, i32) {
    %c0_i32 = arith.constant 0 : i32
    %c0_i32_0 = arith.constant 0 : i32
    %c0_i32_1 = arith.constant 0 : i32
    return %c0_i32, %c0_i32_0 : i32, i32
  }
  func.func @transform_4(%arg0: i32) -> (i32, i32) {
    %c0_i32 = arith.constant 0 : i32
    %c0_i32_0 = arith.constant 0 : i32
    %c0_i32_1 = arith.constant 0 : i32
    return %c0_i32, %c0_i32_0 : i32, i32
  }
  func.func @transform_5(%arg0: i32) -> (i32, i32) {
    %c0_i32 = arith.constant 0 : i32
    %c0_i32_0 = arith.constant 0 : i32
    %c0_i32_1 = arith.constant 0 : i32
    return %c0_i32, %c0_i32_0 : i32, i32
  }
  func.func @transform_6(%arg0: i32) -> (i32, i32) {
    %c0_i32 = arith.constant 0 : i32
    %c0_i32_0 = arith.constant 0 : i32
    %c0_i32_1 = arith.constant 0 : i32
    return %c0_i32, %c0_i32_0 : i32, i32
  }
  func.func @transform_7(%arg0: i32) -> (i32, i32) {
    %c0_i32 = arith.constant 0 : i32
    %c0_i32_0 = arith.constant 0 : i32
    %c0_i32_1 = arith.constant 0 : i32
    return %c0_i32, %c0_i32_0 : i32, i32
  }
  func.func @transform_8(%arg0: i32) -> (i32, i32) {
    %c0_i32 = arith.constant 0 : i32
    %c0_i32_0 = arith.constant 0 : i32
    %c0_i32_1 = arith.constant 0 : i32
    return %c0_i32, %c0_i32_0 : i32, i32
  }
  func.func @transform_9(%arg0: i32) -> (i32, i32) {
    %c0_i32 = arith.constant 0 : i32
    %c0_i32_0 = arith.constant 0 : i32
    return %arg0, %c0_i32 : i32, i32
  }
}

</mosaic_0001>

<llo_original>
// kernel: simplenet_forward.1
$region0: #{simplenet_forward.1}
  #allocation0 [shape = 'u32[]', space=smem, size = 0x4, offset = 0x4, fixed_abs, tag = 'smem constant byte address 0x4 - core index']
  #allocation1 [shape = 'u32[144,128]{1,0:T(1,128)}', space=vmem, size = 0x12000, scoped, tag = 'internal scratch']
  %s0 = inlined_call_operand.vmem [shape: bf16[224,28], index: 0, kind: input, shape index: {}]
  %s1 = inlined_call_operand.hbm [shape: bf16[140,384], index: 1, kind: input, shape index: {}]
  %s2 = inlined_call_operand.hbm [shape: f32[1,192], index: 2, kind: input, shape index: {}]
  %s3 = inlined_call_operand.hbm [shape: bf16[960,256], index: 3, kind: input, shape index: {}]
  %s4 = inlined_call_operand.hbm [shape: f32[1,128], index: 4, kind: input, shape index: {}]
  %s5 = inlined_call_operand.vmem [shape: bf16[512,128], index: 5, kind: input, shape index: {}]
  %s6 = inlined_call_operand.hbm [shape: f32[1,128], index: 6, kind: input, shape index: {}]
  %s7 = inlined_call_operand.vmem [shape: bf16[128,128], index: 7, kind: input, shape index: {}]
  %s8 = inlined_call_operand.hbm [shape: f32[1,128], index: 8, kind: input, shape index: {}]
  %s9 = inlined_call_operand.vmem [shape: f32[8,128], index: 9, kind: output, shape index: {}]
  %s10 = sld [smem:[#allocation0]]
  $region70: #{simplenet_forward.1} parent=0
    _
  %s12 = ssub.s32 1, %s10
  %s13 = scalar_select 0, %s12, %s10
  $region1: #{simplenet_forward.1} parent=0
    #allocation2 [shape = 'u8[110592]{0}', space=vmem, size = 0x1b000, scoped, tag = 'input window, operand 1, single buffered']
    #allocation3 [shape = 's32[1]{0}', space=sflag, size = 0x4, scoped, tag = 'scoped memory for simplenet_forward.1']
    #allocation4 [shape = 'u8[1024]{0}', space=vmem, size = 0x400, scoped, tag = 'input window, operand 2, single buffered']
    #allocation5 [shape = 's32[1]{0}', space=sflag, size = 0x4, scoped, tag = 'scoped memory for simplenet_forward.1']
    #allocation6 [shape = 'u8[491520]{0}', space=vmem, size = 0x78000, scoped, tag = 'input window, operand 3, single buffered']
    #allocation7 [shape = 'u8[512]{0}', space=vmem, size = 0x400, scoped, tag = 'input window, operand 4, single buffered']
    #allocation8 [shape = 's32[1]{0}', space=sflag, size = 0x4, scoped, tag = 'scoped memory for simplenet_forward.1']
    #allocation9 [shape = 'u8[512]{0}', space=vmem, size = 0x400, scoped, tag = 'input window, operand 6, single buffered']
    #allocation10 [shape = 'u8[512]{0}', space=vmem, size = 0x400, scoped, tag = 'input window, operand 8, single buffered']
    #allocation11 [shape = 's32[1]{0}', space=sflag, size = 0x4, scoped, tag = 'scoped memory for simplenet_forward.1']
    %14 = vsyncpa [#allocation3], 0
    %15 = vsyncpa [#allocation5], 0
    %16 = vsyncpa [#allocation8], 0
    %17 = vsyncpa [#allocation11], 0
    // Predicated region
    $region2: #{simplenet_forward.1} parent=1 // pred_check
      _
    $region3: #{simplenet_forward.1} parent=1 // pred_check_branch
      %19 = sbr.rel (0) target = $region5
    $region4: #{simplenet_forward.1} parent=1 // pred_region
      _
    $region5: #{simplenet_forward.1} parent=1 // pred_fallthru
      _
    // Predicated region
    $region6: #{simplenet_forward.1} parent=1 // pred_check
      _
    $region7: #{simplenet_forward.1} parent=1 // pred_check_branch
      %21 = sbr.rel (0) target = $region9
    $region8: #{simplenet_forward.1} parent=1 // pred_region
      %s23 = ssub.s32 3456, 3456
      %24 = vsyncadd [#allocation3], %s23
      %s25 = sshll.u32 [#allocation2], 4
      %s26 = int_to_ptr.vmem [resolvable:$true] %s25
      %31 = dma.hbm_to_vmem [thread:$0]  %s1, 3456, %s26, [#allocation3], 192, 192, 12
    $region9: #{simplenet_forward.1} parent=1 // pred_fallthru
      _
    // Predicated region
    $region10: #{simplenet_forward.1} parent=1 // pred_check
      _
    $region11: #{simplenet_forward.1} parent=1 // pred_check_branch
      %33 = sbr.rel (0) target = $region13
    $region12: #{simplenet_forward.1} parent=1 // pred_region
      %s35 = ssub.s32 32, 32
      %36 = vsyncadd [#allocation5], %s35
      %s38 = sshll.u32 [#allocation4], 4
      %s39 = int_to_ptr.vmem [resolvable:$true] %s38
      %41 = dma.hbm_to_vmem [thread:$0]  %s2, 32, %s39, [#allocation5]
    $region13: #{simplenet_forward.1} parent=1 // pred_fallthru
      _
    // Predicated region
    $region14: #{simplenet_forward.1} parent=1 // pred_check
      _
    $region15: #{simplenet_forward.1} parent=1 // pred_check_branch
      %43 = sbr.rel (0) target = $region17
    $region16: #{simplenet_forward.1} parent=1 // pred_region
      %s45 = ssub.s32 15360, 15360
      %46 = vsyncadd [#allocation5], %s45
      %s47 = sshll.u32 [#allocation6], 4
      %s48 = int_to_ptr.vmem [resolvable:$true] %s47
      %53 = dma.hbm_to_vmem [thread:$0]  %s3, 15360, %s48, [#allocation5], 128, 128, 8
    $region17: #{simplenet_forward.1} parent=1 // pred_fallthru
      _
    // Predicated region
    $region18: #{simplenet_forward.1} parent=1 // pred_check
      _
    $region19: #{simplenet_forward.1} parent=1 // pred_check_branch
      %55 = sbr.rel (0) target = $region21
    $region20: #{simplenet_forward.1} parent=1 // pred_region
      %s57 = ssub.s32 16, 16
      %58 = vsyncadd [#allocation8], %s57
      %s60 = sshll.u32 [#allocation7], 4
      %s61 = int_to_ptr.vmem [resolvable:$true] %s60
      %63 = dma.hbm_to_vmem [thread:$0]  %s4, 16, %s61, [#allocation8]
    $region21: #{simplenet_forward.1} parent=1 // pred_fallthru
      _
    // Predicated region
    $region22: #{simplenet_forward.1} parent=1 // pred_check
      _
    $region23: #{simplenet_forward.1} parent=1 // pred_check_branch
      %65 = sbr.rel (0) target = $region25
    $region24: #{simplenet_forward.1} parent=1 // pred_region
      _
    $region25: #{simplenet_forward.1} parent=1 // pred_fallthru
      _
    // Predicated region
    $region26: #{simplenet_forward.1} parent=1 // pred_check
      _
    $region27: #{simplenet_forward.1} parent=1 // pred_check_branch
      %67 = sbr.rel (0) target = $region29
    $region28: #{simplenet_forward.1} parent=1 // pred_region
      %s69 = ssub.s32 16, 16
      %70 = vsyncadd [#allocation8], %s69
      %s72 = sshll.u32 [#allocation9], 4
      %s73 = int_to_ptr.vmem [resolvable:$true] %s72
      %75 = dma.hbm_to_vmem [thread:$0]  %s6, 16, %s73, [#allocation8]
    $region29: #{simplenet_forward.1} parent=1 // pred_fallthru
      _
    // Predicated region
    $region30: #{simplenet_forward.1} parent=1 // pred_check
      _
    $region31: #{simplenet_forward.1} parent=1 // pred_check_branch
      %77 = sbr.rel (0) target = $region33
    $region32: #{simplenet_forward.1} parent=1 // pred_region
      _
    $region33: #{simplenet_forward.1} parent=1 // pred_fallthru
      _
    // Predicated region
    $region34: #{simplenet_forward.1} parent=1 // pred_check
      _
    $region35: #{simplenet_forward.1} parent=1 // pred_check_branch
      %79 = sbr.rel (0) target = $region37
    $region36: #{simplenet_forward.1} parent=1 // pred_region
      %s81 = ssub.s32 16, 16
      %82 = vsyncadd [#allocation11], %s81
      %s84 = sshll.u32 [#allocation10], 4
      %s85 = int_to_ptr.vmem [resolvable:$true] %s84
      %87 = dma.hbm_to_vmem [thread:$0]  %s8, 16, %s85, [#allocation11]
    $region37: #{simplenet_forward.1} parent=1 // pred_fallthru
      _
    // Predicated region
    $region38: #{simplenet_forward.1} parent=1 // pred_check
      _
    $region39: #{simplenet_forward.1} parent=1 // pred_check_branch
      %89 = sbr.rel (0) target = $region41
    $region40: #{simplenet_forward.1} parent=1 // pred_region
      %90 = dma.done [#allocation3], 3456
    $region41: #{simplenet_forward.1} parent=1 // pred_fallthru
      _
    // Predicated region
    $region42: #{simplenet_forward.1} parent=1 // pred_check
      _
    $region43: #{simplenet_forward.1} parent=1 // pred_check_branch
      %92 = sbr.rel (0) target = $region45
    $region44: #{simplenet_forward.1} parent=1 // pred_region
      %93 = dma.done [#allocation5], 32
    $region45: #{simplenet_forward.1} parent=1 // pred_fallthru
      _
    // Predicated region
    $region46: #{simplenet_forward.1} parent=1 // pred_check
      _
    $region47: #{simplenet_forward.1} parent=1 // pred_check_branch
      %95 = sbr.rel (0) target = $region49
    $region48: #{simplenet_forward.1} parent=1 // pred_region
      %96 = dma.done [#allocation5], 15360
    $region49: #{simplenet_forward.1} parent=1 // pred_fallthru
      _
    // Predicated region
    $region50: #{simplenet_forward.1} parent=1 // pred_check
      _
    $region51: #{simplenet_forward.1} parent=1 // pred_check_branch
      %98 = sbr.rel (0) target = $region53
    $region52: #{simplenet_forward.1} parent=1 // pred_region
      %99 = dma.done [#allocation8], 16
    $region53: #{simplenet_forward.1} parent=1 // pred_fallthru
      _
    // Predicated region
    $region54: #{simplenet_forward.1} parent=1 // pred_check
      _
    $region55: #{simplenet_forward.1} parent=1 // pred_check_branch
      %101 = sbr.rel (0) target = $region57
    $region56: #{simplenet_forward.1} parent=1 // pred_region
      %102 = dma.done [#allocation8], 16
    $region57: #{simplenet_forward.1} parent=1 // pred_fallthru
      _
    // Predicated region
    $region58: #{simplenet_forward.1} parent=1 // pred_check
      _
    $region59: #{simplenet_forward.1} parent=1 // pred_check_branch
      %104 = sbr.rel (0) target = $region61
    $region60: #{simplenet_forward.1} parent=1 // pred_region
      %105 = dma.done [#allocation11], 16
    $region61: #{simplenet_forward.1} parent=1 // pred_fallthru
      _
    %v107 = vld [vmem:[%s0] sm:$0xf]
    %v108 = vld [vmem:[%s0 + $0x4] sm:$0xf]
    %v109 = vld [vmem:[%s0 + $0x8] sm:$0xf]
    %v110 = vld [vmem:[%s0 + $0xc] sm:$0xf]
    %v111 = vld [vmem:[%s0 + $0x10] sm:$0xf]
    %v112 = vld [vmem:[%s0 + $0x14] sm:$0xf]
    %v113 = vld [vmem:[%s0 + $0x18] sm:$0xf]
    %v114 = vld [vmem:[%s0 + $0x1c] sm:$0xf]
    %v115 = vld [vmem:[%s0 + $0x20] sm:$0xf]
    %v116 = vld [vmem:[%s0 + $0x24] sm:$0xf]
    %v117 = vld [vmem:[%s0 + $0x28] sm:$0xf]
    %v118 = vld [vmem:[%s0 + $0x2c] sm:$0xf]
    %v119 = vld [vmem:[%s0 + $0x30] sm:$0xf]
    %v120 = vld [vmem:[%s0 + $0x34] sm:$0xf]
    %v121 = vld [vmem:[%s0 + $0x38] sm:$0xf]
    %v122 = vld [vmem:[%s0 + $0x3c] sm:$0xf]
    %v123 = vld [vmem:[%s0 + $0x40] sm:$0xf]
    %v124 = vld [vmem:[%s0 + $0x44] sm:$0xf]
    %v125 = vld [vmem:[%s0 + $0x48] sm:$0xf]
    %v126 = vld [vmem:[%s0 + $0x4c] sm:$0xf]
    %v127 = vld [vmem:[%s0 + $0x50] sm:$0xf]
    %v128 = vld [vmem:[%s0 + $0x54] sm:$0xf]
    %v129 = vld [vmem:[%s0 + $0x58] sm:$0xf]
    %v130 = vld [vmem:[%s0 + $0x5c] sm:$0xf]
    %v131 = vld [vmem:[%s0 + $0x60] sm:$0xf]
    %v132 = vld [vmem:[%s0 + $0x64] sm:$0xf]
    %v133 = vld [vmem:[%s0 + $0x68] sm:$0xf]
    %v134 = vld [vmem:[%s0 + $0x6c] sm:$0xf]
    %v141 = vunpack.c.l.b16 %v107
    %v142 = vunpack.c.l.b16 %v108
    %v143 = vunpack.c.l.b16 %v109
    %v144 = vunpack.c.l.b16 %v110
    %v145 = vunpack.c.l.b16 %v111
    %v146 = vunpack.c.l.b16 %v112
    %v147 = vpack.c.b16 %v142, %v141
    %v148 = vpack.c.b16 %v144, %v143
    %v149 = vpack.c.b16 %v146, %v145
    %v156 = vunpack.c.l.b16 %v121
    %v157 = vunpack.c.l.b16 %v122
    %v158 = vunpack.c.l.b16 %v123
    %v159 = vunpack.c.l.b16 %v124
    %v160 = vunpack.c.l.b16 %v125
    %v161 = vunpack.c.l.b16 %v126
    %v162 = vpack.c.b16 %v157, %v156
    %v163 = vpack.c.b16 %v159, %v158
    %v164 = vpack.c.b16 %v161, %v160
    %v171 = vunpack.c.l.b16 %v114
    %v172 = vunpack.c.l.b16 %v115
    %v173 = vunpack.c.l.b16 %v116
    %v174 = vunpack.c.l.b16 %v117
    %v175 = vunpack.c.l.b16 %v118
    %v176 = vunpack.c.l.b16 %v119
    %v177 = vpack.c.b16 %v172, %v171
    %v178 = vpack.c.b16 %v174, %v173
    %v179 = vpack.c.b16 %v176, %v175
    %v186 = vunpack.c.l.b16 %v128
    %v187 = vunpack.c.l.b16 %v129
    %v188 = vunpack.c.l.b16 %v130
    %v189 = vunpack.c.l.b16 %v131
    %v190 = vunpack.c.l.b16 %v132
    %v191 = vunpack.c.l.b16 %v133
    %v192 = vpack.c.b16 %v187, %v186
    %v193 = vpack.c.b16 %v189, %v188
    %v194 = vpack.c.b16 %v191, %v190
    %v195 = vld [vmem:[#allocation2] sm:$0xff]
    %v196 = vld [vmem:[#allocation2 + $0x8] sm:$0xf]
    %v197 = vld [vmem:[#allocation2 + $0xc] sm:$0xff]
    %v198 = vld [vmem:[#allocation2 + $0x14] sm:$0xf]
    %v199 = vld [vmem:[#allocation2 + $0x18] sm:$0xff]
    %v200 = vld [vmem:[#allocation2 + $0x20] sm:$0xf]
    %v201 = vld [vmem:[#allocation2 + $0x24] sm:$0x33]
    %v202 = vld [vmem:[#allocation2 + $0x2c] sm:$0x3]
    %v204 = vunpack.c.l.b16 %v113
    %v205 = vpack.c.b16 %v143, %v142
    %v206 = vpack.c.b16 %v145, %v144
    %v207 = vpack.c.b16 %v204, %v146
    %v208 = vld [vmem:[#allocation2 + $0x24] sm:$0xcc]
    %v209 = vld [vmem:[#allocation2 + $0x2c] sm:$0xc]
    %v210 = vld [vmem:[#allocation2 + $0x30] sm:$0xff]
    %v211 = vld [vmem:[#allocation2 + $0x38] sm:$0xf]
    %v212 = vld [vmem:[#allocation2 + $0x3c] sm:$0xff]
    %v213 = vld [vmem:[#allocation2 + $0x44] sm:$0xf]
    %v214 = vld [vmem:[#allocation2 + $0x48] sm:$0xff]
    %v215 = vld [vmem:[#allocation2 + $0x50] sm:$0xf]
    %v224 = vunpack.c.l.b16 %v208
    %v225 = vunpack.c.h.b16 %v208
    %v226 = vunpack.c.l.b16 %v209
    %v227 = vunpack.c.l.b16 %v210
    %v228 = vunpack.c.h.b16 %v210
    %v229 = vunpack.c.l.b16 %v211
    %v230 = vunpack.c.l.b16 %v212
    %v231 = vunpack.c.h.b16 %v212
    %v232 = vunpack.c.l.b16 %v213
    %v233 = vunpack.c.l.b16 %v214
    %v234 = vunpack.c.h.b16 %v214
    %v235 = vunpack.c.l.b16 %v215
    %v236 = vpack.c.b16 %v227, %v224
    %v237 = vpack.c.b16 %v228, %v225
    %v238 = vpack.c.b16 %v229, %v226
    %v239 = vpack.c.b16 %v233, %v230
    %v240 = vpack.c.b16 %v234, %v231
    %v241 = vpack.c.b16 %v235, %v232
    %vm242 = vcmask 1045504
    %v243 = vrot.slane %v236, 2
    %v244 = vrot.slane %v239, 2
    %v245 = vsel %vm242, %v243, %v244
    %v246 = vrot.slane %v237, 2
    %v247 = vrot.slane %v240, 2
    %v248 = vsel %vm242, %v246, %v247
    %v249 = vrot.slane %v238, 2
    %v250 = vrot.slane %v241, 2
    %v251 = vsel %vm242, %v249, %v250
    %vm255 = vcmask 228352
    %v257 = vsel %vm255, %v177, 0
    %v260 = vsel %vm255, %v178, 0
    %v263 = vsel %vm255, %v179, 0
    %v266 = vsel %vm255, %v192, 0
    %v269 = vsel %vm255, %v193, 0
    %v272 = vsel %vm255, %v194, 0
    %v275 = vsel %vm255, %v162, 0
    %v278 = vsel %vm255, %v163, 0
    %v281 = vsel %vm255, %v164, 0
    %v284 = vsel %vm255, %v205, 0
    %v287 = vsel %vm255, %v206, 0
    %v290 = vsel %vm255, %v207, 0
    %vm292 = vcmask 1045504
    %v294 = vsel %vm292, %v244, 0
    %v297 = vsel %vm292, %v247, 0
    %v300 = vsel %vm292, %v250, 0
    %302 = vmatprep.subr.bf16.mxu0 %v248
    %303 = vmatpush1.bf16.msra.mxu0 %v245
    %304 = vmatprep.subr.bf16.mxu0 %v297
    %305 = vmatpush1.bf16.msra.mxu0 %v294
    %306 = vmatprep.subr.bf16.mxu0 0
    %307 = vmatpush1.bf16.msra.mxu0 0
    %308 = vmatprep.subr.bf16.mxu0 0
    %309 = vmatpush1.bf16.msra.mxu0 0
    %310 = vmatprep.subr.bf16.mxu0 0
    %311 = vmatpush1.bf16.msra.mxu0 0
    %312 = vmatprep.subr.bf16.mxu0 0
    %313 = vmatpush1.bf16.msra.mxu0 0
    %314 = vmatprep.subr.bf16.mxu0 0
    %315 = vmatpush1.bf16.msra.mxu0 0
    %316 = vmatprep.subr.bf16.mxu0 0
    %317 = vmatpush1.bf16.msra.mxu0 0
    %318 = vmatprep.subr.bf16.mxu0 0
    %319 = vmatpush1.bf16.msra.mxu0 0
    %320 = vmatprep.subr.bf16.mxu0 0
    %321 = vmatpush1.bf16.msra.mxu0 0
    %322 = vmatprep.subr.bf16.mxu0 0
    %323 = vmatpush1.bf16.msra.mxu0 0
    %324 = vmatprep.subr.bf16.mxu0 0
    %325 = vmatpush1.bf16.msra.mxu0 0
    %326 = vmatprep.subr.bf16.mxu0 0
    %327 = vmatpush1.bf16.msra.mxu0 0
    %328 = vmatprep.subr.bf16.mxu0 0
    %329 = vmatpush1.bf16.msra.mxu0 0
    %330 = vmatprep.subr.bf16.mxu0 0
    %331 = vmatpush1.bf16.msra.mxu0 0
    %332 = vmatprep.subr.bf16.mxu0 0
    %333 = vmatpush1.bf16.msra.mxu0 0
    %334 = vmatprep.mubr.bf16.mxu0 0
    %335 = vmatmul.mubr.bf16.gmra.mrb[0].mxu0 %v257
    %v336 = vpop.f32.mrb[0].mxu0
    %v337 = vadd.f32 0.0, %v336
    %v338 = vpop.f32.mrb[0].mxu0
    %v339 = vadd.f32 0.0, %v338
    %v340 = vpop.f32.mrb[0].mxu0
    %v341 = vadd.f32 0.0, %v340
    %v342 = vpop.f32.mrb[0].mxu0
    %v343 = vadd.f32 0.0, %v342
    %344 = vmatprep.mubr.bf16.mxu0 0
    %345 = vmatmul.mubr.bf16.gmra.mrb[0].mxu0 %v260
    %v346 = vpop.f32.mrb[0].mxu0
    %v347 = vadd.f32 0.0, %v346
    %v348 = vpop.f32.mrb[0].mxu0
    %v349 = vadd.f32 0.0, %v348
    %v350 = vpop.f32.mrb[0].mxu0
    %v351 = vadd.f32 0.0, %v350
    %v352 = vpop.f32.mrb[0].mxu0
    %v353 = vadd.f32 0.0, %v352
    %354 = vmatprep.mubr.bf16.mxu0 0
    %355 = vmatmul.mubr.bf16.gmra.mrb[0].mxu0 %v263
    %v356 = vpop.f32.mrb[0].mxu0
    %v357 = vadd.f32 0.0, %v356
    %v358 = vpop.f32.mrb[0].mxu0
    %v359 = vadd.f32 0.0, %v358
    %v360 = vpop.f32.mrb[0].mxu0
    %v361 = vadd.f32 0.0, %v360
    %v362 = vpop.f32.mrb[0].mxu0
    %v363 = vadd.f32 0.0, %v362
    %364 = vmatprep.mubr.bf16.mxu0 0
    %365 = vmatmul.mubr.bf16.gmra.mrb[0].mxu0 %v266
    %v366 = vpop.f32.mrb[0].mxu0
    %v367 = vadd.f32 0.0, %v366
    %v368 = vpop.f32.mrb[0].mxu0
    %v369 = vadd.f32 0.0, %v368
    %v370 = vpop.f32.mrb[0].mxu0
    %v371 = vadd.f32 0.0, %v370
    %v372 = vpop.f32.mrb[0].mxu0
    %v373 = vadd.f32 0.0, %v372
    %374 = vmatprep.mubr.bf16.mxu0 0
    %375 = vmatmul.mubr.bf16.gmra.mrb[0].mxu0 %v269
    %v376 = vpop.f32.mrb[0].mxu0
    %v377 = vadd.f32 0.0, %v376
    %v378 = vpop.f32.mrb[0].mxu0
    %v379 = vadd.f32 0.0, %v378
    %v380 = vpop.f32.mrb[0].mxu0
    %v381 = vadd.f32 0.0, %v380
    %v382 = vpop.f32.mrb[0].mxu0
    %v383 = vadd.f32 0.0, %v382
    %384 = vmatprep.mubr.bf16.mxu0 0
    %385 = vmatmul.mubr.bf16.gmra.mrb[0].mxu0 %v272
    %v386 = vpop.f32.mrb[0].mxu0
    %v387 = vadd.f32 0.0, %v386
    %v388 = vpop.f32.mrb[0].mxu0
    %v389 = vadd.f32 0.0, %v388
    %v390 = vpop.f32.mrb[0].mxu0
    %v391 = vadd.f32 0.0, %v390
    %v392 = vpop.f32.mrb[0].mxu0
    %v393 = vadd.f32 0.0, %v392
    %394 = vmatprep.mubr.bf16.mxu0 0
    %395 = vmatmul.mubr.bf16.gmra.mrb[0].mxu0 %v275
    %v396 = vpop.f32.mrb[0].mxu0
    %v397 = vadd.f32 0.0, %v396
    %v398 = vpop.f32.mrb[0].mxu0
    %v399 = vadd.f32 0.0, %v398
    %v400 = vpop.f32.mrb[0].mxu0
    %v401 = vadd.f32 0.0, %v400
    %v402 = vpop.f32.mrb[0].mxu0
    %v403 = vadd.f32 0.0, %v402
    %404 = vmatprep.mubr.bf16.mxu0 0
    %405 = vmatmul.mubr.bf16.gmra.mrb[0].mxu0 %v278
    %v406 = vpop.f32.mrb[0].mxu0
    %v407 = vadd.f32 0.0, %v406
    %v408 = vpop.f32.mrb[0].mxu0
    %v409 = vadd.f32 0.0, %v408
    %v410 = vpop.f32.mrb[0].mxu0
    %v411 = vadd.f32 0.0, %v410
    %v412 = vpop.f32.mrb[0].mxu0
    %v413 = vadd.f32 0.0, %v412
    %414 = vmatprep.mubr.bf16.mxu0 0
    %415 = vmatmul.mubr.bf16.gmra.mrb[0].mxu0 %v281
    %v416 = vpop.f32.mrb[0].mxu0
    %v417 = vadd.f32 0.0, %v416
    %v418 = vpop.f32.mrb[0].mxu0
    %v419 = vadd.f32 0.0, %v418
    %v420 = vpop.f32.mrb[0].mxu0
    %v421 = vadd.f32 0.0, %v420
    %v422 = vpop.f32.mrb[0].mxu0
    %v423 = vadd.f32 0.0, %v422
    %424 = vmatprep.mubr.bf16.mxu0 0
    %425 = vmatmul.mubr.bf16.gmra.mrb[0].mxu0 %v284
    %v426 = vpop.f32.mrb[0].mxu0
    %v427 = vadd.f32 0.0, %v426
    %v428 = vpop.f32.mrb[0].mxu0
    %v429 = vadd.f32 0.0, %v428
    %v430 = vpop.f32.mrb[0].mxu0
    %v431 = vadd.f32 0.0, %v430
    %v432 = vpop.f32.mrb[0].mxu0
    %v433 = vadd.f32 0.0, %v432
    %434 = vmatprep.mubr.bf16.mxu0 0
    %435 = vmatmul.mubr.bf16.gmra.mrb[0].mxu0 %v287
    %v436 = vpop.f32.mrb[0].mxu0
    %v437 = vadd.f32 0.0, %v436
    %v438 = vpop.f32.mrb[0].mxu0
    %v439 = vadd.f32 0.0, %v438
    %v440 = vpop.f32.mrb[0].mxu0
    %v441 = vadd.f32 0.0, %v440
    %v442 = vpop.f32.mrb[0].mxu0
    %v443 = vadd.f32 0.0, %v442
    %444 = vmatprep.mubr.bf16.mxu0 0
    %445 = vmatmul.mubr.bf16.gmra.mrb[0].mxu0 %v290
    %v446 = vpop.f32.mrb[0].mxu0
    %v447 = vadd.f32 0.0, %v446
    %v448 = vpop.f32.mrb[0].mxu0
    %v449 = vadd.f32 0.0, %v448
    %v450 = vpop.f32.mrb[0].mxu0
    %v451 = vadd.f32 0.0, %v450
    %v452 = vpop.f32.mrb[0].mxu0
    %v453 = vadd.f32 0.0, %v452
    %454 = vdwg.mxu0
    %455 = vmatprep.subr.bf16.mxu0 0
    %456 = vmatpush1.bf16.msra.mxu0 %v251
    %457 = vmatprep.subr.bf16.mxu0 0
    %458 = vmatpush1.bf16.msra.mxu0 %v300
    %459 = vmatprep.subr.bf16.mxu0 0
    %460 = vmatpush1.bf16.msra.mxu0 0
    %461 = vmatprep.subr.bf16.mxu0 0
    %462 = vmatpush1.bf16.msra.mxu0 0
    %463 = vmatprep.subr.bf16.mxu0 0
    %464 = vmatpush1.bf16.msra.mxu0 0
    %465 = vmatprep.subr.bf16.mxu0 0
    %466 = vmatpush1.bf16.msra.mxu0 0
    %467 = vmatprep.subr.bf16.mxu0 0
    %468 = vmatpush1.bf16.msra.mxu0 0
    %469 = vmatprep.subr.bf16.mxu0 0
    %470 = vmatpush1.bf16.msra.mxu0 0
    %471 = vmatprep.subr.bf16.mxu0 0
    %472 = vmatpush1.bf16.msra.mxu0 0
    %473 = vmatprep.subr.bf16.mxu0 0
    %474 = vmatpush1.bf16.msra.mxu0 0
    %475 = vmatprep.subr.bf16.mxu0 0
    %476 = vmatpush1.bf16.msra.mxu0 0
    %477 = vmatprep.subr.bf16.mxu0 0
    %478 = vmatpush1.bf16.msra.mxu0 0
    %479 = vmatprep.subr.bf16.mxu0 0
    %480 = vmatpush1.bf16.msra.mxu0 0
    %481 = vmatprep.subr.bf16.mxu0 0
    %482 = vmatpush1.bf16.msra.mxu0 0
    %483 = vmatprep.subr.bf16.mxu0 0
    %484 = vmatpush1.bf16.msra.mxu0 0
    %485 = vmatprep.subr.bf16.mxu0 0
    %486 = vmatpush1.bf16.msra.mxu0 0
    %487 = vmatprep.mubr.bf16.mxu0 0
    %488 = vmatmul.mubr.bf16.gmra.mrb[0].mxu0 %v257
    %v489 = vpop.f32.mrb[0].mxu0
    %v490 = vadd.f32 0.0, %v489
    %v491 = vpop.f32.mrb[0].mxu0
    %v492 = vpop.f32.mrb[0].mxu0
    %v493 = vadd.f32 0.0, %v492
    %v494 = vpop.f32.mrb[0].mxu0
    %495 = vmatprep.mubr.bf16.mxu0 0
    %496 = vmatmul.mubr.bf16.gmra.mrb[0].mxu0 %v260
    %v497 = vpop.f32.mrb[0].mxu0
    %v498 = vadd.f32 0.0, %v497
    %v499 = vpop.f32.mrb[0].mxu0
    %v500 = vpop.f32.mrb[0].mxu0
    %v501 = vadd.f32 0.0, %v500
    %v502 = vpop.f32.mrb[0].mxu0
    %503 = vmatprep.mubr.bf16.mxu0 0
    %504 = vmatmul.mubr.bf16.gmra.mrb[0].mxu0 %v263
    %v505 = vpop.f32.mrb[0].mxu0
    %v506 = vadd.f32 0.0, %v505
    %v507 = vpop.f32.mrb[0].mxu0
    %v508 = vpop.f32.mrb[0].mxu0
    %v509 = vadd.f32 0.0, %v508
    %v510 = vpop.f32.mrb[0].mxu0
    %511 = vmatprep.mubr.bf16.mxu0 0
    %512 = vmatmul.mubr.bf16.gmra.mrb[0].mxu0 %v266
    %v513 = vpop.f32.mrb[0].mxu0
    %v514 = vadd.f32 0.0, %v513
    %v515 = vpop.f32.mrb[0].mxu0
    %v516 = vpop.f32.mrb[0].mxu0
    %v517 = vadd.f32 0.0, %v516
    %v518 = vpop.f32.mrb[0].mxu0
    %519 = vmatprep.mubr.bf16.mxu0 0
    %520 = vmatmul.mubr.bf16.gmra.mrb[0].mxu0 %v269
    %v521 = vpop.f32.mrb[0].mxu0
    %v522 = vadd.f32 0.0, %v521
    %v523 = vpop.f32.mrb[0].mxu0
    %v524 = vpop.f32.mrb[0].mxu0
    %v525 = vadd.f32 0.0, %v524
    %v526 = vpop.f32.mrb[0].mxu0
    %527 = vmatprep.mubr.bf16.mxu0 0
    %528 = vmatmul.mubr.bf16.gmra.mrb[0].mxu0 %v272
    %v529 = vpop.f32.mrb[0].mxu0
    %v530 = vadd.f32 0.0, %v529
    %v531 = vpop.f32.mrb[0].mxu0
    %v532 = vpop.f32.mrb[0].mxu0
    %v533 = vadd.f32 0.0, %v532
    %v534 = vpop.f32.mrb[0].mxu0
    %535 = vmatprep.mubr.bf16.mxu0 0
    %536 = vmatmul.mubr.bf16.gmra.mrb[0].mxu0 %v275
    %v537 = vpop.f32.mrb[0].mxu0
    %v538 = vadd.f32 0.0, %v537
    %v539 = vpop.f32.mrb[0].mxu0
    %v540 = vpop.f32.mrb[0].mxu0
    %v541 = vadd.f32 0.0, %v540
    %v542 = vpop.f32.mrb[0].mxu0
    %543 = vmatprep.mubr.bf16.mxu0 0
    %544 = vmatmul.mubr.bf16.gmra.mrb[0].mxu0 %v278
    %v545 = vpop.f32.mrb[0].mxu0
    %v546 = vadd.f32 0.0, %v545
    %v547 = vpop.f32.mrb[0].mxu0
    %v548 = vpop.f32.mrb[0].mxu0
    %v549 = vadd.f32 0.0, %v548
    %v550 = vpop.f32.mrb[0].mxu0
    %551 = vmatprep.mubr.bf16.mxu0 0
    %552 = vmatmul.mubr.bf16.gmra.mrb[0].mxu0 %v281
    %v553 = vpop.f32.mrb[0].mxu0
    %v554 = vadd.f32 0.0, %v553
    %v555 = vpop.f32.mrb[0].mxu0
    %v556 = vpop.f32.mrb[0].mxu0
    %v557 = vadd.f32 0.0, %v556
    %v558 = vpop.f32.mrb[0].mxu0
    %559 = vmatprep.mubr.bf16.mxu0 0
    %560 = vmatmul.mubr.bf16.gmra.mrb[0].mxu0 %v284
    %v561 = vpop.f32.mrb[0].mxu0
    %v562 = vadd.f32 0.0, %v561
    %v563 = vpop.f32.mrb[0].mxu0
    %v564 = vpop.f32.mrb[0].mxu0
    %v565 = vadd.f32 0.0, %v564
    %v566 = vpop.f32.mrb[0].mxu0
    %567 = vmatprep.mubr.bf16.mxu0 0
    %568 = vmatmul.mubr.bf16.gmra.mrb[0].mxu0 %v287
    %v569 = vpop.f32.mrb[0].mxu0
    %v570 = vadd.f32 0.0, %v569
    %v571 = vpop.f32.mrb[0].mxu0
    %v572 = vpop.f32.mrb[0].mxu0
    %v573 = vadd.f32 0.0, %v572
    %v574 = vpop.f32.mrb[0].mxu0
    %575 = vmatprep.mubr.bf16.mxu0 0
    %576 = vmatmul.mubr.bf16.gmra.mrb[0].mxu0 %v290
    %v577 = vpop.f32.mrb[0].mxu0
    %v578 = vadd.f32 0.0, %v577
    %v579 = vpop.f32.mrb[0].mxu0
    %v580 = vpop.f32.mrb[0].mxu0
    %v581 = vadd.f32 0.0, %v580
    %v582 = vpop.f32.mrb[0].mxu0
    %583 = vdwg.mxu0
    %v592 = vunpack.c.l.b16 %v195
    %v593 = vunpack.c.h.b16 %v195
    %v594 = vunpack.c.l.b16 %v196
    %v595 = vunpack.c.l.b16 %v197
    %v596 = vunpack.c.h.b16 %v197
    %v597 = vunpack.c.l.b16 %v198
    %v598 = vunpack.c.l.b16 %v199
    %v599 = vunpack.c.h.b16 %v199
    %v600 = vunpack.c.l.b16 %v200
    %v601 = vunpack.c.l.b16 %v201
    %v602 = vunpack.c.h.b16 %v201
    %v603 = vunpack.c.l.b16 %v202
    %v604 = vpack.c.b16 %v595, %v592
    %v605 = vpack.c.b16 %v596, %v593
    %v606 = vpack.c.b16 %v597, %v594
    %v607 = vpack.c.b16 %v601, %v598
    %v608 = vpack.c.b16 %v602, %v599
    %v609 = vpack.c.b16 %v603, %v600
    %v614 = vsel %vm255, %v147, 0
    %v617 = vsel %vm255, %v148, 0
    %v620 = vsel %vm255, %v149, 0
    %v623 = vsel %vm292, %v607, 0
    %v626 = vsel %vm292, %v608, 0
    %v629 = vsel %vm292, %v609, 0
    %631 = vmatprep.subr.bf16.mxu0 %v605
    %632 = vmatpush1.bf16.msra.mxu0 %v604
    %633 = vmatprep.subr.bf16.mxu0 %v626
    %634 = vmatpush1.bf16.msra.mxu0 %v623
    %635 = vmatprep.subr.bf16.mxu0 0
    %636 = vmatpush1.bf16.msra.mxu0 0
    %637 = vmatprep.subr.bf16.mxu0 0
    %638 = vmatpush1.bf16.msra.mxu0 0
    %639 = vmatprep.subr.bf16.mxu0 0
    %640 = vmatpush1.bf16.msra.mxu0 0
    %641 = vmatprep.subr.bf16.mxu0 0
    %642 = vmatpush1.bf16.msra.mxu0 0
    %643 = vmatprep.subr.bf16.mxu0 0
    %644 = vmatpush1.bf16.msra.mxu0 0
    %645 = vmatprep.subr.bf16.mxu0 0
    %646 = vmatpush1.bf16.msra.mxu0 0
    %647 = vmatprep.subr.bf16.mxu0 0
    %648 = vmatpush1.bf16.msra.mxu0 0
    %649 = vmatprep.subr.bf16.mxu0 0
    %650 = vmatpush1.bf16.msra.mxu0 0
    %651 = vmatprep.subr.bf16.mxu0 0
    %652 = vmatpush1.bf16.msra.mxu0 0
    %653 = vmatprep.subr.bf16.mxu0 0
    %654 = vmatpush1.bf16.msra.mxu0 0
    %655 = vmatprep.subr.bf16.mxu0 0
    %656 = vmatpush1.bf16.msra.mxu0 0
    %657 = vmatprep.subr.bf16.mxu0 0
    %658 = vmatpush1.bf16.msra.mxu0 0
    %659 = vmatprep.subr.bf16.mxu0 0
    %660 = vmatpush1.bf16.msra.mxu0 0
    %661 = vmatprep.subr.bf16.mxu0 0
    %662 = vmatpush1.bf16.msra.mxu0 0
    %663 = vmatprep.mubr.bf16.mxu0 0
    %664 = vmatmul.mubr.bf16.gmra.mrb[0].mxu0 %v614
    %v665 = vpop.f32.mrb[0].mxu0
    %v666 = vadd.f32 %v337, %v665
    %v667 = vpop.f32.mrb[0].mxu0
    %v668 = vadd.f32 %v339, %v667
    %v669 = vpop.f32.mrb[0].mxu0
    %v670 = vadd.f32 %v341, %v669
    %v671 = vpop.f32.mrb[0].mxu0
    %v672 = vadd.f32 %v343, %v671
    %673 = vmatprep.mubr.bf16.mxu0 0
    %674 = vmatmul.mubr.bf16.gmra.mrb[0].mxu0 %v617
    %v675 = vpop.f32.mrb[0].mxu0
    %v676 = vadd.f32 %v347, %v675
    %v677 = vpop.f32.mrb[0].mxu0
    %v678 = vadd.f32 %v349, %v677
    %v679 = vpop.f32.mrb[0].mxu0
    %v680 = vadd.f32 %v351, %v679
    %v681 = vpop.f32.mrb[0].mxu0
    %v682 = vadd.f32 %v353, %v681
    %683 = vmatprep.mubr.bf16.mxu0 0
    %684 = vmatmul.mubr.bf16.gmra.mrb[0].mxu0 %v620
    %v685 = vpop.f32.mrb[0].mxu0
    %v686 = vadd.f32 %v357, %v685
    %v687 = vpop.f32.mrb[0].mxu0
    %v688 = vadd.f32 %v359, %v687
    %v689 = vpop.f32.mrb[0].mxu0
    %v690 = vadd.f32 %v361, %v689
    %v691 = vpop.f32.mrb[0].mxu0
    %v692 = vadd.f32 %v363, %v691
    %693 = vmatprep.mubr.bf16.mxu0 0
    %694 = vmatmul.mubr.bf16.gmra.mrb[0].mxu0 %v275
    %v695 = vpop.f32.mrb[0].mxu0
    %v696 = vadd.f32 %v367, %v695
    %v697 = vpop.f32.mrb[0].mxu0
    %v698 = vadd.f32 %v369, %v697
    %v699 = vpop.f32.mrb[0].mxu0
    %v700 = vadd.f32 %v371, %v699
    %v701 = vpop.f32.mrb[0].mxu0
    %v702 = vadd.f32 %v373, %v701
    %703 = vmatprep.mubr.bf16.mxu0 0
    %704 = vmatmul.mubr.bf16.gmra.mrb[0].mxu0 %v278
    %v705 = vpop.f32.mrb[0].mxu0
    %v706 = vadd.f32 %v377, %v705
    %v707 = vpop.f32.mrb[0].mxu0
    %v708 = vadd.f32 %v379, %v707
    %v709 = vpop.f32.mrb[0].mxu0
    %v710 = vadd.f32 %v381, %v709
    %v711 = vpop.f32.mrb[0].mxu0
    %v712 = vadd.f32 %v383, %v711
    %713 = vmatprep.mubr.bf16.mxu0 0
    %714 = vmatmul.mubr.bf16.gmra.mrb[0].mxu0 %v281
    %v715 = vpop.f32.mrb[0].mxu0
    %v716 = vadd.f32 %v387, %v715
    %v717 = vpop.f32.mrb[0].mxu0
    %v718 = vadd.f32 %v389, %v717
    %v719 = vpop.f32.mrb[0].mxu0
    %v720 = vadd.f32 %v391, %v719
    %v721 = vpop.f32.mrb[0].mxu0
    %v722 = vadd.f32 %v393, %v721
    %723 = vmatprep.mubr.bf16.mxu0 0
    %724 = vmatmul.mubr.bf16.gmra.mrb[0].mxu0 %v257
    %v725 = vpop.f32.mrb[0].mxu0
    %v726 = vadd.f32 %v397, %v725
    %v727 = vpop.f32.mrb[0].mxu0
    %v728 = vadd.f32 %v399, %v727
    %v729 = vpop.f32.mrb[0].mxu0
    %v730 = vadd.f32 %v401, %v729
    %v731 = vpop.f32.mrb[0].mxu0
    %v732 = vadd.f32 %v403, %v731
    %733 = vmatprep.mubr.bf16.mxu0 0
    %734 = vmatmul.mubr.bf16.gmra.mrb[0].mxu0 %v260
    %v735 = vpop.f32.mrb[0].mxu0
    %v736 = vadd.f32 %v407, %v735
    %v737 = vpop.f32.mrb[0].mxu0
    %v738 = vadd.f32 %v409, %v737
    %v739 = vpop.f32.mrb[0].mxu0
    %v740 = vadd.f32 %v411, %v739
    %v741 = vpop.f32.mrb[0].mxu0
    %v742 = vadd.f32 %v413, %v741
    %743 = vmatprep.mubr.bf16.mxu0 0
    %744 = vmatmul.mubr.bf16.gmra.mrb[0].mxu0 %v263
    %v745 = vpop.f32.mrb[0].mxu0
    %v746 = vadd.f32 %v417, %v745
    %v747 = vpop.f32.mrb[0].mxu0
    %v748 = vadd.f32 %v419, %v747
    %v749 = vpop.f32.mrb[0].mxu0
    %v750 = vadd.f32 %v421, %v749
    %v751 = vpop.f32.mrb[0].mxu0
    %v752 = vadd.f32 %v423, %v751
    %753 = vmatprep.mubr.bf16.mxu0 0
    %754 = vmatmul.mubr.bf16.gmra.mrb[0].mxu0 %v266
    %v755 = vpop.f32.mrb[0].mxu0
    %v756 = vadd.f32 %v427, %v755
    %v757 = vpop.f32.mrb[0].mxu0
    %v758 = vadd.f32 %v429, %v757
    %v759 = vpop.f32.mrb[0].mxu0
    %v760 = vadd.f32 %v431, %v759
    %v761 = vpop.f32.mrb[0].mxu0
    %v762 = vadd.f32 %v433, %v761
    %763 = vmatprep.mubr.bf16.mxu0 0
    %764 = vmatmul.mubr.bf16.gmra.mrb[0].mxu0 %v269
    %v765 = vpop.f32.mrb[0].mxu0
    %v766 = vadd.f32 %v437, %v765
    %v767 = vpop.f32.mrb[0].mxu0
    %v768 = vadd.f32 %v439, %v767
    %v769 = vpop.f32.mrb[0].mxu0
    %v770 = vadd.f32 %v441, %v769
    %v771 = vpop.f32.mrb[0].mxu0
    %v772 = vadd.f32 %v443, %v771
    %773 = vmatprep.mubr.bf16.mxu0 0
    %774 = vmatmul.mubr.bf16.gmra.mrb[0].mxu0 %v272
    %v775 = vpop.f32.mrb[0].mxu0
    %v776 = vadd.f32 %v447, %v775
    %v777 = vpop.f32.mrb[0].mxu0
    %v778 = vadd.f32 %v449, %v777
    %v779 = vpop.f32.mrb[0].mxu0
    %v780 = vadd.f32 %v451, %v779
    %v781 = vpop.f32.mrb[0].mxu0
    %v782 = vadd.f32 %v453, %v781
    %783 = vdwg.mxu0
    %784 = vmatprep.subr.bf16.mxu0 0
    %785 = vmatpush1.bf16.msra.mxu0 %v606
    %786 = vmatprep.subr.bf16.mxu0 0
    %787 = vmatpush1.bf16.msra.mxu0 %v629
    %788 = vmatprep.subr.bf16.mxu0 0
    %789 = vmatpush1.bf16.msra.mxu0 0
    %790 = vmatprep.subr.bf16.mxu0 0
    %791 = vmatpush1.bf16.msra.mxu0 0
    %792 = vmatprep.subr.bf16.mxu0 0
    %793 = vmatpush1.bf16.msra.mxu0 0
    %794 = vmatprep.subr.bf16.mxu0 0
    %795 = vmatpush1.bf16.msra.mxu0 0
    %796 = vmatprep.subr.bf16.mxu0 0
    %797 = vmatpush1.bf16.msra.mxu0 0
    %798 = vmatprep.subr.bf16.mxu0 0
    %799 = vmatpush1.bf16.msra.mxu0 0
    %800 = vmatprep.subr.bf16.mxu0 0
    %801 = vmatpush1.bf16.msra.mxu0 0
    %802 = vmatprep.subr.bf16.mxu0 0
    %803 = vmatpush1.bf16.msra.mxu0 0
    %804 = vmatprep.subr.bf16.mxu0 0
    %805 = vmatpush1.bf16.msra.mxu0 0
    %806 = vmatprep.subr.bf16.mxu0 0
    %807 = vmatpush1.bf16.msra.mxu0 0
    %808 = vmatprep.subr.bf16.mxu0 0
    %809 = vmatpush1.bf16.msra.mxu0 0
    %810 = vmatprep.subr.bf16.mxu0 0
    %811 = vmatpush1.bf16.msra.mxu0 0
    %812 = vmatprep.subr.bf16.mxu0 0
    %813 = vmatpush1.bf16.msra.mxu0 0
    %814 = vmatprep.subr.bf16.mxu0 0
    %815 = vmatpush1.bf16.msra.mxu0 0
    %816 = vmatprep.mubr.bf16.mxu0 0
    %817 = vmatmul.mubr.bf16.gmra.mrb[0].mxu0 %v614
    %v818 = vpop.f32.mrb[0].mxu0
    %v819 = vadd.f32 %v490, %v818
    %v820 = vpop.f32.mrb[0].mxu0
    %v821 = vpop.f32.mrb[0].mxu0
    %v822 = vadd.f32 %v493, %v821
    %v823 = vpop.f32.mrb[0].mxu0
    %824 = vmatprep.mubr.bf16.mxu0 0
    %825 = vmatmul.mubr.bf16.gmra.mrb[0].mxu0 %v617
    %v826 = vpop.f32.mrb[0].mxu0
    %v827 = vadd.f32 %v498, %v826
    %v828 = vpop.f32.mrb[0].mxu0
    %v829 = vpop.f32.mrb[0].mxu0
    %v830 = vadd.f32 %v501, %v829
    %v831 = vpop.f32.mrb[0].mxu0
    %832 = vmatprep.mubr.bf16.mxu0 0
    %833 = vmatmul.mubr.bf16.gmra.mrb[0].mxu0 %v620
    %v834 = vpop.f32.mrb[0].mxu0
    %v835 = vadd.f32 %v506, %v834
    %v836 = vpop.f32.mrb[0].mxu0
    %v837 = vpop.f32.mrb[0].mxu0
    %v838 = vadd.f32 %v509, %v837
    %v839 = vpop.f32.mrb[0].mxu0
    %840 = vmatprep.mubr.bf16.mxu0 0
    %841 = vmatmul.mubr.bf16.gmra.mrb[0].mxu0 %v275
    %v842 = vpop.f32.mrb[0].mxu0
    %v843 = vadd.f32 %v514, %v842
    %v844 = vpop.f32.mrb[0].mxu0
    %v845 = vpop.f32.mrb[0].mxu0
    %v846 = vadd.f32 %v517, %v845
    %v847 = vpop.f32.mrb[0].mxu0
    %848 = vmatprep.mubr.bf16.mxu0 0
    %849 = vmatmul.mubr.bf16.gmra.mrb[0].mxu0 %v278
    %v850 = vpop.f32.mrb[0].mxu0
    %v851 = vadd.f32 %v522, %v850
    %v852 = vpop.f32.mrb[0].mxu0
    %v853 = vpop.f32.mrb[0].mxu0
    %v854 = vadd.f32 %v525, %v853
    %v855 = vpop.f32.mrb[0].mxu0
    %856 = vmatprep.mubr.bf16.mxu0 0
    %857 = vmatmul.mubr.bf16.gmra.mrb[0].mxu0 %v281
    %v858 = vpop.f32.mrb[0].mxu0
    %v859 = vadd.f32 %v530, %v858
    %v860 = vpop.f32.mrb[0].mxu0
    %v861 = vpop.f32.mrb[0].mxu0
    %v862 = vadd.f32 %v533, %v861
    %v863 = vpop.f32.mrb[0].mxu0
    %864 = vmatprep.mubr.bf16.mxu0 0
    %865 = vmatmul.mubr.bf16.gmra.mrb[0].mxu0 %v257
    %v866 = vpop.f32.mrb[0].mxu0
    %v867 = vadd.f32 %v538, %v866
    %v868 = vpop.f32.mrb[0].mxu0
    %v869 = vpop.f32.mrb[0].mxu0
    %v870 = vadd.f32 %v541, %v869
    %v871 = vpop.f32.mrb[0].mxu0
    %872 = vmatprep.mubr.bf16.mxu0 0
    %873 = vmatmul.mubr.bf16.gmra.mrb[0].mxu0 %v260
    %v874 = vpop.f32.mrb[0].mxu0
    %v875 = vadd.f32 %v546, %v874
    %v876 = vpop.f32.mrb[0].mxu0
    %v877 = vpop.f32.mrb[0].mxu0
    %v878 = vadd.f32 %v549, %v877
    %v879 = vpop.f32.mrb[0].mxu0
    %880 = vmatprep.mubr.bf16.mxu0 0
    %881 = vmatmul.mubr.bf16.gmra.mrb[0].mxu0 %v263
    %v882 = vpop.f32.mrb[0].mxu0
    %v883 = vadd.f32 %v554, %v882
    %v884 = vpop.f32.mrb[0].mxu0
    %v885 = vpop.f32.mrb[0].mxu0
    %v886 = vadd.f32 %v557, %v885
    %v887 = vpop.f32.mrb[0].mxu0
    %888 = vmatprep.mubr.bf16.mxu0 0
    %889 = vmatmul.mubr.bf16.gmra.mrb[0].mxu0 %v266
    %v890 = vpop.f32.mrb[0].mxu0
    %v891 = vadd.f32 %v562, %v890
    %v892 = vpop.f32.mrb[0].mxu0
    %v893 = vpop.f32.mrb[0].mxu0
    %v894 = vadd.f32 %v565, %v893
    %v895 = vpop.f32.mrb[0].mxu0
    %896 = vmatprep.mubr.bf16.mxu0 0
    %897 = vmatmul.mubr.bf16.gmra.mrb[0].mxu0 %v269
    %v898 = vpop.f32.mrb[0].mxu0
    %v899 = vadd.f32 %v570, %v898
    %v900 = vpop.f32.mrb[0].mxu0
    %v901 = vpop.f32.mrb[0].mxu0
    %v902 = vadd.f32 %v573, %v901
    %v903 = vpop.f32.mrb[0].mxu0
    %904 = vmatprep.mubr.bf16.mxu0 0
    %905 = vmatmul.mubr.bf16.gmra.mrb[0].mxu0 %v272
    %v906 = vpop.f32.mrb[0].mxu0
    %v907 = vadd.f32 %v578, %v906
    %v908 = vpop.f32.mrb[0].mxu0
    %v909 = vpop.f32.mrb[0].mxu0
    %v910 = vadd.f32 %v581, %v909
    %v911 = vpop.f32.mrb[0].mxu0
    %912 = vdwg.mxu0
    %v914 = vunpack.c.l.b16 %v120
    %v915 = vpack.c.b16 %v173, %v172
    %v916 = vpack.c.b16 %v175, %v174
    %v917 = vpack.c.b16 %v914, %v176
    %v918 = vld [vmem:[#allocation2 + $0x54] sm:$0xff]
    %v919 = vld [vmem:[#allocation2 + $0x5c] sm:$0xf]
    %v920 = vld [vmem:[#allocation2 + $0x60] sm:$0xff]
    %v921 = vld [vmem:[#allocation2 + $0x68] sm:$0xf]
    %v922 = vld [vmem:[#allocation2 + $0x6c] sm:$0xff]
    %v923 = vld [vmem:[#allocation2 + $0x74] sm:$0xf]
    %v924 = vld [vmem:[#allocation2 + $0x78] sm:$0x33]
    %v925 = vld [vmem:[#allocation2 + $0x80] sm:$0x3]
    %v934 = vunpack.c.l.b16 %v918
    %v935 = vunpack.c.h.b16 %v918
    %v936 = vunpack.c.l.b16 %v919
    %v937 = vunpack.c.l.b16 %v920
    %v938 = vunpack.c.h.b16 %v920
    %v939 = vunpack.c.l.b16 %v921
    %v940 = vunpack.c.l.b16 %v922
    %v941 = vunpack.c.h.b16 %v922
    %v942 = vunpack.c.l.b16 %v923
    %v943 = vunpack.c.l.b16 %v924
    %v944 = vunpack.c.h.b16 %v924
    %v945 = vunpack.c.l.b16 %v925
    %v946 = vpack.c.b16 %v937, %v934
    %v947 = vpack.c.b16 %v938, %v935
    %v948 = vpack.c.b16 %v939, %v936
    %v949 = vpack.c.b16 %v943, %v940
    %v950 = vpack.c.b16 %v944, %v941
    %v951 = vpack.c.b16 %v945, %v942
    %v956 = vsel %vm255, %v915, 0
    %v959 = vsel %vm255, %v916, 0
    %v962 = vsel %vm255, %v917, 0
    %v965 = vsel %vm292, %v949, 0
    %v968 = vsel %vm292, %v950, 0
    %v971 = vsel %vm292, %v951, 0
    %973 = vmatprep.subr.bf16.mxu0 %v947
    %974 = vmatpush1.bf16.msra.mxu0 %v946
    %975 = vmatprep.subr.bf16.mxu0 %v968
    %976 = vmatpush1.bf16.msra.mxu0 %v965
    %977 = vmatprep.subr.bf16.mxu0 0
    %978 = vmatpush1.bf16.msra.mxu0 0
    %979 = vmatprep.subr.bf16.mxu0 0
    %980 = vmatpush1.bf16.msra.mxu0 0
    %981 = vmatprep.subr.bf16.mxu0 0
    %982 = vmatpush1.bf16.msra.mxu0 0
    %983 = vmatprep.subr.bf16.mxu0 0
    %984 = vmatpush1.bf16.msra.mxu0 0
    %985 = vmatprep.subr.bf16.mxu0 0
    %986 = vmatpush1.bf16.msra.mxu0 0
    %987 = vmatprep.subr.bf16.mxu0 0
    %988 = vmatpush1.bf16.msra.mxu0 0
    %989 = vmatprep.subr.bf16.mxu0 0
    %990 = vmatpush1.bf16.msra.mxu0 0
    %991 = vmatprep.subr.bf16.mxu0 0
    %992 = vmatpush1.bf16.msra.mxu0 0
    %993 = vmatprep.subr.bf16.mxu0 0
    %994 = vmatpush1.bf16.msra.mxu0 0
    %995 = vmatprep.subr.bf16.mxu0 0
    %996 = vmatpush1.bf16.msra.mxu0 0
    %997 = vmatprep.subr.bf16.mxu0 0
    %998 = vmatpush1.bf16.msra.mxu0 0
    %999 = vmatprep.subr.bf16.mxu0 0
    %1000 = vmatpush1.bf16.msra.mxu0 0
    %1001 = vmatprep.subr.bf16.mxu0 0
    %1002 = vmatpush1.bf16.msra.mxu0 0
    %1003 = vmatprep.subr.bf16.mxu0 0
    %1004 = vmatpush1.bf16.msra.mxu0 0
    %1005 = vmatprep.mubr.bf16.mxu0 0
    %1006 = vmatmul.mubr.bf16.gmra.mrb[0].mxu0 %v275
    %v1007 = vpop.f32.mrb[0].mxu0
    %v1008 = vadd.f32 0.0, %v1007
    %v1009 = vpop.f32.mrb[0].mxu0
    %v1010 = vadd.f32 0.0, %v1009
    %v1011 = vpop.f32.mrb[0].mxu0
    %v1012 = vadd.f32 0.0, %v1011
    %v1013 = vpop.f32.mrb[0].mxu0
    %v1014 = vadd.f32 0.0, %v1013
    %1015 = vmatprep.mubr.bf16.mxu0 0
    %1016 = vmatmul.mubr.bf16.gmra.mrb[0].mxu0 %v278
    %v1017 = vpop.f32.mrb[0].mxu0
    %v1018 = vadd.f32 0.0, %v1017
    %v1019 = vpop.f32.mrb[0].mxu0
    %v1020 = vadd.f32 0.0, %v1019
    %v1021 = vpop.f32.mrb[0].mxu0
    %v1022 = vadd.f32 0.0, %v1021
    %v1023 = vpop.f32.mrb[0].mxu0
    %v1024 = vadd.f32 0.0, %v1023
    %1025 = vmatprep.mubr.bf16.mxu0 0
    %1026 = vmatmul.mubr.bf16.gmra.mrb[0].mxu0 %v281
    %v1027 = vpop.f32.mrb[0].mxu0
    %v1028 = vadd.f32 0.0, %v1027
    %v1029 = vpop.f32.mrb[0].mxu0
    %v1030 = vadd.f32 0.0, %v1029
    %v1031 = vpop.f32.mrb[0].mxu0
    %v1032 = vadd.f32 0.0, %v1031
    %v1033 = vpop.f32.mrb[0].mxu0
    %v1034 = vadd.f32 0.0, %v1033
    %1035 = vmatprep.mubr.bf16.mxu0 0
    %1036 = vmatmul.mubr.bf16.gmra.mrb[0].mxu0 %v284
    %v1037 = vpop.f32.mrb[0].mxu0
    %v1038 = vadd.f32 0.0, %v1037
    %v1039 = vpop.f32.mrb[0].mxu0
    %v1040 = vadd.f32 0.0, %v1039
    %v1041 = vpop.f32.mrb[0].mxu0
    %v1042 = vadd.f32 0.0, %v1041
    %v1043 = vpop.f32.mrb[0].mxu0
    %v1044 = vadd.f32 0.0, %v1043
    %1045 = vmatprep.mubr.bf16.mxu0 0
    %1046 = vmatmul.mubr.bf16.gmra.mrb[0].mxu0 %v287
    %v1047 = vpop.f32.mrb[0].mxu0
    %v1048 = vadd.f32 0.0, %v1047
    %v1049 = vpop.f32.mrb[0].mxu0
    %v1050 = vadd.f32 0.0, %v1049
    %v1051 = vpop.f32.mrb[0].mxu0
    %v1052 = vadd.f32 0.0, %v1051
    %v1053 = vpop.f32.mrb[0].mxu0
    %v1054 = vadd.f32 0.0, %v1053
    %1055 = vmatprep.mubr.bf16.mxu0 0
    %1056 = vmatmul.mubr.bf16.gmra.mrb[0].mxu0 %v290
    %v1057 = vpop.f32.mrb[0].mxu0
    %v1058 = vadd.f32 0.0, %v1057
    %v1059 = vpop.f32.mrb[0].mxu0
    %v1060 = vadd.f32 0.0, %v1059
    %v1061 = vpop.f32.mrb[0].mxu0
    %v1062 = vadd.f32 0.0, %v1061
    %v1063 = vpop.f32.mrb[0].mxu0
    %v1064 = vadd.f32 0.0, %v1063
    %1065 = vmatprep.mubr.bf16.mxu0 0
    %1066 = vmatmul.mubr.bf16.gmra.mrb[0].mxu0 %v266
    %v1067 = vpop.f32.mrb[0].mxu0
    %v1068 = vadd.f32 0.0, %v1067
    %v1069 = vpop.f32.mrb[0].mxu0
    %v1070 = vadd.f32 0.0, %v1069
    %v1071 = vpop.f32.mrb[0].mxu0
    %v1072 = vadd.f32 0.0, %v1071
    %v1073 = vpop.f32.mrb[0].mxu0
    %v1074 = vadd.f32 0.0, %v1073
    %1075 = vmatprep.mubr.bf16.mxu0 0
    %1076 = vmatmul.mubr.bf16.gmra.mrb[0].mxu0 %v269
    %v1077 = vpop.f32.mrb[0].mxu0
    %v1078 = vadd.f32 0.0, %v1077
    %v1079 = vpop.f32.mrb[0].mxu0
    %v1080 = vadd.f32 0.0, %v1079
    %v1081 = vpop.f32.mrb[0].mxu0
    %v1082 = vadd.f32 0.0, %v1081
    %v1083 = vpop.f32.mrb[0].mxu0
    %v1084 = vadd.f32 0.0, %v1083
    %1085 = vmatprep.mubr.bf16.mxu0 0
    %1086 = vmatmul.mubr.bf16.gmra.mrb[0].mxu0 %v272
    %v1087 = vpop.f32.mrb[0].mxu0
    %v1088 = vadd.f32 0.0, %v1087
    %v1089 = vpop.f32.mrb[0].mxu0
    %v1090 = vadd.f32 0.0, %v1089
    %v1091 = vpop.f32.mrb[0].mxu0
    %v1092 = vadd.f32 0.0, %v1091
    %v1093 = vpop.f32.mrb[0].mxu0
    %v1094 = vadd.f32 0.0, %v1093
    %1095 = vmatprep.mubr.bf16.mxu0 0
    %1096 = vmatmul.mubr.bf16.gmra.mrb[0].mxu0 %v956
    %v1097 = vpop.f32.mrb[0].mxu0
    %v1098 = vadd.f32 0.0, %v1097
    %v1099 = vpop.f32.mrb[0].mxu0
    %v1100 = vadd.f32 0.0, %v1099
    %v1101 = vpop.f32.mrb[0].mxu0
    %v1102 = vadd.f32 0.0, %v1101
    %v1103 = vpop.f32.mrb[0].mxu0
    %v1104 = vadd.f32 0.0, %v1103
    %1105 = vmatprep.mubr.bf16.mxu0 0
    %1106 = vmatmul.mubr.bf16.gmra.mrb[0].mxu0 %v959
    %v1107 = vpop.f32.mrb[0].mxu0
    %v1108 = vadd.f32 0.0, %v1107
    %v1109 = vpop.f32.mrb[0].mxu0
    %v1110 = vadd.f32 0.0, %v1109
    %v1111 = vpop.f32.mrb[0].mxu0
    %v1112 = vadd.f32 0.0, %v1111
    %v1113 = vpop.f32.mrb[0].mxu0
    %v1114 = vadd.f32 0.0, %v1113
    %1115 = vmatprep.mubr.bf16.mxu0 0
    %1116 = vmatmul.mubr.bf16.gmra.mrb[0].mxu0 %v962
    %v1117 = vpop.f32.mrb[0].mxu0
    %v1118 = vadd.f32 0.0, %v1117
    %v1119 = vpop.f32.mrb[0].mxu0
    %v1120 = vadd.f32 0.0, %v1119
    %v1121 = vpop.f32.mrb[0].mxu0
    %v1122 = vadd.f32 0.0, %v1121
    %v1123 = vpop.f32.mrb[0].mxu0
    %v1124 = vadd.f32 0.0, %v1123
    %1125 = vdwg.mxu0
    %1126 = vmatprep.subr.bf16.mxu0 0
    %1127 = vmatpush1.bf16.msra.mxu0 %v948
    %1128 = vmatprep.subr.bf16.mxu0 0
    %1129 = vmatpush1.bf16.msra.mxu0 %v971
    %1130 = vmatprep.subr.bf16.mxu0 0
    %1131 = vmatpush1.bf16.msra.mxu0 0
    %1132 = vmatprep.subr.bf16.mxu0 0
    %1133 = vmatpush1.bf16.msra.mxu0 0
    %1134 = vmatprep.subr.bf16.mxu0 0
    %1135 = vmatpush1.bf16.msra.mxu0 0
    %1136 = vmatprep.subr.bf16.mxu0 0
    %1137 = vmatpush1.bf16.msra.mxu0 0
    %1138 = vmatprep.subr.bf16.mxu0 0
    %1139 = vmatpush1.bf16.msra.mxu0 0
    %1140 = vmatprep.subr.bf16.mxu0 0
    %1141 = vmatpush1.bf16.msra.mxu0 0
    %1142 = vmatprep.subr.bf16.mxu0 0
    %1143 = vmatpush1.bf16.msra.mxu0 0
    %1144 = vmatprep.subr.bf16.mxu0 0
    %1145 = vmatpush1.bf16.msra.mxu0 0
    %1146 = vmatprep.subr.bf16.mxu0 0
    %1147 = vmatpush1.bf16.msra.mxu0 0
    %1148 = vmatprep.subr.bf16.mxu0 0
    %1149 = vmatpush1.bf16.msra.mxu0 0
    %1150 = vmatprep.subr.bf16.mxu0 0
    %1151 = vmatpush1.bf16.msra.mxu0 0
    %1152 = vmatprep.subr.bf16.mxu0 0
    %1153 = vmatpush1.bf16.msra.mxu0 0
    %1154 = vmatprep.subr.bf16.mxu0 0
    %1155 = vmatpush1.bf16.msra.mxu0 0
    %1156 = vmatprep.subr.bf16.mxu0 0
    %1157 = vmatpush1.bf16.msra.mxu0 0
    %1158 = vmatprep.mubr.bf16.mxu0 0
    %1159 = vmatmul.mubr.bf16.gmra.mrb[0].mxu0 %v275
    %v1160 = vpop.f32.mrb[0].mxu0
    %v1161 = vadd.f32 0.0, %v1160
    %v1162 = vpop.f32.mrb[0].mxu0
    %v1163 = vpop.f32.mrb[0].mxu0
    %v1164 = vadd.f32 0.0, %v1163
    %v1165 = vpop.f32.mrb[0].mxu0
    %1166 = vmatprep.mubr.bf16.mxu0 0
    %1167 = vmatmul.mubr.bf16.gmra.mrb[0].mxu0 %v278
    %v1168 = vpop.f32.mrb[0].mxu0
    %v1169 = vadd.f32 0.0, %v1168
    %v1170 = vpop.f32.mrb[0].mxu0
    %v1171 = vpop.f32.mrb[0].mxu0
    %v1172 = vadd.f32 0.0, %v1171
    %v1173 = vpop.f32.mrb[0].mxu0
    %1174 = vmatprep.mubr.bf16.mxu0 0
    %1175 = vmatmul.mubr.bf16.gmra.mrb[0].mxu0 %v281
    %v1176 = vpop.f32.mrb[0].mxu0
    %v1177 = vadd.f32 0.0, %v1176
    %v1178 = vpop.f32.mrb[0].mxu0
    %v1179 = vpop.f32.mrb[0].mxu0
    %v1180 = vadd.f32 0.0, %v1179
    %v1181 = vpop.f32.mrb[0].mxu0
    %1182 = vmatprep.mubr.bf16.mxu0 0
    %1183 = vmatmul.mubr.bf16.gmra.mrb[0].mxu0 %v284
    %v1184 = vpop.f32.mrb[0].mxu0
    %v1185 = vadd.f32 0.0, %v1184
    %v1186 = vpop.f32.mrb[0].mxu0
    %v1187 = vpop.f32.mrb[0].mxu0
    %v1188 = vadd.f32 0.0, %v1187
    %v1189 = vpop.f32.mrb[0].mxu0
    %1190 = vmatprep.mubr.bf16.mxu0 0
    %1191 = vmatmul.mubr.bf16.gmra.mrb[0].mxu0 %v287
    %v1192 = vpop.f32.mrb[0].mxu0
    %v1193 = vadd.f32 0.0, %v1192
    %v1194 = vpop.f32.mrb[0].mxu0
    %v1195 = vpop.f32.mrb[0].mxu0
    %v1196 = vadd.f32 0.0, %v1195
    %v1197 = vpop.f32.mrb[0].mxu0
    %1198 = vmatprep.mubr.bf16.mxu0 0
    %1199 = vmatmul.mubr.bf16.gmra.mrb[0].mxu0 %v290
    %v1200 = vpop.f32.mrb[0].mxu0
    %v1201 = vadd.f32 0.0, %v1200
    %v1202 = vpop.f32.mrb[0].mxu0
    %v1203 = vpop.f32.mrb[0].mxu0
    %v1204 = vadd.f32 0.0, %v1203
    %v1205 = vpop.f32.mrb[0].mxu0
    %1206 = vmatprep.mubr.bf16.mxu0 0
    %1207 = vmatmul.mubr.bf16.gmra.mrb[0].mxu0 %v266
    %v1208 = vpop.f32.mrb[0].mxu0
    %v1209 = vadd.f32 0.0, %v1208
    %v1210 = vpop.f32.mrb[0].mxu0
    %v1211 = vpop.f32.mrb[0].mxu0
    %v1212 = vadd.f32 0.0, %v1211
    %v1213 = vpop.f32.mrb[0].mxu0
    %1214 = vmatprep.mubr.bf16.mxu0 0
    %1215 = vmatmul.mubr.bf16.gmra.mrb[0].mxu0 %v269
    %v1216 = vpop.f32.mrb[0].mxu0
    %v1217 = vadd.f32 0.0, %v1216
    %v1218 = vpop.f32.mrb[0].mxu0
    %v1219 = vpop.f32.mrb[0].mxu0
    %v1220 = vadd.f32 0.0, %v1219
    %v1221 = vpop.f32.mrb[0].mxu0
    %1222 = vmatprep.mubr.bf16.mxu0 0
    %1223 = vmatmul.mubr.bf16.gmra.mrb[0].mxu0 %v272
    %v1224 = vpop.f32.mrb[0].mxu0
    %v1225 = vadd.f32 0.0, %v1224
    %v1226 = vpop.f32.mrb[0].mxu0
    %v1227 = vpop.f32.mrb[0].mxu0
    %v1228 = vadd.f32 0.0, %v1227
    %v1229 = vpop.f32.mrb[0].mxu0
    %1230 = vmatprep.mubr.bf16.mxu0 0
    %1231 = vmatmul.mubr.bf16.gmra.mrb[0].mxu0 %v956
    %v1232 = vpop.f32.mrb[0].mxu0
    %v1233 = vadd.f32 0.0, %v1232
    %v1234 = vpop.f32.mrb[0].mxu0
    %v1235 = vpop.f32.mrb[0].mxu0
    %v1236 = vadd.f32 0.0, %v1235
    %v1237 = vpop.f32.mrb[0].mxu0
    %1238 = vmatprep.mubr.bf16.mxu0 0
    %1239 = vmatmul.mubr.bf16.gmra.mrb[0].mxu0 %v959
    %v1240 = vpop.f32.mrb[0].mxu0
    %v1241 = vadd.f32 0.0, %v1240
    %v1242 = vpop.f32.mrb[0].mxu0
    %v1243 = vpop.f32.mrb[0].mxu0
    %v1244 = vadd.f32 0.0, %v1243
    %v1245 = vpop.f32.mrb[0].mxu0
    %1246 = vmatprep.mubr.bf16.mxu0 0
    %1247 = vmatmul.mubr.bf16.gmra.mrb[0].mxu0 %v962
    %v1248 = vpop.f32.mrb[0].mxu0
    %v1249 = vadd.f32 0.0, %v1248
    %v1250 = vpop.f32.mrb[0].mxu0
    %v1251 = vpop.f32.mrb[0].mxu0
    %v1252 = vadd.f32 0.0, %v1251
    %v1253 = vpop.f32.mrb[0].mxu0
    %1254 = vdwg.mxu0
    %v1255 = vadd.f32 %v666, %v1008
    %v1256 = vadd.f32 %v668, %v1010
    %v1257 = vadd.f32 %v819, %v1161
    %v1258 = vadd.f32 %v670, %v1012
    %v1259 = vadd.f32 %v672, %v1014
    %v1260 = vadd.f32 %v822, %v1164
    %v1261 = vadd.f32 %v676, %v1018
    %v1262 = vadd.f32 %v678, %v1020
    %v1263 = vadd.f32 %v827, %v1169
    %v1264 = vadd.f32 %v680, %v1022
    %v1265 = vadd.f32 %v682, %v1024
    %v1266 = vadd.f32 %v830, %v1172
    %v1267 = vadd.f32 %v686, %v1028
    %v1268 = vadd.f32 %v688, %v1030
    %v1269 = vadd.f32 %v835, %v1177
    %v1270 = vadd.f32 %v690, %v1032
    %v1271 = vadd.f32 %v692, %v1034
    %v1272 = vadd.f32 %v838, %v1180
    %v1273 = vadd.f32 %v696, %v1038
    %v1274 = vadd.f32 %v698, %v1040
    %v1275 = vadd.f32 %v843, %v1185
    %v1276 = vadd.f32 %v700, %v1042
    %v1277 = vadd.f32 %v702, %v1044
    %v1278 = vadd.f32 %v846, %v1188
    %v1279 = vadd.f32 %v706, %v1048
    %v1280 = vadd.f32 %v708, %v1050
    %v1281 = vadd.f32 %v851, %v1193
    %v1282 = vadd.f32 %v710, %v1052
    %v1283 = vadd.f32 %v712, %v1054
    %v1284 = vadd.f32 %v854, %v1196
    %v1285 = vadd.f32 %v716, %v1058
    %v1286 = vadd.f32 %v718, %v1060
    %v1287 = vadd.f32 %v859, %v1201
    %v1288 = vadd.f32 %v720, %v1062
    %v1289 = vadd.f32 %v722, %v1064
    %v1290 = vadd.f32 %v862, %v1204
    %v1291 = vadd.f32 %v726, %v1068
    %v1292 = vadd.f32 %v728, %v1070
    %v1293 = vadd.f32 %v867, %v1209
    %v1294 = vadd.f32 %v730, %v1072
    %v1295 = vadd.f32 %v732, %v1074
    %v1296 = vadd.f32 %v870, %v1212
    %v1297 = vadd.f32 %v736, %v1078
    %v1298 = vadd.f32 %v738, %v1080
    %v1299 = vadd.f32 %v875, %v1217
    %v1300 = vadd.f32 %v740, %v1082
    %v1301 = vadd.f32 %v742, %v1084
    %v1302 = vadd.f32 %v878, %v1220
    %v1303 = vadd.f32 %v746, %v1088
    %v1304 = vadd.f32 %v748, %v1090
    %v1305 = vadd.f32 %v883, %v1225
    %v1306 = vadd.f32 %v750, %v1092
    %v1307 = vadd.f32 %v752, %v1094
    %v1308 = vadd.f32 %v886, %v1228
    %v1309 = vadd.f32 %v756, %v1098
    %v1310 = vadd.f32 %v758, %v1100
    %v1311 = vadd.f32 %v891, %v1233
    %v1312 = vadd.f32 %v760, %v1102
    %v1313 = vadd.f32 %v762, %v1104
    %v1314 = vadd.f32 %v894, %v1236
    %v1315 = vadd.f32 %v766, %v1108
    %v1316 = vadd.f32 %v768, %v1110
    %v1317 = vadd.f32 %v899, %v1241
    %v1318 = vadd.f32 %v770, %v1112
    %v1319 = vadd.f32 %v772, %v1114
    %v1320 = vadd.f32 %v902, %v1244
    %v1321 = vadd.f32 %v776, %v1118
    %v1322 = vadd.f32 %v778, %v1120
    %v1323 = vadd.f32 %v907, %v1249
    %v1324 = vadd.f32 %v780, %v1122
    %v1325 = vadd.f32 %v782, %v1124
    %v1326 = vadd.f32 %v910, %v1252
    %v1328 = vunpack.c.l.b16 %v127
    %v1329 = vpack.c.b16 %v158, %v157
    %v1330 = vpack.c.b16 %v160, %v159
    %v1331 = vpack.c.b16 %v1328, %v161
    %v1332 = vld [vmem:[#allocation2 + $0x78] sm:$0xcc]
    %v1333 = vld [vmem:[#allocation2 + $0x80] sm:$0xc]
    %v1334 = vld [vmem:[#allocation2 + $0x84] sm:$0xff]
    %v1335 = vld [vmem:[#allocation2 + $0x8c] sm:$0xf]
    %v1336 = vld [vmem:[#allocation2 + $0x90] sm:$0xff]
    %v1337 = vld [vmem:[#allocation2 + $0x98] sm:$0xf]
    %v1338 = vld [vmem:[#allocation2 + $0x9c] sm:$0xff]
    %v1339 = vld [vmem:[#allocation2 + $0xa4] sm:$0xf]
    %v1348 = vunpack.c.l.b16 %v1332
    %v1349 = vunpack.c.h.b16 %v1332
    %v1350 = vunpack.c.l.b16 %v1333
    %v1351 = vunpack.c.l.b16 %v1334
    %v1352 = vunpack.c.h.b16 %v1334
    %v1353 = vunpack.c.l.b16 %v1335
    %v1354 = vunpack.c.l.b16 %v1336
    %v1355 = vunpack.c.h.b16 %v1336
    %v1356 = vunpack.c.l.b16 %v1337
    %v1357 = vunpack.c.l.b16 %v1338
    %v1358 = vunpack.c.h.b16 %v1338
    %v1359 = vunpack.c.l.b16 %v1339
    %v1360 = vpack.c.b16 %v1351, %v1348
    %v1361 = vpack.c.b16 %v1352, %v1349
    %v1362 = vpack.c.b16 %v1353, %v1350
    %v1363 = vpack.c.b16 %v1357, %v1354
    %v1364 = vpack.c.b16 %v1358, %v1355
    %v1365 = vpack.c.b16 %v1359, %v1356
    %v1366 = vrot.slane %v1360, 2
    %v1367 = vrot.slane %v1363, 2
    %v1368 = vsel %vm242, %v1366, %v1367
    %v1369 = vrot.slane %v1361, 2
    %v1370 = vrot.slane %v1364, 2
    %v1371 = vsel %vm242, %v1369, %v1370
    %v1372 = vrot.slane %v1362, 2
    %v1373 = vrot.slane %v1365, 2
    %v1374 = vsel %vm242, %v1372, %v1373
    %v1379 = vsel %vm255, %v1329, 0
    %v1382 = vsel %vm255, %v1330, 0
    %v1385 = vsel %vm255, %v1331, 0
    %v1388 = vsel %vm292, %v1367, 0
    %v1391 = vsel %vm292, %v1370, 0
    %v1394 = vsel %vm292, %v1373, 0
    %1396 = vmatprep.subr.bf16.mxu0 %v1371
    %1397 = vmatpush1.bf16.msra.mxu0 %v1368
    %1398 = vmatprep.subr.bf16.mxu0 %v1391
    %1399 = vmatpush1.bf16.msra.mxu0 %v1388
    %1400 = vmatprep.subr.bf16.mxu0 0
    %1401 = vmatpush1.bf16.msra.mxu0 0
    %1402 = vmatprep.subr.bf16.mxu0 0
    %1403 = vmatpush1.bf16.msra.mxu0 0
    %1404 = vmatprep.subr.bf16.mxu0 0
    %1405 = vmatpush1.bf16.msra.mxu0 0
    %1406 = vmatprep.subr.bf16.mxu0 0
    %1407 = vmatpush1.bf16.msra.mxu0 0
    %1408 = vmatprep.subr.bf16.mxu0 0
    %1409 = vmatpush1.bf16.msra.mxu0 0
    %1410 = vmatprep.subr.bf16.mxu0 0
    %1411 = vmatpush1.bf16.msra.mxu0 0
    %1412 = vmatprep.subr.bf16.mxu0 0
    %1413 = vmatpush1.bf16.msra.mxu0 0
    %1414 = vmatprep.subr.bf16.mxu0 0
    %1415 = vmatpush1.bf16.msra.mxu0 0
    %1416 = vmatprep.subr.bf16.mxu0 0
    %1417 = vmatpush1.bf16.msra.mxu0 0
    %1418 = vmatprep.subr.bf16.mxu0 0
    %1419 = vmatpush1.bf16.msra.mxu0 0
    %1420 = vmatprep.subr.bf16.mxu0 0
    %1421 = vmatpush1.bf16.msra.mxu0 0
    %1422 = vmatprep.subr.bf16.mxu0 0
    %1423 = vmatpush1.bf16.msra.mxu0 0
    %1424 = vmatprep.subr.bf16.mxu0 0
    %1425 = vmatpush1.bf16.msra.mxu0 0
    %1426 = vmatprep.subr.bf16.mxu0 0
    %1427 = vmatpush1.bf16.msra.mxu0 0
    %1428 = vmatprep.mubr.bf16.mxu0 0
    %1429 = vmatmul.mubr.bf16.gmra.mrb[0].mxu0 %v266
    %v1430 = vpop.f32.mrb[0].mxu0
    %v1431 = vadd.f32 0.0, %v1430
    %v1432 = vpop.f32.mrb[0].mxu0
    %v1433 = vadd.f32 0.0, %v1432
    %v1434 = vpop.f32.mrb[0].mxu0
    %v1435 = vadd.f32 0.0, %v1434
    %v1436 = vpop.f32.mrb[0].mxu0
    %v1437 = vadd.f32 0.0, %v1436
    %1438 = vmatprep.mubr.bf16.mxu0 0
    %1439 = vmatmul.mubr.bf16.gmra.mrb[0].mxu0 %v269
    %v1440 = vpop.f32.mrb[0].mxu0
    %v1441 = vadd.f32 0.0, %v1440
    %v1442 = vpop.f32.mrb[0].mxu0
    %v1443 = vadd.f32 0.0, %v1442
    %v1444 = vpop.f32.mrb[0].mxu0
    %v1445 = vadd.f32 0.0, %v1444
    %v1446 = vpop.f32.mrb[0].mxu0
    %v1447 = vadd.f32 0.0, %v1446
    %1448 = vmatprep.mubr.bf16.mxu0 0
    %1449 = vmatmul.mubr.bf16.gmra.mrb[0].mxu0 %v272
    %v1450 = vpop.f32.mrb[0].mxu0
    %v1451 = vadd.f32 0.0, %v1450
    %v1452 = vpop.f32.mrb[0].mxu0
    %v1453 = vadd.f32 0.0, %v1452
    %v1454 = vpop.f32.mrb[0].mxu0
    %v1455 = vadd.f32 0.0, %v1454
    %v1456 = vpop.f32.mrb[0].mxu0
    %v1457 = vadd.f32 0.0, %v1456
    %1458 = vmatprep.mubr.bf16.mxu0 0
    %1459 = vmatmul.mubr.bf16.gmra.mrb[0].mxu0 %v956
    %v1460 = vpop.f32.mrb[0].mxu0
    %v1461 = vadd.f32 0.0, %v1460
    %v1462 = vpop.f32.mrb[0].mxu0
    %v1463 = vadd.f32 0.0, %v1462
    %v1464 = vpop.f32.mrb[0].mxu0
    %v1465 = vadd.f32 0.0, %v1464
    %v1466 = vpop.f32.mrb[0].mxu0
    %v1467 = vadd.f32 0.0, %v1466
    %1468 = vmatprep.mubr.bf16.mxu0 0
    %1469 = vmatmul.mubr.bf16.gmra.mrb[0].mxu0 %v959
    %v1470 = vpop.f32.mrb[0].mxu0
    %v1471 = vadd.f32 0.0, %v1470
    %v1472 = vpop.f32.mrb[0].mxu0
    %v1473 = vadd.f32 0.0, %v1472
    %v1474 = vpop.f32.mrb[0].mxu0
    %v1475 = vadd.f32 0.0, %v1474
    %v1476 = vpop.f32.mrb[0].mxu0
    %v1477 = vadd.f32 0.0, %v1476
    %1478 = vmatprep.mubr.bf16.mxu0 0
    %1479 = vmatmul.mubr.bf16.gmra.mrb[0].mxu0 %v962
    %v1480 = vpop.f32.mrb[0].mxu0
    %v1481 = vadd.f32 0.0, %v1480
    %v1482 = vpop.f32.mrb[0].mxu0
    %v1483 = vadd.f32 0.0, %v1482
    %v1484 = vpop.f32.mrb[0].mxu0
    %v1485 = vadd.f32 0.0, %v1484
    %v1486 = vpop.f32.mrb[0].mxu0
    %v1487 = vadd.f32 0.0, %v1486
    %1488 = vmatprep.mubr.bf16.mxu0 0
    %1489 = vmatmul.mubr.bf16.gmra.mrb[0].mxu0 %v284
    %v1490 = vpop.f32.mrb[0].mxu0
    %v1491 = vadd.f32 0.0, %v1490
    %v1492 = vpop.f32.mrb[0].mxu0
    %v1493 = vadd.f32 0.0, %v1492
    %v1494 = vpop.f32.mrb[0].mxu0
    %v1495 = vadd.f32 0.0, %v1494
    %v1496 = vpop.f32.mrb[0].mxu0
    %v1497 = vadd.f32 0.0, %v1496
    %1498 = vmatprep.mubr.bf16.mxu0 0
    %1499 = vmatmul.mubr.bf16.gmra.mrb[0].mxu0 %v287
    %v1500 = vpop.f32.mrb[0].mxu0
    %v1501 = vadd.f32 0.0, %v1500
    %v1502 = vpop.f32.mrb[0].mxu0
    %v1503 = vadd.f32 0.0, %v1502
    %v1504 = vpop.f32.mrb[0].mxu0
    %v1505 = vadd.f32 0.0, %v1504
    %v1506 = vpop.f32.mrb[0].mxu0
    %v1507 = vadd.f32 0.0, %v1506
    %1508 = vmatprep.mubr.bf16.mxu0 0
    %1509 = vmatmul.mubr.bf16.gmra.mrb[0].mxu0 %v290
    %v1510 = vpop.f32.mrb[0].mxu0
    %v1511 = vadd.f32 0.0, %v1510
    %v1512 = vpop.f32.mrb[0].mxu0
    %v1513 = vadd.f32 0.0, %v1512
    %v1514 = vpop.f32.mrb[0].mxu0
    %v1515 = vadd.f32 0.0, %v1514
    %v1516 = vpop.f32.mrb[0].mxu0
    %v1517 = vadd.f32 0.0, %v1516
    %1518 = vmatprep.mubr.bf16.mxu0 0
    %1519 = vmatmul.mubr.bf16.gmra.mrb[0].mxu0 %v1379
    %v1520 = vpop.f32.mrb[0].mxu0
    %v1521 = vadd.f32 0.0, %v1520
    %v1522 = vpop.f32.mrb[0].mxu0
    %v1523 = vadd.f32 0.0, %v1522
    %v1524 = vpop.f32.mrb[0].mxu0
    %v1525 = vadd.f32 0.0, %v1524
    %v1526 = vpop.f32.mrb[0].mxu0
    %v1527 = vadd.f32 0.0, %v1526
    %1528 = vmatprep.mubr.bf16.mxu0 0
    %1529 = vmatmul.mubr.bf16.gmra.mrb[0].mxu0 %v1382
    %v1530 = vpop.f32.mrb[0].mxu0
    %v1531 = vadd.f32 0.0, %v1530
    %v1532 = vpop.f32.mrb[0].mxu0
    %v1533 = vadd.f32 0.0, %v1532
    %v1534 = vpop.f32.mrb[0].mxu0
    %v1535 = vadd.f32 0.0, %v1534
    %v1536 = vpop.f32.mrb[0].mxu0
    %v1537 = vadd.f32 0.0, %v1536
    %1538 = vmatprep.mubr.bf16.mxu0 0
    %1539 = vmatmul.mubr.bf16.gmra.mrb[0].mxu0 %v1385
    %v1540 = vpop.f32.mrb[0].mxu0
    %v1541 = vadd.f32 0.0, %v1540
    %v1542 = vpop.f32.mrb[0].mxu0
    %v1543 = vadd.f32 0.0, %v1542
    %v1544 = vpop.f32.mrb[0].mxu0
    %v1545 = vadd.f32 0.0, %v1544
    %v1546 = vpop.f32.mrb[0].mxu0
    %v1547 = vadd.f32 0.0, %v1546
    %1548 = vdwg.mxu0
    %1549 = vmatprep.subr.bf16.mxu0 0
    %1550 = vmatpush1.bf16.msra.mxu0 %v1374
    %1551 = vmatprep.subr.bf16.mxu0 0
    %1552 = vmatpush1.bf16.msra.mxu0 %v1394
    %1553 = vmatprep.subr.bf16.mxu0 0
    %1554 = vmatpush1.bf16.msra.mxu0 0
    %1555 = vmatprep.subr.bf16.mxu0 0
    %1556 = vmatpush1.bf16.msra.mxu0 0
    %1557 = vmatprep.subr.bf16.mxu0 0
    %1558 = vmatpush1.bf16.msra.mxu0 0
    %1559 = vmatprep.subr.bf16.mxu0 0
    %1560 = vmatpush1.bf16.msra.mxu0 0
    %1561 = vmatprep.subr.bf16.mxu0 0
    %1562 = vmatpush1.bf16.msra.mxu0 0
    %1563 = vmatprep.subr.bf16.mxu0 0
    %1564 = vmatpush1.bf16.msra.mxu0 0
    %1565 = vmatprep.subr.bf16.mxu0 0
    %1566 = vmatpush1.bf16.msra.mxu0 0
    %1567 = vmatprep.subr.bf16.mxu0 0
    %1568 = vmatpush1.bf16.msra.mxu0 0
    %1569 = vmatprep.subr.bf16.mxu0 0
    %1570 = vmatpush1.bf16.msra.mxu0 0
    %1571 = vmatprep.subr.bf16.mxu0 0
    %1572 = vmatpush1.bf16.msra.mxu0 0
    %1573 = vmatprep.subr.bf16.mxu0 0
    %1574 = vmatpush1.bf16.msra.mxu0 0
    %1575 = vmatprep.subr.bf16.mxu0 0
    %1576 = vmatpush1.bf16.msra.mxu0 0
    %1577 = vmatprep.subr.bf16.mxu0 0
    %1578 = vmatpush1.bf16.msra.mxu0 0
    %1579 = vmatprep.subr.bf16.mxu0 0
    %1580 = vmatpush1.bf16.msra.mxu0 0
    %1581 = vmatprep.mubr.bf16.mxu0 0
    %1582 = vmatmul.mubr.bf16.gmra.mrb[0].mxu0 %v266
    %v1583 = vpop.f32.mrb[0].mxu0
    %v1584 = vadd.f32 0.0, %v1583
    %v1585 = vpop.f32.mrb[0].mxu0
    %v1586 = vpop.f32.mrb[0].mxu0
    %v1587 = vadd.f32 0.0, %v1586
    %v1588 = vpop.f32.mrb[0].mxu0
    %1589 = vmatprep.mubr.bf16.mxu0 0
    %1590 = vmatmul.mubr.bf16.gmra.mrb[0].mxu0 %v269
    %v1591 = vpop.f32.mrb[0].mxu0
    %v1592 = vadd.f32 0.0, %v1591
    %v1593 = vpop.f32.mrb[0].mxu0
    %v1594 = vpop.f32.mrb[0].mxu0
    %v1595 = vadd.f32 0.0, %v1594
    %v1596 = vpop.f32.mrb[0].mxu0
    %1597 = vmatprep.mubr.bf16.mxu0 0
    %1598 = vmatmul.mubr.bf16.gmra.mrb[0].mxu0 %v272
    %v1599 = vpop.f32.mrb[0].mxu0
    %v1600 = vadd.f32 0.0, %v1599
    %v1601 = vpop.f32.mrb[0].mxu0
    %v1602 = vpop.f32.mrb[0].mxu0
    %v1603 = vadd.f32 0.0, %v1602
    %v1604 = vpop.f32.mrb[0].mxu0
    %1605 = vmatprep.mubr.bf16.mxu0 0
    %1606 = vmatmul.mubr.bf16.gmra.mrb[0].mxu0 %v956
    %v1607 = vpop.f32.mrb[0].mxu0
    %v1608 = vadd.f32 0.0, %v1607
    %v1609 = vpop.f32.mrb[0].mxu0
    %v1610 = vpop.f32.mrb[0].mxu0
    %v1611 = vadd.f32 0.0, %v1610
    %v1612 = vpop.f32.mrb[0].mxu0
    %1613 = vmatprep.mubr.bf16.mxu0 0
    %1614 = vmatmul.mubr.bf16.gmra.mrb[0].mxu0 %v959
    %v1615 = vpop.f32.mrb[0].mxu0
    %v1616 = vadd.f32 0.0, %v1615
    %v1617 = vpop.f32.mrb[0].mxu0
    %v1618 = vpop.f32.mrb[0].mxu0
    %v1619 = vadd.f32 0.0, %v1618
    %v1620 = vpop.f32.mrb[0].mxu0
    %1621 = vmatprep.mubr.bf16.mxu0 0
    %1622 = vmatmul.mubr.bf16.gmra.mrb[0].mxu0 %v962
    %v1623 = vpop.f32.mrb[0].mxu0
    %v1624 = vadd.f32 0.0, %v1623
    %v1625 = vpop.f32.mrb[0].mxu0
    %v1626 = vpop.f32.mrb[0].mxu0
    %v1627 = vadd.f32 0.0, %v1626
    %v1628 = vpop.f32.mrb[0].mxu0
    %1629 = vmatprep.mubr.bf16.mxu0 0
    %1630 = vmatmul.mubr.bf16.gmra.mrb[0].mxu0 %v284
    %v1631 = vpop.f32.mrb[0].mxu0
    %v1632 = vadd.f32 0.0, %v1631
    %v1633 = vpop.f32.mrb[0].mxu0
    %v1634 = vpop.f32.mrb[0].mxu0
    %v1635 = vadd.f32 0.0, %v1634
    %v1636 = vpop.f32.mrb[0].mxu0
    %1637 = vmatprep.mubr.bf16.mxu0 0
    %1638 = vmatmul.mubr.bf16.gmra.mrb[0].mxu0 %v287
    %v1639 = vpop.f32.mrb[0].mxu0
    %v1640 = vadd.f32 0.0, %v1639
    %v1641 = vpop.f32.mrb[0].mxu0
    %v1642 = vpop.f32.mrb[0].mxu0
    %v1643 = vadd.f32 0.0, %v1642
    %v1644 = vpop.f32.mrb[0].mxu0
    %1645 = vmatprep.mubr.bf16.mxu0 0
    %1646 = vmatmul.mubr.bf16.gmra.mrb[0].mxu0 %v290
    %v1647 = vpop.f32.mrb[0].mxu0
    %v1648 = vadd.f32 0.0, %v1647
    %v1649 = vpop.f32.mrb[0].mxu0
    %v1650 = vpop.f32.mrb[0].mxu0
    %v1651 = vadd.f32 0.0, %v1650
    %v1652 = vpop.f32.mrb[0].mxu0
    %1653 = vmatprep.mubr.bf16.mxu0 0
    %1654 = vmatmul.mubr.bf16.gmra.mrb[0].mxu0 %v1379
    %v1655 = vpop.f32.mrb[0].mxu0
    %v1656 = vadd.f32 0.0, %v1655
    %v1657 = vpop.f32.mrb[0].mxu0
    %v1658 = vpop.f32.mrb[0].mxu0
    %v1659 = vadd.f32 0.0, %v1658
    %v1660 = vpop.f32.mrb[0].mxu0
    %1661 = vmatprep.mubr.bf16.mxu0 0
    %1662 = vmatmul.mubr.bf16.gmra.mrb[0].mxu0 %v1382
    %v1663 = vpop.f32.mrb[0].mxu0
    %v1664 = vadd.f32 0.0, %v1663
    %v1665 = vpop.f32.mrb[0].mxu0
    %v1666 = vpop.f32.mrb[0].mxu0
    %v1667 = vadd.f32 0.0, %v1666
    %v1668 = vpop.f32.mrb[0].mxu0
    %1669 = vmatprep.mubr.bf16.mxu0 0
    %1670 = vmatmul.mubr.bf16.gmra.mrb[0].mxu0 %v1385
    %v1671 = vpop.f32.mrb[0].mxu0
    %v1672 = vadd.f32 0.0, %v1671
    %v1673 = vpop.f32.mrb[0].mxu0
    %v1674 = vpop.f32.mrb[0].mxu0
    %v1675 = vadd.f32 0.0, %v1674
    %v1676 = vpop.f32.mrb[0].mxu0
    %1677 = vdwg.mxu0
    %v1678 = vadd.f32 %v1255, %v1431
    %v1679 = vadd.f32 %v1256, %v1433
    %v1680 = vadd.f32 %v1257, %v1584
    %v1681 = vadd.f32 %v1258, %v1435
    %v1682 = vadd.f32 %v1259, %v1437
    %v1683 = vadd.f32 %v1260, %v1587
    %v1684 = vadd.f32 %v1261, %v1441
    %v1685 = vadd.f32 %v1262, %v1443
    %v1686 = vadd.f32 %v1263, %v1592
    %v1687 = vadd.f32 %v1264, %v1445
    %v1688 = vadd.f32 %v1265, %v1447
    %v1689 = vadd.f32 %v1266, %v1595
    %v1690 = vadd.f32 %v1267, %v1451
    %v1691 = vadd.f32 %v1268, %v1453
    %v1692 = vadd.f32 %v1269, %v1600
    %v1693 = vadd.f32 %v1270, %v1455
    %v1694 = vadd.f32 %v1271, %v1457
    %v1695 = vadd.f32 %v1272, %v1603
    %v1696 = vadd.f32 %v1273, %v1461
    %v1697 = vadd.f32 %v1274, %v1463
    %v1698 = vadd.f32 %v1275, %v1608
    %v1699 = vadd.f32 %v1276, %v1465
    %v1700 = vadd.f32 %v1277, %v1467
    %v1701 = vadd.f32 %v1278, %v1611
    %v1702 = vadd.f32 %v1279, %v1471
    %v1703 = vadd.f32 %v1280, %v1473
    %v1704 = vadd.f32 %v1281, %v1616
    %v1705 = vadd.f32 %v1282, %v1475
    %v1706 = vadd.f32 %v1283, %v1477
    %v1707 = vadd.f32 %v1284, %v1619
    %v1708 = vadd.f32 %v1285, %v1481
    %v1709 = vadd.f32 %v1286, %v1483
    %v1710 = vadd.f32 %v1287, %v1624
    %v1711 = vadd.f32 %v1288, %v1485
    %v1712 = vadd.f32 %v1289, %v1487
    %v1713 = vadd.f32 %v1290, %v1627
    %v1714 = vadd.f32 %v1291, %v1491
    %v1715 = vadd.f32 %v1292, %v1493
    %v1716 = vadd.f32 %v1293, %v1632
    %v1717 = vadd.f32 %v1294, %v1495
    %v1718 = vadd.f32 %v1295, %v1497
    %v1719 = vadd.f32 %v1296, %v1635
    %v1720 = vadd.f32 %v1297, %v1501
    %v1721 = vadd.f32 %v1298, %v1503
    %v1722 = vadd.f32 %v1299, %v1640
    %v1723 = vadd.f32 %v1300, %v1505
    %v1724 = vadd.f32 %v1301, %v1507
    %v1725 = vadd.f32 %v1302, %v1643
    %v1726 = vadd.f32 %v1303, %v1511
    %v1727 = vadd.f32 %v1304, %v1513
    %v1728 = vadd.f32 %v1305, %v1648
    %v1729 = vadd.f32 %v1306, %v1515
    %v1730 = vadd.f32 %v1307, %v1517
    %v1731 = vadd.f32 %v1308, %v1651
    %v1732 = vadd.f32 %v1309, %v1521
    %v1733 = vadd.f32 %v1310, %v1523
    %v1734 = vadd.f32 %v1311, %v1656
    %v1735 = vadd.f32 %v1312, %v1525
    %v1736 = vadd.f32 %v1313, %v1527
    %v1737 = vadd.f32 %v1314, %v1659
    %v1738 = vadd.f32 %v1315, %v1531
    %v1739 = vadd.f32 %v1316, %v1533
    %v1740 = vadd.f32 %v1317, %v1664
    %v1741 = vadd.f32 %v1318, %v1535
    %v1742 = vadd.f32 %v1319, %v1537
    %v1743 = vadd.f32 %v1320, %v1667
    %v1744 = vadd.f32 %v1321, %v1541
    %v1745 = vadd.f32 %v1322, %v1543
    %v1746 = vadd.f32 %v1323, %v1672
    %v1747 = vadd.f32 %v1324, %v1545
    %v1748 = vadd.f32 %v1325, %v1547
    %v1749 = vadd.f32 %v1326, %v1675
    %v1751 = vunpack.c.l.b16 %v134
    %v1752 = vpack.c.b16 %v188, %v187
    %v1753 = vpack.c.b16 %v190, %v189
    %v1754 = vpack.c.b16 %v1751, %v191
    %v1755 = vld [vmem:[#allocation2 + $0xa8] sm:$0xff]
    %v1756 = vld [vmem:[#allocation2 + $0xb0] sm:$0xf]
    %v1757 = vld [vmem:[#allocation2 + $0xb4] sm:$0xff]
    %v1758 = vld [vmem:[#allocation2 + $0xbc] sm:$0xf]
    %v1759 = vld [vmem:[#allocation2 + $0xc0] sm:$0xff]
    %v1760 = vld [vmem:[#allocation2 + $0xc8] sm:$0xf]
    %v1761 = vld [vmem:[#allocation2 + $0xcc] sm:$0x33]
    %v1762 = vld [vmem:[#allocation2 + $0xd4] sm:$0x3]
    %v1771 = vunpack.c.l.b16 %v1755
    %v1772 = vunpack.c.h.b16 %v1755
    %v1773 = vunpack.c.l.b16 %v1756
    %v1774 = vunpack.c.l.b16 %v1757
    %v1775 = vunpack.c.h.b16 %v1757
    %v1776 = vunpack.c.l.b16 %v1758
    %v1777 = vunpack.c.l.b16 %v1759
    %v1778 = vunpack.c.h.b16 %v1759
    %v1779 = vunpack.c.l.b16 %v1760
    %v1780 = vunpack.c.l.b16 %v1761
    %v1781 = vunpack.c.h.b16 %v1761
    %v1782 = vunpack.c.l.b16 %v1762
    %v1783 = vpack.c.b16 %v1774, %v1771
    %v1784 = vpack.c.b16 %v1775, %v1772
    %v1785 = vpack.c.b16 %v1776, %v1773
    %v1786 = vpack.c.b16 %v1780, %v1777
    %v1787 = vpack.c.b16 %v1781, %v1778
    %v1788 = vpack.c.b16 %v1782, %v1779
    %v1793 = vsel %vm255, %v1752, 0
    %v1796 = vsel %vm255, %v1753, 0
    %v1799 = vsel %vm255, %v1754, 0
    %v1802 = vsel %vm292, %v1786, 0
    %v1805 = vsel %vm292, %v1787, 0
    %v1808 = vsel %vm292, %v1788, 0
    %1810 = vmatprep.subr.bf16.mxu0 %v1784
    %1811 = vmatpush1.bf16.msra.mxu0 %v1783
    %1812 = vmatprep.subr.bf16.mxu0 %v1805
    %1813 = vmatpush1.bf16.msra.mxu0 %v1802
    %1814 = vmatprep.subr.bf16.mxu0 0
    %1815 = vmatpush1.bf16.msra.mxu0 0
    %1816 = vmatprep.subr.bf16.mxu0 0
    %1817 = vmatpush1.bf16.msra.mxu0 0
    %1818 = vmatprep.subr.bf16.mxu0 0
    %1819 = vmatpush1.bf16.msra.mxu0 0
    %1820 = vmatprep.subr.bf16.mxu0 0
    %1821 = vmatpush1.bf16.msra.mxu0 0
    %1822 = vmatprep.subr.bf16.mxu0 0
    %1823 = vmatpush1.bf16.msra.mxu0 0
    %1824 = vmatprep.subr.bf16.mxu0 0
    %1825 = vmatpush1.bf16.msra.mxu0 0
    %1826 = vmatprep.subr.bf16.mxu0 0
    %1827 = vmatpush1.bf16.msra.mxu0 0
    %1828 = vmatprep.subr.bf16.mxu0 0
    %1829 = vmatpush1.bf16.msra.mxu0 0
    %1830 = vmatprep.subr.bf16.mxu0 0
    %1831 = vmatpush1.bf16.msra.mxu0 0
    %1832 = vmatprep.subr.bf16.mxu0 0
    %1833 = vmatpush1.bf16.msra.mxu0 0
    %1834 = vmatprep.subr.bf16.mxu0 0
    %1835 = vmatpush1.bf16.msra.mxu0 0
    %1836 = vmatprep.subr.bf16.mxu0 0
    %1837 = vmatpush1.bf16.msra.mxu0 0
    %1838 = vmatprep.subr.bf16.mxu0 0
    %1839 = vmatpush1.bf16.msra.mxu0 0
    %1840 = vmatprep.subr.bf16.mxu0 0
    %1841 = vmatpush1.bf16.msra.mxu0 0
    %1842 = vmatprep.mubr.bf16.mxu0 0
    %1843 = vmatmul.mubr.bf16.gmra.mrb[0].mxu0 %v284
    %v1844 = vpop.f32.mrb[0].mxu0
    %v1845 = vadd.f32 0.0, %v1844
    %v1846 = vpop.f32.mrb[0].mxu0
    %v1847 = vadd.f32 0.0, %v1846
    %v1848 = vpop.f32.mrb[0].mxu0
    %v1849 = vadd.f32 0.0, %v1848
    %v1850 = vpop.f32.mrb[0].mxu0
    %v1851 = vadd.f32 0.0, %v1850
    %1852 = vmatprep.mubr.bf16.mxu0 0
    %1853 = vmatmul.mubr.bf16.gmra.mrb[0].mxu0 %v287
    %v1854 = vpop.f32.mrb[0].mxu0
    %v1855 = vadd.f32 0.0, %v1854
    %v1856 = vpop.f32.mrb[0].mxu0
    %v1857 = vadd.f32 0.0, %v1856
    %v1858 = vpop.f32.mrb[0].mxu0
    %v1859 = vadd.f32 0.0, %v1858
    %v1860 = vpop.f32.mrb[0].mxu0
    %v1861 = vadd.f32 0.0, %v1860
    %1862 = vmatprep.mubr.bf16.mxu0 0
    %1863 = vmatmul.mubr.bf16.gmra.mrb[0].mxu0 %v290
    %v1864 = vpop.f32.mrb[0].mxu0
    %v1865 = vadd.f32 0.0, %v1864
    %v1866 = vpop.f32.mrb[0].mxu0
    %v1867 = vadd.f32 0.0, %v1866
    %v1868 = vpop.f32.mrb[0].mxu0
    %v1869 = vadd.f32 0.0, %v1868
    %v1870 = vpop.f32.mrb[0].mxu0
    %v1871 = vadd.f32 0.0, %v1870
    %1872 = vmatprep.mubr.bf16.mxu0 0
    %1873 = vmatmul.mubr.bf16.gmra.mrb[0].mxu0 %v1379
    %v1874 = vpop.f32.mrb[0].mxu0
    %v1875 = vadd.f32 0.0, %v1874
    %v1876 = vpop.f32.mrb[0].mxu0
    %v1877 = vadd.f32 0.0, %v1876
    %v1878 = vpop.f32.mrb[0].mxu0
    %v1879 = vadd.f32 0.0, %v1878
    %v1880 = vpop.f32.mrb[0].mxu0
    %v1881 = vadd.f32 0.0, %v1880
    %1882 = vmatprep.mubr.bf16.mxu0 0
    %1883 = vmatmul.mubr.bf16.gmra.mrb[0].mxu0 %v1382
    %v1884 = vpop.f32.mrb[0].mxu0
    %v1885 = vadd.f32 0.0, %v1884
    %v1886 = vpop.f32.mrb[0].mxu0
    %v1887 = vadd.f32 0.0, %v1886
    %v1888 = vpop.f32.mrb[0].mxu0
    %v1889 = vadd.f32 0.0, %v1888
    %v1890 = vpop.f32.mrb[0].mxu0
    %v1891 = vadd.f32 0.0, %v1890
    %1892 = vmatprep.mubr.bf16.mxu0 0
    %1893 = vmatmul.mubr.bf16.gmra.mrb[0].mxu0 %v1385
    %v1894 = vpop.f32.mrb[0].mxu0
    %v1895 = vadd.f32 0.0, %v1894
    %v1896 = vpop.f32.mrb[0].mxu0
    %v1897 = vadd.f32 0.0, %v1896
    %v1898 = vpop.f32.mrb[0].mxu0
    %v1899 = vadd.f32 0.0, %v1898
    %v1900 = vpop.f32.mrb[0].mxu0
    %v1901 = vadd.f32 0.0, %v1900
    %1902 = vmatprep.mubr.bf16.mxu0 0
    %1903 = vmatmul.mubr.bf16.gmra.mrb[0].mxu0 %v956
    %v1904 = vpop.f32.mrb[0].mxu0
    %v1905 = vadd.f32 0.0, %v1904
    %v1906 = vpop.f32.mrb[0].mxu0
    %v1907 = vadd.f32 0.0, %v1906
    %v1908 = vpop.f32.mrb[0].mxu0
    %v1909 = vadd.f32 0.0, %v1908
    %v1910 = vpop.f32.mrb[0].mxu0
    %v1911 = vadd.f32 0.0, %v1910
    %1912 = vmatprep.mubr.bf16.mxu0 0
    %1913 = vmatmul.mubr.bf16.gmra.mrb[0].mxu0 %v959
    %v1914 = vpop.f32.mrb[0].mxu0
    %v1915 = vadd.f32 0.0, %v1914
    %v1916 = vpop.f32.mrb[0].mxu0
    %v1917 = vadd.f32 0.0, %v1916
    %v1918 = vpop.f32.mrb[0].mxu0
    %v1919 = vadd.f32 0.0, %v1918
    %v1920 = vpop.f32.mrb[0].mxu0
    %v1921 = vadd.f32 0.0, %v1920
    %1922 = vmatprep.mubr.bf16.mxu0 0
    %1923 = vmatmul.mubr.bf16.gmra.mrb[0].mxu0 %v962
    %v1924 = vpop.f32.mrb[0].mxu0
    %v1925 = vadd.f32 0.0, %v1924
    %v1926 = vpop.f32.mrb[0].mxu0
    %v1927 = vadd.f32 0.0, %v1926
    %v1928 = vpop.f32.mrb[0].mxu0
    %v1929 = vadd.f32 0.0, %v1928
    %v1930 = vpop.f32.mrb[0].mxu0
    %v1931 = vadd.f32 0.0, %v1930
    %1932 = vmatprep.mubr.bf16.mxu0 0
    %1933 = vmatmul.mubr.bf16.gmra.mrb[0].mxu0 %v1793
    %v1934 = vpop.f32.mrb[0].mxu0
    %v1935 = vadd.f32 0.0, %v1934
    %v1936 = vpop.f32.mrb[0].mxu0
    %v1937 = vadd.f32 0.0, %v1936
    %v1938 = vpop.f32.mrb[0].mxu0
    %v1939 = vadd.f32 0.0, %v1938
    %v1940 = vpop.f32.mrb[0].mxu0
    %v1941 = vadd.f32 0.0, %v1940
    %1942 = vmatprep.mubr.bf16.mxu0 0
    %1943 = vmatmul.mubr.bf16.gmra.mrb[0].mxu0 %v1796
    %v1944 = vpop.f32.mrb[0].mxu0
    %v1945 = vadd.f32 0.0, %v1944
    %v1946 = vpop.f32.mrb[0].mxu0
    %v1947 = vadd.f32 0.0, %v1946
    %v1948 = vpop.f32.mrb[0].mxu0
    %v1949 = vadd.f32 0.0, %v1948
    %v1950 = vpop.f32.mrb[0].mxu0
    %v1951 = vadd.f32 0.0, %v1950
    %1952 = vmatprep.mubr.bf16.mxu0 0
    %1953 = vmatmul.mubr.bf16.gmra.mrb[0].mxu0 %v1799
    %v1954 = vpop.f32.mrb[0].mxu0
    %v1955 = vadd.f32 0.0, %v1954
    %v1956 = vpop.f32.mrb[0].mxu0
    %v1957 = vadd.f32 0.0, %v1956
    %v1958 = vpop.f32.mrb[0].mxu0
    %v1959 = vadd.f32 0.0, %v1958
    %v1960 = vpop.f32.mrb[0].mxu0
    %v1961 = vadd.f32 0.0, %v1960
    %1962 = vdwg.mxu0
    %1963 = vmatprep.subr.bf16.mxu0 0
    %1964 = vmatpush1.bf16.msra.mxu0 %v1785
    %1965 = vmatprep.subr.bf16.mxu0 0
    %1966 = vmatpush1.bf16.msra.mxu0 %v1808
    %1967 = vmatprep.subr.bf16.mxu0 0
    %1968 = vmatpush1.bf16.msra.mxu0 0
    %1969 = vmatprep.subr.bf16.mxu0 0
    %1970 = vmatpush1.bf16.msra.mxu0 0
    %1971 = vmatprep.subr.bf16.mxu0 0
    %1972 = vmatpush1.bf16.msra.mxu0 0
    %1973 = vmatprep.subr.bf16.mxu0 0
    %1974 = vmatpush1.bf16.msra.mxu0 0
    %1975 = vmatprep.subr.bf16.mxu0 0
    %1976 = vmatpush1.bf16.msra.mxu0 0
    %1977 = vmatprep.subr.bf16.mxu0 0
    %1978 = vmatpush1.bf16.msra.mxu0 0
    %1979 = vmatprep.subr.bf16.mxu0 0
    %1980 = vmatpush1.bf16.msra.mxu0 0
    %1981 = vmatprep.subr.bf16.mxu0 0
    %1982 = vmatpush1.bf16.msra.mxu0 0
    %1983 = vmatprep.subr.bf16.mxu0 0
    %1984 = vmatpush1.bf16.msra.mxu0 0
    %1985 = vmatprep.subr.bf16.mxu0 0
    %1986 = vmatpush1.bf16.msra.mxu0 0
    %1987 = vmatprep.subr.bf16.mxu0 0
    %1988 = vmatpush1.bf16.msra.mxu0 0
    %1989 = vmatprep.subr.bf16.mxu0 0
    %1990 = vmatpush1.bf16.msra.mxu0 0
    %1991 = vmatprep.subr.bf16.mxu0 0
    %1992 = vmatpush1.bf16.msra.mxu0 0
    %1993 = vmatprep.subr.bf16.mxu0 0
    %1994 = vmatpush1.bf16.msra.mxu0 0
    %1995 = vmatprep.mubr.bf16.mxu0 0
    %1996 = vmatmul.mubr.bf16.gmra.mrb[0].mxu0 %v284
    %v1997 = vpop.f32.mrb[0].mxu0
    %v1998 = vadd.f32 0.0, %v1997
    %v1999 = vpop.f32.mrb[0].mxu0
    %v2000 = vpop.f32.mrb[0].mxu0
    %v2001 = vadd.f32 0.0, %v2000
    %v2002 = vpop.f32.mrb[0].mxu0
    %2003 = vmatprep.mubr.bf16.mxu0 0
    %2004 = vmatmul.mubr.bf16.gmra.mrb[0].mxu0 %v287
    %v2005 = vpop.f32.mrb[0].mxu0
    %v2006 = vadd.f32 0.0, %v2005
    %v2007 = vpop.f32.mrb[0].mxu0
    %v2008 = vpop.f32.mrb[0].mxu0
    %v2009 = vadd.f32 0.0, %v2008
    %v2010 = vpop.f32.mrb[0].mxu0
    %2011 = vmatprep.mubr.bf16.mxu0 0
    %2012 = vmatmul.mubr.bf16.gmra.mrb[0].mxu0 %v290
    %v2013 = vpop.f32.mrb[0].mxu0
    %v2014 = vadd.f32 0.0, %v2013
    %v2015 = vpop.f32.mrb[0].mxu0
    %v2016 = vpop.f32.mrb[0].mxu0
    %v2017 = vadd.f32 0.0, %v2016
    %v2018 = vpop.f32.mrb[0].mxu0
    %2019 = vmatprep.mubr.bf16.mxu0 0
    %2020 = vmatmul.mubr.bf16.gmra.mrb[0].mxu0 %v1379
    %v2021 = vpop.f32.mrb[0].mxu0
    %v2022 = vadd.f32 0.0, %v2021
    %v2023 = vpop.f32.mrb[0].mxu0
    %v2024 = vpop.f32.mrb[0].mxu0
    %v2025 = vadd.f32 0.0, %v2024
    %v2026 = vpop.f32.mrb[0].mxu0
    %2027 = vmatprep.mubr.bf16.mxu0 0
    %2028 = vmatmul.mubr.bf16.gmra.mrb[0].mxu0 %v1382
    %v2029 = vpop.f32.mrb[0].mxu0
    %v2030 = vadd.f32 0.0, %v2029
    %v2031 = vpop.f32.mrb[0].mxu0
    %v2032 = vpop.f32.mrb[0].mxu0
    %v2033 = vadd.f32 0.0, %v2032
    %v2034 = vpop.f32.mrb[0].mxu0
    %2035 = vmatprep.mubr.bf16.mxu0 0
    %2036 = vmatmul.mubr.bf16.gmra.mrb[0].mxu0 %v1385
    %v2037 = vpop.f32.mrb[0].mxu0
    %v2038 = vadd.f32 0.0, %v2037
    %v2039 = vpop.f32.mrb[0].mxu0
    %v2040 = vpop.f32.mrb[0].mxu0
    %v2041 = vadd.f32 0.0, %v2040
    %v2042 = vpop.f32.mrb[0].mxu0
    %2043 = vmatprep.mubr.bf16.mxu0 0
    %2044 = vmatmul.mubr.bf16.gmra.mrb[0].mxu0 %v956
    %v2045 = vpop.f32.mrb[0].mxu0
    %v2046 = vadd.f32 0.0, %v2045
    %v2047 = vpop.f32.mrb[0].mxu0
    %v2048 = vpop.f32.mrb[0].mxu0
    %v2049 = vadd.f32 0.0, %v2048
    %v2050 = vpop.f32.mrb[0].mxu0
    %2051 = vmatprep.mubr.bf16.mxu0 0
    %2052 = vmatmul.mubr.bf16.gmra.mrb[0].mxu0 %v959
    %v2053 = vpop.f32.mrb[0].mxu0
    %v2054 = vadd.f32 0.0, %v2053
    %v2055 = vpop.f32.mrb[0].mxu0
    %v2056 = vpop.f32.mrb[0].mxu0
    %v2057 = vadd.f32 0.0, %v2056
    %v2058 = vpop.f32.mrb[0].mxu0
    %2059 = vmatprep.mubr.bf16.mxu0 0
    %2060 = vmatmul.mubr.bf16.gmra.mrb[0].mxu0 %v962
    %v2061 = vpop.f32.mrb[0].mxu0
    %v2062 = vadd.f32 0.0, %v2061
    %v2063 = vpop.f32.mrb[0].mxu0
    %v2064 = vpop.f32.mrb[0].mxu0
    %v2065 = vadd.f32 0.0, %v2064
    %v2066 = vpop.f32.mrb[0].mxu0
    %2067 = vmatprep.mubr.bf16.mxu0 0
    %2068 = vmatmul.mubr.bf16.gmra.mrb[0].mxu0 %v1793
    %v2069 = vpop.f32.mrb[0].mxu0
    %v2070 = vadd.f32 0.0, %v2069
    %v2071 = vpop.f32.mrb[0].mxu0
    %v2072 = vpop.f32.mrb[0].mxu0
    %v2073 = vadd.f32 0.0, %v2072
    %v2074 = vpop.f32.mrb[0].mxu0
    %2075 = vmatprep.mubr.bf16.mxu0 0
    %2076 = vmatmul.mubr.bf16.gmra.mrb[0].mxu0 %v1796
    %v2077 = vpop.f32.mrb[0].mxu0
    %v2078 = vadd.f32 0.0, %v2077
    %v2079 = vpop.f32.mrb[0].mxu0
    %v2080 = vpop.f32.mrb[0].mxu0
    %v2081 = vadd.f32 0.0, %v2080
    %v2082 = vpop.f32.mrb[0].mxu0
    %2083 = vmatprep.mubr.bf16.mxu0 0
    %2084 = vmatmul.mubr.bf16.gmra.mrb[0].mxu0 %v1799
    %v2085 = vpop.f32.mrb[0].mxu0
    %v2086 = vadd.f32 0.0, %v2085
    %v2087 = vpop.f32.mrb[0].mxu0
    %v2088 = vpop.f32.mrb[0].mxu0
    %v2089 = vadd.f32 0.0, %v2088
    %v2090 = vpop.f32.mrb[0].mxu0
    %2091 = vdwg.mxu0
    %v2092 = vadd.f32 %v1678, %v1845
    %v2093 = vadd.f32 %v1679, %v1847
    %v2094 = vadd.f32 %v1680, %v1998
    %v2095 = vadd.f32 %v1681, %v1849
    %v2096 = vadd.f32 %v1682, %v1851
    %v2097 = vadd.f32 %v1683, %v2001
    %v2098 = vadd.f32 %v1684, %v1855
    %v2099 = vadd.f32 %v1685, %v1857
    %v2100 = vadd.f32 %v1686, %v2006
    %v2101 = vadd.f32 %v1687, %v1859
    %v2102 = vadd.f32 %v1688, %v1861
    %v2103 = vadd.f32 %v1689, %v2009
    %v2104 = vadd.f32 %v1690, %v1865
    %v2105 = vadd.f32 %v1691, %v1867
    %v2106 = vadd.f32 %v1692, %v2014
    %v2107 = vadd.f32 %v1693, %v1869
    %v2108 = vadd.f32 %v1694, %v1871
    %v2109 = vadd.f32 %v1695, %v2017
    %v2110 = vadd.f32 %v1696, %v1875
    %v2111 = vadd.f32 %v1697, %v1877
    %v2112 = vadd.f32 %v1698, %v2022
    %v2113 = vadd.f32 %v1699, %v1879
    %v2114 = vadd.f32 %v1700, %v1881
    %v2115 = vadd.f32 %v1701, %v2025
    %v2116 = vadd.f32 %v1702, %v1885
    %v2117 = vadd.f32 %v1703, %v1887
    %v2118 = vadd.f32 %v1704, %v2030
    %v2119 = vadd.f32 %v1705, %v1889
    %v2120 = vadd.f32 %v1706, %v1891
    %v2121 = vadd.f32 %v1707, %v2033
    %v2122 = vadd.f32 %v1708, %v1895
    %v2123 = vadd.f32 %v1709, %v1897
    %v2124 = vadd.f32 %v1710, %v2038
    %v2125 = vadd.f32 %v1711, %v1899
    %v2126 = vadd.f32 %v1712, %v1901
    %v2127 = vadd.f32 %v1713, %v2041
    %v2128 = vadd.f32 %v1714, %v1905
    %v2129 = vadd.f32 %v1715, %v1907
    %v2130 = vadd.f32 %v1716, %v2046
    %v2131 = vadd.f32 %v1717, %v1909
    %v2132 = vadd.f32 %v1718, %v1911
    %v2133 = vadd.f32 %v1719, %v2049
    %v2134 = vadd.f32 %v1720, %v1915
    %v2135 = vadd.f32 %v1721, %v1917
    %v2136 = vadd.f32 %v1722, %v2054
    %v2137 = vadd.f32 %v1723, %v1919
    %v2138 = vadd.f32 %v1724, %v1921
    %v2139 = vadd.f32 %v1725, %v2057
    %v2140 = vadd.f32 %v1726, %v1925
    %v2141 = vadd.f32 %v1727, %v1927
    %v2142 = vadd.f32 %v1728, %v2062
    %v2143 = vadd.f32 %v1729, %v1929
    %v2144 = vadd.f32 %v1730, %v1931
    %v2145 = vadd.f32 %v1731, %v2065
    %v2146 = vadd.f32 %v1732, %v1935
    %v2147 = vadd.f32 %v1733, %v1937
    %v2148 = vadd.f32 %v1734, %v2070
    %v2149 = vadd.f32 %v1735, %v1939
    %v2150 = vadd.f32 %v1736, %v1941
    %v2151 = vadd.f32 %v1737, %v2073
    %v2152 = vadd.f32 %v1738, %v1945
    %v2153 = vadd.f32 %v1739, %v1947
    %v2154 = vadd.f32 %v1740, %v2078
    %v2155 = vadd.f32 %v1741, %v1949
    %v2156 = vadd.f32 %v1742, %v1951
    %v2157 = vadd.f32 %v1743, %v2081
    %v2158 = vadd.f32 %v1744, %v1955
    %v2159 = vadd.f32 %v1745, %v1957
    %v2160 = vadd.f32 %v1746, %v2086
    %v2161 = vadd.f32 %v1747, %v1959
    %v2162 = vadd.f32 %v1748, %v1961
    %v2163 = vadd.f32 %v1749, %v2089
    %v2164 = vmax.f32 %v2092, %v2128
    %v2165 = vmax.f32 %v2093, %v2129
    %v2166 = vmax.f32 %v2094, %v2130
    %v2167 = vmax.f32 %v2095, %v2131
    %v2168 = vmax.f32 %v2096, %v2132
    %v2169 = vmax.f32 %v2097, %v2133
    %v2170 = vmax.f32 %v2098, %v2134
    %v2171 = vmax.f32 %v2099, %v2135
    %v2172 = vmax.f32 %v2100, %v2136
    %v2173 = vmax.f32 %v2101, %v2137
    %v2174 = vmax.f32 %v2102, %v2138
    %v2175 = vmax.f32 %v2103, %v2139
    %v2176 = vmax.f32 %v2104, %v2140
    %v2177 = vmax.f32 %v2105, %v2141
    %v2178 = vmax.f32 %v2106, %v2142
    %v2179 = vmax.f32 %v2107, %v2143
    %v2180 = vmax.f32 %v2108, %v2144
    %v2181 = vmax.f32 %v2109, %v2145
    %v2182 = vmax.f32 %v2110, %v2146
    %v2183 = vmax.f32 %v2111, %v2147
    %v2184 = vmax.f32 %v2112, %v2148
    %v2185 = vmax.f32 %v2113, %v2149
    %v2186 = vmax.f32 %v2114, %v2150
    %v2187 = vmax.f32 %v2115, %v2151
    %v2188 = vmax.f32 %v2116, %v2152
    %v2189 = vmax.f32 %v2117, %v2153
    %v2190 = vmax.f32 %v2118, %v2154
    %v2191 = vmax.f32 %v2119, %v2155
    %v2192 = vmax.f32 %v2120, %v2156
    %v2193 = vmax.f32 %v2121, %v2157
    %v2194 = vmax.f32 %v2122, %v2158
    %v2195 = vmax.f32 %v2123, %v2159
    %v2196 = vmax.f32 %v2124, %v2160
    %v2197 = vmax.f32 %v2125, %v2161
    %v2198 = vmax.f32 %v2126, %v2162
    %v2199 = vmax.f32 %v2127, %v2163
    %2224 = vrot.lane.b32.xlu0 %v2165, 64
    %v2225 = vpop.permute.xlu0 %2224
    %2226 = vrot.lane.b32.xlu0 %v2166, 64
    %v2227 = vpop.permute.xlu0 %2226
    %2228 = vrot.lane.b32.xlu0 %v2168, 64
    %v2229 = vpop.permute.xlu0 %2228
    %2230 = vrot.lane.b32.xlu0 %v2169, 64
    %v2231 = vpop.permute.xlu0 %2230
    %2232 = vrot.lane.b32.xlu0 %v2171, 64
    %v2233 = vpop.permute.xlu0 %2232
    %2234 = vrot.lane.b32.xlu0 %v2172, 64
    %v2235 = vpop.permute.xlu0 %2234
    %2236 = vrot.lane.b32.xlu0 %v2174, 64
    %v2237 = vpop.permute.xlu0 %2236
    %2238 = vrot.lane.b32.xlu0 %v2175, 64
    %v2239 = vpop.permute.xlu0 %2238
    %2240 = vrot.lane.b32.xlu0 %v2177, 64
    %v2241 = vpop.permute.xlu0 %2240
    %2242 = vrot.lane.b32.xlu0 %v2178, 64
    %v2243 = vpop.permute.xlu0 %2242
    %2244 = vrot.lane.b32.xlu0 %v2180, 64
    %v2245 = vpop.permute.xlu0 %2244
    %2246 = vrot.lane.b32.xlu0 %v2181, 64
    %v2247 = vpop.permute.xlu0 %2246
    %2248 = vrot.lane.b32.xlu0 %v2183, 64
    %v2249 = vpop.permute.xlu0 %2248
    %2250 = vrot.lane.b32.xlu0 %v2184, 64
    %v2251 = vpop.permute.xlu0 %2250
    %2252 = vrot.lane.b32.xlu0 %v2186, 64
    %v2253 = vpop.permute.xlu0 %2252
    %2254 = vrot.lane.b32.xlu0 %v2187, 64
    %v2255 = vpop.permute.xlu0 %2254
    %2256 = vrot.lane.b32.xlu0 %v2189, 64
    %v2257 = vpop.permute.xlu0 %2256
    %2258 = vrot.lane.b32.xlu0 %v2190, 64
    %v2259 = vpop.permute.xlu0 %2258
    %2260 = vrot.lane.b32.xlu0 %v2192, 64
    %v2261 = vpop.permute.xlu0 %2260
    %2262 = vrot.lane.b32.xlu0 %v2193, 64
    %v2263 = vpop.permute.xlu0 %2262
    %2264 = vrot.lane.b32.xlu0 %v2195, 64
    %v2265 = vpop.permute.xlu0 %2264
    %2266 = vrot.lane.b32.xlu0 %v2196, 64
    %v2267 = vpop.permute.xlu0 %2266
    %2268 = vrot.lane.b32.xlu0 %v2198, 64
    %v2269 = vpop.permute.xlu0 %2268
    %2270 = vrot.lane.b32.xlu0 %v2199, 64
    %v2271 = vpop.permute.xlu0 %2270
    %vm2272 = vcmask 523264
    %v2273 = vsel %vm2272, %v2225, %v2227
    %v2274 = vsel %vm2272, %v2229, %v2231
    %v2275 = vsel %vm2272, %v2233, %v2235
    %v2276 = vsel %vm2272, %v2237, %v2239
    %v2277 = vsel %vm2272, %v2241, %v2243
    %v2278 = vsel %vm2272, %v2245, %v2247
    %v2279 = vsel %vm2272, %v2249, %v2251
    %v2280 = vsel %vm2272, %v2253, %v2255
    %v2281 = vsel %vm2272, %v2257, %v2259
    %v2282 = vsel %vm2272, %v2261, %v2263
    %v2283 = vsel %vm2272, %v2265, %v2267
    %v2284 = vsel %vm2272, %v2269, %v2271
    %v2309 = vmax.f32 %v2164, %v2273
    %v2310 = vmax.f32 %v2165, %v2227
    %v2311 = vmax.f32 %v2167, %v2274
    %v2312 = vmax.f32 %v2168, %v2231
    %v2313 = vmax.f32 %v2170, %v2275
    %v2314 = vmax.f32 %v2171, %v2235
    %v2315 = vmax.f32 %v2173, %v2276
    %v2316 = vmax.f32 %v2174, %v2239
    %v2317 = vmax.f32 %v2176, %v2277
    %v2318 = vmax.f32 %v2177, %v2243
    %v2319 = vmax.f32 %v2179, %v2278
    %v2320 = vmax.f32 %v2180, %v2247
    %v2321 = vmax.f32 %v2182, %v2279
    %v2322 = vmax.f32 %v2183, %v2251
    %v2323 = vmax.f32 %v2185, %v2280
    %v2324 = vmax.f32 %v2186, %v2255
    %v2325 = vmax.f32 %v2188, %v2281
    %v2326 = vmax.f32 %v2189, %v2259
    %v2327 = vmax.f32 %v2191, %v2282
    %v2328 = vmax.f32 %v2192, %v2263
    %v2329 = vmax.f32 %v2194, %v2283
    %v2330 = vmax.f32 %v2195, %v2267
    %v2331 = vmax.f32 %v2197, %v2284
    %v2332 = vmax.f32 %v2198, %v2271
    %v2333 = vld [vmem:[#allocation4] sm:$0x3]
    %v2335 = vlaneseq
    %v2336 = vshrl.u32 %v2335, 7
    %v2337 = vsub.s32 0, %v2336
    %v2338 = vrot.slane %v2333, %v2337
    %v2339 = vlaneseq
    %v2340 = vshrl.u32 %v2339, 7
    %v2341 = vsub.s32 1, %v2340
    %v2342 = vrot.slane %v2333, %v2341
    %v2345 = vadd.f32 %v2309, %v2338
    %v2346 = vadd.f32 %v2310, %v2342
    %v2347 = vadd.f32 %v2311, %v2338
    %v2348 = vadd.f32 %v2312, %v2342
    %v2349 = vadd.f32 %v2313, %v2338
    %v2350 = vadd.f32 %v2314, %v2342
    %v2351 = vadd.f32 %v2315, %v2338
    %v2352 = vadd.f32 %v2316, %v2342
    %v2353 = vadd.f32 %v2317, %v2338
    %v2354 = vadd.f32 %v2318, %v2342
    %v2355 = vadd.f32 %v2319, %v2338
    %v2356 = vadd.f32 %v2320, %v2342
    %v2357 = vadd.f32 %v2321, %v2338
    %v2358 = vadd.f32 %v2322, %v2342
    %v2359 = vadd.f32 %v2323, %v2338
    %v2360 = vadd.f32 %v2324, %v2342
    %v2361 = vadd.f32 %v2325, %v2338
    %v2362 = vadd.f32 %v2326, %v2342
    %v2363 = vadd.f32 %v2327, %v2338
    %v2364 = vadd.f32 %v2328, %v2342
    %v2365 = vadd.f32 %v2329, %v2338
    %v2366 = vadd.f32 %v2330, %v2342
    %v2367 = vadd.f32 %v2331, %v2338
    %v2368 = vadd.f32 %v2332, %v2342
    %v2369 = vmax.f32 %v2345, 0.0
    %v2370 = vmax.f32 %v2346, 0.0
    %v2371 = vmax.f32 %v2347, 0.0
    %v2372 = vmax.f32 %v2348, 0.0
    %v2373 = vmax.f32 %v2349, 0.0
    %v2374 = vmax.f32 %v2350, 0.0
    %v2375 = vmax.f32 %v2351, 0.0
    %v2376 = vmax.f32 %v2352, 0.0
    %v2377 = vmax.f32 %v2353, 0.0
    %v2378 = vmax.f32 %v2354, 0.0
    %v2379 = vmax.f32 %v2355, 0.0
    %v2380 = vmax.f32 %v2356, 0.0
    %v2381 = vmax.f32 %v2357, 0.0
    %v2382 = vmax.f32 %v2358, 0.0
    %v2383 = vmax.f32 %v2359, 0.0
    %v2384 = vmax.f32 %v2360, 0.0
    %v2385 = vmax.f32 %v2361, 0.0
    %v2386 = vmax.f32 %v2362, 0.0
    %v2387 = vmax.f32 %v2363, 0.0
    %v2388 = vmax.f32 %v2364, 0.0
    %v2389 = vmax.f32 %v2365, 0.0
    %v2390 = vmax.f32 %v2366, 0.0
    %v2391 = vmax.f32 %v2367, 0.0
    %v2392 = vmax.f32 %v2368, 0.0
    %v2393 = vpack.c.bf16 %v2371, %v2369
    %v2394 = vpack.c.bf16 %v2372, %v2370
    %v2395 = vpack.c.bf16 %v2375, %v2373
    %v2396 = vpack.c.bf16 %v2376, %v2374
    %v2397 = vpack.c.bf16 %v2379, %v2377
    %v2398 = vpack.c.bf16 %v2380, %v2378
    %v2399 = vpack.c.bf16 %v2383, %v2381
    %v2400 = vpack.c.bf16 %v2384, %v2382
    %v2401 = vpack.c.bf16 %v2387, %v2385
    %v2402 = vpack.c.bf16 %v2388, %v2386
    %v2403 = vpack.c.bf16 %v2391, %v2389
    %v2404 = vpack.c.bf16 %v2392, %v2390
    %v2405 = vld [vmem:[#allocation6] sm:$0xff]
    %v2406 = vld [vmem:[#allocation6 + $0x8] sm:$0xff]
    %v2407 = vld [vmem:[#allocation6 + $0x10] sm:$0xff]
    %v2408 = vld [vmem:[#allocation6 + $0x18] sm:$0xff]
    %v2409 = vld [vmem:[#allocation6 + $0x20] sm:$0xff]
    %v2410 = vld [vmem:[#allocation6 + $0x28] sm:$0xff]
    %v2411 = vld [vmem:[#allocation6 + $0x30] sm:$0xff]
    %v2412 = vld [vmem:[#allocation6 + $0x38] sm:$0xff]
    %v2413 = vld [vmem:[#allocation6 + $0x40] sm:$0xff]
    %v2414 = vld [vmem:[#allocation6 + $0x48] sm:$0xff]
    %v2415 = vld [vmem:[#allocation6 + $0x50] sm:$0xff]
    %v2416 = vld [vmem:[#allocation6 + $0x58] sm:$0xff]
    %v2417 = vld [vmem:[#allocation6 + $0x60] sm:$0xff]
    %v2418 = vld [vmem:[#allocation6 + $0x68] sm:$0xff]
    %v2419 = vld [vmem:[#allocation6 + $0x70] sm:$0xff]
    %v2420 = vld [vmem:[#allocation6 + $0x78] sm:$0xff]
    %v2421 = vld [vmem:[#allocation6 + $0x80] sm:$0xff]
    %v2422 = vld [vmem:[#allocation6 + $0x88] sm:$0xff]
    %v2423 = vld [vmem:[#allocation6 + $0x90] sm:$0xff]
    %v2424 = vld [vmem:[#allocation6 + $0x98] sm:$0xff]
    %v2425 = vld [vmem:[#allocation6 + $0xa0] sm:$0xff]
    %v2426 = vld [vmem:[#allocation6 + $0xa8] sm:$0xff]
    %v2427 = vld [vmem:[#allocation6 + $0xb0] sm:$0xff]
    %v2428 = vld [vmem:[#allocation6 + $0xb8] sm:$0xff]
    %vm2435 = vcmask 1043456
    %v2436 = vrot.slane %v2393, 4
    %v2437 = vrot.slane %v2395, 4
    %v2438 = vsel %vm2435, %v2436, %v2437
    %v2439 = vrot.slane %v2394, 4
    %v2440 = vrot.slane %v2396, 4
    %v2441 = vsel %vm2435, %v2439, %v2440
    %v2442 = vrot.slane %v2397, 4
    %v2443 = vsel %vm2435, %v2437, %v2442
    %v2444 = vrot.slane %v2398, 4
    %v2445 = vsel %vm2435, %v2440, %v2444
    %v2448 = vld [vmem:[#allocation6 + $0xc0] sm:$0xff]
    %v2449 = vld [vmem:[#allocation6 + $0xc8] sm:$0xff]
    %v2450 = vld [vmem:[#allocation6 + $0xd0] sm:$0xff]
    %v2451 = vld [vmem:[#allocation6 + $0xd8] sm:$0xff]
    %v2452 = vld [vmem:[#allocation6 + $0xe0] sm:$0xff]
    %v2453 = vld [vmem:[#allocation6 + $0xe8] sm:$0xff]
    %v2454 = vld [vmem:[#allocation6 + $0xf0] sm:$0xff]
    %v2455 = vld [vmem:[#allocation6 + $0xf8] sm:$0xff]
    %v2456 = vld [vmem:[#allocation6 + $0x100] sm:$0xff]
    %v2457 = vld [vmem:[#allocation6 + $0x108] sm:$0xff]
    %v2458 = vld [vmem:[#allocation6 + $0x110] sm:$0xff]
    %v2459 = vld [vmem:[#allocation6 + $0x118] sm:$0xff]
    %v2460 = vld [vmem:[#allocation6 + $0x120] sm:$0xff]
    %v2461 = vld [vmem:[#allocation6 + $0x128] sm:$0xff]
    %v2462 = vld [vmem:[#allocation6 + $0x130] sm:$0xff]
    %v2463 = vld [vmem:[#allocation6 + $0x138] sm:$0xff]
    %v2464 = vld [vmem:[#allocation6 + $0x140] sm:$0xff]
    %v2465 = vld [vmem:[#allocation6 + $0x148] sm:$0xff]
    %v2466 = vld [vmem:[#allocation6 + $0x150] sm:$0xff]
    %v2467 = vld [vmem:[#allocation6 + $0x158] sm:$0xff]
    %v2468 = vld [vmem:[#allocation6 + $0x160] sm:$0xff]
    %v2469 = vld [vmem:[#allocation6 + $0x168] sm:$0xff]
    %v2470 = vld [vmem:[#allocation6 + $0x170] sm:$0xff]
    %v2471 = vld [vmem:[#allocation6 + $0x178] sm:$0xff]
    %v2496 = vunpack.c.l.b16 %v2448
    %v2497 = vunpack.c.h.b16 %v2448
    %v2498 = vunpack.c.l.b16 %v2449
    %v2499 = vunpack.c.h.b16 %v2449
    %v2500 = vunpack.c.l.b16 %v2450
    %v2501 = vunpack.c.h.b16 %v2450
    %v2502 = vunpack.c.l.b16 %v2451
    %v2503 = vunpack.c.h.b16 %v2451
    %v2504 = vunpack.c.l.b16 %v2452
    %v2505 = vunpack.c.h.b16 %v2452
    %v2506 = vunpack.c.l.b16 %v2453
    %v2507 = vunpack.c.h.b16 %v2453
    %v2508 = vunpack.c.l.b16 %v2454
    %v2509 = vunpack.c.h.b16 %v2454
    %v2510 = vunpack.c.l.b16 %v2455
    %v2511 = vunpack.c.h.b16 %v2455
    %v2512 = vunpack.c.l.b16 %v2456
    %v2513 = vunpack.c.h.b16 %v2456
    %v2514 = vunpack.c.l.b16 %v2457
    %v2515 = vunpack.c.h.b16 %v2457
    %v2516 = vunpack.c.l.b16 %v2458
    %v2517 = vunpack.c.h.b16 %v2458
    %v2518 = vunpack.c.l.b16 %v2459
    %v2519 = vunpack.c.h.b16 %v2459
    %v2520 = vunpack.c.l.b16 %v2460
    %v2521 = vunpack.c.h.b16 %v2460
    %v2522 = vunpack.c.l.b16 %v2461
    %v2523 = vunpack.c.h.b16 %v2461
    %v2524 = vunpack.c.l.b16 %v2462
    %v2525 = vunpack.c.h.b16 %v2462
    %v2526 = vunpack.c.l.b16 %v2463
    %v2527 = vunpack.c.h.b16 %v2463
    %v2528 = vunpack.c.l.b16 %v2464
    %v2529 = vunpack.c.h.b16 %v2464
    %v2530 = vunpack.c.l.b16 %v2465
    %v2531 = vunpack.c.h.b16 %v2465
    %v2532 = vunpack.c.l.b16 %v2466
    %v2533 = vunpack.c.h.b16 %v2466
    %v2534 = vunpack.c.l.b16 %v2467
    %v2535 = vunpack.c.h.b16 %v2467
    %v2536 = vunpack.c.l.b16 %v2468
    %v2537 = vunpack.c.h.b16 %v2468
    %v2538 = vunpack.c.l.b16 %v2469
    %v2539 = vunpack.c.h.b16 %v2469
    %v2540 = vunpack.c.l.b16 %v2470
    %v2541 = vunpack.c.h.b16 %v2470
    %v2542 = vunpack.c.l.b16 %v2471
    %v2543 = vunpack.c.h.b16 %v2471
    %v2544 = vpack.c.b16 %v2498, %v2496
    %v2545 = vpack.c.b16 %v2499, %v2497
    %v2546 = vpack.c.b16 %v2502, %v2500
    %v2547 = vpack.c.b16 %v2503, %v2501
    %v2548 = vpack.c.b16 %v2506, %v2504
    %v2549 = vpack.c.b16 %v2507, %v2505
    %v2550 = vpack.c.b16 %v2510, %v2508
    %v2551 = vpack.c.b16 %v2511, %v2509
    %v2552 = vpack.c.b16 %v2514, %v2512
    %v2553 = vpack.c.b16 %v2515, %v2513
    %v2554 = vpack.c.b16 %v2518, %v2516
    %v2555 = vpack.c.b16 %v2519, %v2517
    %v2556 = vpack.c.b16 %v2522, %v2520
    %v2557 = vpack.c.b16 %v2523, %v2521
    %v2558 = vpack.c.b16 %v2526, %v2524
    %v2559 = vpack.c.b16 %v2527, %v2525
    %v2560 = vpack.c.b16 %v2530, %v2528
    %v2561 = vpack.c.b16 %v2531, %v2529
    %v2562 = vpack.c.b16 %v2534, %v2532
    %v2563 = vpack.c.b16 %v2535, %v2533
    %v2564 = vpack.c.b16 %v2538, %v2536
    %v2565 = vpack.c.b16 %v2539, %v2537
    %v2566 = vpack.c.b16 %v2542, %v2540
    %v2567 = vpack.c.b16 %v2543, %v2541
    %v2593 = vsel %vm2272, %v2400, 0
    %v2596 = vsel %vm2272, %v2402, 0
    %v2599 = vsel %vm2272, %v2441, 0
    %v2602 = vsel %vm2272, %v2445, 0
    %2604 = vmatprep.subr.bf16.mxu0 %v2545
    %2605 = vmatpush1.bf16.msra.mxu0 %v2544
    %2606 = vmatprep.subr.bf16.mxu0 %v2547
    %2607 = vmatpush1.bf16.msra.mxu0 %v2546
    %2608 = vmatprep.subr.bf16.mxu0 %v2549
    %2609 = vmatpush1.bf16.msra.mxu0 %v2548
    %2610 = vmatprep.subr.bf16.mxu0 %v2551
    %2611 = vmatpush1.bf16.msra.mxu0 %v2550
    %2612 = vmatprep.subr.bf16.mxu0 %v2553
    %2613 = vmatpush1.bf16.msra.mxu0 %v2552
    %2614 = vmatprep.subr.bf16.mxu0 %v2555
    %2615 = vmatpush1.bf16.msra.mxu0 %v2554
    %2616 = vmatprep.subr.bf16.mxu0 %v2557
    %2617 = vmatpush1.bf16.msra.mxu0 %v2556
    %2618 = vmatprep.subr.bf16.mxu0 %v2559
    %2619 = vmatpush1.bf16.msra.mxu0 %v2558
    %2620 = vmatprep.subr.bf16.mxu0 %v2561
    %2621 = vmatpush1.bf16.msra.mxu0 %v2560
    %2622 = vmatprep.subr.bf16.mxu0 %v2563
    %2623 = vmatpush1.bf16.msra.mxu0 %v2562
    %2624 = vmatprep.subr.bf16.mxu0 %v2565
    %2625 = vmatpush1.bf16.msra.mxu0 %v2564
    %2626 = vmatprep.subr.bf16.mxu0 %v2567
    %2627 = vmatpush1.bf16.msra.mxu0 %v2566
    %2628 = vmatprep.subr.bf16.mxu0 0
    %2629 = vmatpush1.bf16.msra.mxu0 0
    %2630 = vmatprep.subr.bf16.mxu0 0
    %2631 = vmatpush1.bf16.msra.mxu0 0
    %2632 = vmatprep.subr.bf16.mxu0 0
    %2633 = vmatpush1.bf16.msra.mxu0 0
    %2634 = vmatprep.subr.bf16.mxu0 0
    %2635 = vmatpush1.bf16.msra.mxu0 0
    %2636 = vmatprep.mubr.bf16.mxu0 %v2593
    %2637 = vmatmul.mubr.bf16.gmra.mrb[0].mxu0 %v2399
    %v2638 = vpop.f32.mrb[0].mxu0
    %v2639 = vadd.f32 0.0, %v2638
    %v2640 = vpop.f32.mrb[0].mxu0
    %v2641 = vadd.f32 0.0, %v2640
    %v2642 = vpop.f32.mrb[0].mxu0
    %v2643 = vadd.f32 0.0, %v2642
    %v2644 = vpop.f32.mrb[0].mxu0
    %v2645 = vadd.f32 0.0, %v2644
    %2646 = vmatprep.mubr.bf16.mxu0 %v2596
    %2647 = vmatmul.mubr.bf16.gmra.mrb[0].mxu0 %v2401
    %v2648 = vpop.f32.mrb[0].mxu0
    %v2649 = vadd.f32 0.0, %v2648
    %v2650 = vpop.f32.mrb[0].mxu0
    %v2651 = vadd.f32 0.0, %v2650
    %v2652 = vpop.f32.mrb[0].mxu0
    %v2653 = vadd.f32 0.0, %v2652
    %v2654 = vpop.f32.mrb[0].mxu0
    %v2655 = vadd.f32 0.0, %v2654
    %2656 = vmatprep.mubr.bf16.mxu0 %v2599
    %2657 = vmatmul.mubr.bf16.gmra.mrb[0].mxu0 %v2438
    %v2658 = vpop.f32.mrb[0].mxu0
    %v2659 = vadd.f32 0.0, %v2658
    %v2660 = vpop.f32.mrb[0].mxu0
    %v2661 = vadd.f32 0.0, %v2660
    %v2662 = vpop.f32.mrb[0].mxu0
    %v2663 = vadd.f32 0.0, %v2662
    %v2664 = vpop.f32.mrb[0].mxu0
    %v2665 = vadd.f32 0.0, %v2664
    %2666 = vmatprep.mubr.bf16.mxu0 %v2602
    %2667 = vmatmul.mubr.bf16.gmra.mrb[0].mxu0 %v2443
    %v2668 = vpop.f32.mrb[0].mxu0
    %v2669 = vadd.f32 0.0, %v2668
    %v2670 = vpop.f32.mrb[0].mxu0
    %v2671 = vadd.f32 0.0, %v2670
    %v2672 = vpop.f32.mrb[0].mxu0
    %v2673 = vadd.f32 0.0, %v2672
    %v2674 = vpop.f32.mrb[0].mxu0
    %v2675 = vadd.f32 0.0, %v2674
    %2676 = vdwg.mxu0
    %v2701 = vunpack.c.l.b16 %v2405
    %v2702 = vunpack.c.h.b16 %v2405
    %v2703 = vunpack.c.l.b16 %v2406
    %v2704 = vunpack.c.h.b16 %v2406
    %v2705 = vunpack.c.l.b16 %v2407
    %v2706 = vunpack.c.h.b16 %v2407
    %v2707 = vunpack.c.l.b16 %v2408
    %v2708 = vunpack.c.h.b16 %v2408
    %v2709 = vunpack.c.l.b16 %v2409
    %v2710 = vunpack.c.h.b16 %v2409
    %v2711 = vunpack.c.l.b16 %v2410
    %v2712 = vunpack.c.h.b16 %v2410
    %v2713 = vunpack.c.l.b16 %v2411
    %v2714 = vunpack.c.h.b16 %v2411
    %v2715 = vunpack.c.l.b16 %v2412
    %v2716 = vunpack.c.h.b16 %v2412
    %v2717 = vunpack.c.l.b16 %v2413
    %v2718 = vunpack.c.h.b16 %v2413
    %v2719 = vunpack.c.l.b16 %v2414
    %v2720 = vunpack.c.h.b16 %v2414
    %v2721 = vunpack.c.l.b16 %v2415
    %v2722 = vunpack.c.h.b16 %v2415
    %v2723 = vunpack.c.l.b16 %v2416
    %v2724 = vunpack.c.h.b16 %v2416
    %v2725 = vunpack.c.l.b16 %v2417
    %v2726 = vunpack.c.h.b16 %v2417
    %v2727 = vunpack.c.l.b16 %v2418
    %v2728 = vunpack.c.h.b16 %v2418
    %v2729 = vunpack.c.l.b16 %v2419
    %v2730 = vunpack.c.h.b16 %v2419
    %v2731 = vunpack.c.l.b16 %v2420
    %v2732 = vunpack.c.h.b16 %v2420
    %v2733 = vunpack.c.l.b16 %v2421
    %v2734 = vunpack.c.h.b16 %v2421
    %v2735 = vunpack.c.l.b16 %v2422
    %v2736 = vunpack.c.h.b16 %v2422
    %v2737 = vunpack.c.l.b16 %v2423
    %v2738 = vunpack.c.h.b16 %v2423
    %v2739 = vunpack.c.l.b16 %v2424
    %v2740 = vunpack.c.h.b16 %v2424
    %v2741 = vunpack.c.l.b16 %v2425
    %v2742 = vunpack.c.h.b16 %v2425
    %v2743 = vunpack.c.l.b16 %v2426
    %v2744 = vunpack.c.h.b16 %v2426
    %v2745 = vunpack.c.l.b16 %v2427
    %v2746 = vunpack.c.h.b16 %v2427
    %v2747 = vunpack.c.l.b16 %v2428
    %v2748 = vunpack.c.h.b16 %v2428
    %v2749 = vpack.c.b16 %v2703, %v2701
    %v2750 = vpack.c.b16 %v2704, %v2702
    %v2751 = vpack.c.b16 %v2707, %v2705
    %v2752 = vpack.c.b16 %v2708, %v2706
    %v2753 = vpack.c.b16 %v2711, %v2709
    %v2754 = vpack.c.b16 %v2712, %v2710
    %v2755 = vpack.c.b16 %v2715, %v2713
    %v2756 = vpack.c.b16 %v2716, %v2714
    %v2757 = vpack.c.b16 %v2719, %v2717
    %v2758 = vpack.c.b16 %v2720, %v2718
    %v2759 = vpack.c.b16 %v2723, %v2721
    %v2760 = vpack.c.b16 %v2724, %v2722
    %v2761 = vpack.c.b16 %v2727, %v2725
    %v2762 = vpack.c.b16 %v2728, %v2726
    %v2763 = vpack.c.b16 %v2731, %v2729
    %v2764 = vpack.c.b16 %v2732, %v2730
    %v2765 = vpack.c.b16 %v2735, %v2733
    %v2766 = vpack.c.b16 %v2736, %v2734
    %v2767 = vpack.c.b16 %v2739, %v2737
    %v2768 = vpack.c.b16 %v2740, %v2738
    %v2769 = vpack.c.b16 %v2743, %v2741
    %v2770 = vpack.c.b16 %v2744, %v2742
    %v2771 = vpack.c.b16 %v2747, %v2745
    %v2772 = vpack.c.b16 %v2748, %v2746
    %v2798 = vsel %vm2272, %v2394, 0
    %v2801 = vsel %vm2272, %v2396, 0
    %2803 = vmatprep.subr.bf16.mxu0 %v2750
    %2804 = vmatpush1.bf16.msra.mxu0 %v2749
    %2805 = vmatprep.subr.bf16.mxu0 %v2752
    %2806 = vmatpush1.bf16.msra.mxu0 %v2751
    %2807 = vmatprep.subr.bf16.mxu0 %v2754
    %2808 = vmatpush1.bf16.msra.mxu0 %v2753
    %2809 = vmatprep.subr.bf16.mxu0 %v2756
    %2810 = vmatpush1.bf16.msra.mxu0 %v2755
    %2811 = vmatprep.subr.bf16.mxu0 %v2758
    %2812 = vmatpush1.bf16.msra.mxu0 %v2757
    %2813 = vmatprep.subr.bf16.mxu0 %v2760
    %2814 = vmatpush1.bf16.msra.mxu0 %v2759
    %2815 = vmatprep.subr.bf16.mxu0 %v2762
    %2816 = vmatpush1.bf16.msra.mxu0 %v2761
    %2817 = vmatprep.subr.bf16.mxu0 %v2764
    %2818 = vmatpush1.bf16.msra.mxu0 %v2763
    %2819 = vmatprep.subr.bf16.mxu0 %v2766
    %2820 = vmatpush1.bf16.msra.mxu0 %v2765
    %2821 = vmatprep.subr.bf16.mxu0 %v2768
    %2822 = vmatpush1.bf16.msra.mxu0 %v2767
    %2823 = vmatprep.subr.bf16.mxu0 %v2770
    %2824 = vmatpush1.bf16.msra.mxu0 %v2769
    %2825 = vmatprep.subr.bf16.mxu0 %v2772
    %2826 = vmatpush1.bf16.msra.mxu0 %v2771
    %2827 = vmatprep.subr.bf16.mxu0 0
    %2828 = vmatpush1.bf16.msra.mxu0 0
    %2829 = vmatprep.subr.bf16.mxu0 0
    %2830 = vmatpush1.bf16.msra.mxu0 0
    %2831 = vmatprep.subr.bf16.mxu0 0
    %2832 = vmatpush1.bf16.msra.mxu0 0
    %2833 = vmatprep.subr.bf16.mxu0 0
    %2834 = vmatpush1.bf16.msra.mxu0 0
    %2835 = vmatprep.mubr.bf16.mxu0 %v2798
    %2836 = vmatmul.mubr.bf16.gmra.mrb[0].mxu0 %v2393
    %v2837 = vpop.f32.mrb[0].mxu0
    %v2838 = vadd.f32 %v2639, %v2837
    %v2839 = vpop.f32.mrb[0].mxu0
    %v2840 = vadd.f32 %v2641, %v2839
    %v2841 = vpop.f32.mrb[0].mxu0
    %v2842 = vadd.f32 %v2643, %v2841
    %v2843 = vpop.f32.mrb[0].mxu0
    %v2844 = vadd.f32 %v2645, %v2843
    %2845 = vmatprep.mubr.bf16.mxu0 %v2801
    %2846 = vmatmul.mubr.bf16.gmra.mrb[0].mxu0 %v2395
    %v2847 = vpop.f32.mrb[0].mxu0
    %v2848 = vadd.f32 %v2649, %v2847
    %v2849 = vpop.f32.mrb[0].mxu0
    %v2850 = vadd.f32 %v2651, %v2849
    %v2851 = vpop.f32.mrb[0].mxu0
    %v2852 = vadd.f32 %v2653, %v2851
    %v2853 = vpop.f32.mrb[0].mxu0
    %v2854 = vadd.f32 %v2655, %v2853
    %2855 = vmatprep.mubr.bf16.mxu0 %v2593
    %2856 = vmatmul.mubr.bf16.gmra.mrb[0].mxu0 %v2399
    %v2857 = vpop.f32.mrb[0].mxu0
    %v2858 = vadd.f32 %v2659, %v2857
    %v2859 = vpop.f32.mrb[0].mxu0
    %v2860 = vadd.f32 %v2661, %v2859
    %v2861 = vpop.f32.mrb[0].mxu0
    %v2862 = vadd.f32 %v2663, %v2861
    %v2863 = vpop.f32.mrb[0].mxu0
    %v2864 = vadd.f32 %v2665, %v2863
    %2865 = vmatprep.mubr.bf16.mxu0 %v2596
    %2866 = vmatmul.mubr.bf16.gmra.mrb[0].mxu0 %v2401
    %v2867 = vpop.f32.mrb[0].mxu0
    %v2868 = vadd.f32 %v2669, %v2867
    %v2869 = vpop.f32.mrb[0].mxu0
    %v2870 = vadd.f32 %v2671, %v2869
    %v2871 = vpop.f32.mrb[0].mxu0
    %v2872 = vadd.f32 %v2673, %v2871
    %v2873 = vpop.f32.mrb[0].mxu0
    %v2874 = vadd.f32 %v2675, %v2873
    %2875 = vdwg.mxu0
    %v2882 = vrot.slane %v2399, 4
    %v2883 = vrot.slane %v2401, 4
    %v2884 = vsel %vm2435, %v2882, %v2883
    %v2885 = vrot.slane %v2400, 4
    %v2886 = vrot.slane %v2402, 4
    %v2887 = vsel %vm2435, %v2885, %v2886
    %v2888 = vrot.slane %v2403, 4
    %v2889 = vsel %vm2435, %v2883, %v2888
    %v2890 = vrot.slane %v2404, 4
    %v2891 = vsel %vm2435, %v2886, %v2890
    %v2894 = vld [vmem:[#allocation6 + $0x180] sm:$0xff]
    %v2895 = vld [vmem:[#allocation6 + $0x188] sm:$0xff]
    %v2896 = vld [vmem:[#allocation6 + $0x190] sm:$0xff]
    %v2897 = vld [vmem:[#allocation6 + $0x198] sm:$0xff]
    %v2898 = vld [vmem:[#allocation6 + $0x1a0] sm:$0xff]
    %v2899 = vld [vmem:[#allocation6 + $0x1a8] sm:$0xff]
    %v2900 = vld [vmem:[#allocation6 + $0x1b0] sm:$0xff]
    %v2901 = vld [vmem:[#allocation6 + $0x1b8] sm:$0xff]
    %v2902 = vld [vmem:[#allocation6 + $0x1c0] sm:$0xff]
    %v2903 = vld [vmem:[#allocation6 + $0x1c8] sm:$0xff]
    %v2904 = vld [vmem:[#allocation6 + $0x1d0] sm:$0xff]
    %v2905 = vld [vmem:[#allocation6 + $0x1d8] sm:$0xff]
    %v2906 = vld [vmem:[#allocation6 + $0x1e0] sm:$0xff]
    %v2907 = vld [vmem:[#allocation6 + $0x1e8] sm:$0xff]
    %v2908 = vld [vmem:[#allocation6 + $0x1f0] sm:$0xff]
    %v2909 = vld [vmem:[#allocation6 + $0x1f8] sm:$0xff]
    %v2910 = vld [vmem:[#allocation6 + $0x200] sm:$0xff]
    %v2911 = vld [vmem:[#allocation6 + $0x208] sm:$0xff]
    %v2912 = vld [vmem:[#allocation6 + $0x210] sm:$0xff]
    %v2913 = vld [vmem:[#allocation6 + $0x218] sm:$0xff]
    %v2914 = vld [vmem:[#allocation6 + $0x220] sm:$0xff]
    %v2915 = vld [vmem:[#allocation6 + $0x228] sm:$0xff]
    %v2916 = vld [vmem:[#allocation6 + $0x230] sm:$0xff]
    %v2917 = vld [vmem:[#allocation6 + $0x238] sm:$0xff]
    %v2942 = vunpack.c.l.b16 %v2894
    %v2943 = vunpack.c.h.b16 %v2894
    %v2944 = vunpack.c.l.b16 %v2895
    %v2945 = vunpack.c.h.b16 %v2895
    %v2946 = vunpack.c.l.b16 %v2896
    %v2947 = vunpack.c.h.b16 %v2896
    %v2948 = vunpack.c.l.b16 %v2897
    %v2949 = vunpack.c.h.b16 %v2897
    %v2950 = vunpack.c.l.b16 %v2898
    %v2951 = vunpack.c.h.b16 %v2898
    %v2952 = vunpack.c.l.b16 %v2899
    %v2953 = vunpack.c.h.b16 %v2899
    %v2954 = vunpack.c.l.b16 %v2900
    %v2955 = vunpack.c.h.b16 %v2900
    %v2956 = vunpack.c.l.b16 %v2901
    %v2957 = vunpack.c.h.b16 %v2901
    %v2958 = vunpack.c.l.b16 %v2902
    %v2959 = vunpack.c.h.b16 %v2902
    %v2960 = vunpack.c.l.b16 %v2903
    %v2961 = vunpack.c.h.b16 %v2903
    %v2962 = vunpack.c.l.b16 %v2904
    %v2963 = vunpack.c.h.b16 %v2904
    %v2964 = vunpack.c.l.b16 %v2905
    %v2965 = vunpack.c.h.b16 %v2905
    %v2966 = vunpack.c.l.b16 %v2906
    %v2967 = vunpack.c.h.b16 %v2906
    %v2968 = vunpack.c.l.b16 %v2907
    %v2969 = vunpack.c.h.b16 %v2907
    %v2970 = vunpack.c.l.b16 %v2908
    %v2971 = vunpack.c.h.b16 %v2908
    %v2972 = vunpack.c.l.b16 %v2909
    %v2973 = vunpack.c.h.b16 %v2909
    %v2974 = vunpack.c.l.b16 %v2910
    %v2975 = vunpack.c.h.b16 %v2910
    %v2976 = vunpack.c.l.b16 %v2911
    %v2977 = vunpack.c.h.b16 %v2911
    %v2978 = vunpack.c.l.b16 %v2912
    %v2979 = vunpack.c.h.b16 %v2912
    %v2980 = vunpack.c.l.b16 %v2913
    %v2981 = vunpack.c.h.b16 %v2913
    %v2982 = vunpack.c.l.b16 %v2914
    %v2983 = vunpack.c.h.b16 %v2914
    %v2984 = vunpack.c.l.b16 %v2915
    %v2985 = vunpack.c.h.b16 %v2915
    %v2986 = vunpack.c.l.b16 %v2916
    %v2987 = vunpack.c.h.b16 %v2916
    %v2988 = vunpack.c.l.b16 %v2917
    %v2989 = vunpack.c.h.b16 %v2917
    %v2990 = vpack.c.b16 %v2944, %v2942
    %v2991 = vpack.c.b16 %v2945, %v2943
    %v2992 = vpack.c.b16 %v2948, %v2946
    %v2993 = vpack.c.b16 %v2949, %v2947
    %v2994 = vpack.c.b16 %v2952, %v2950
    %v2995 = vpack.c.b16 %v2953, %v2951
    %v2996 = vpack.c.b16 %v2956, %v2954
    %v2997 = vpack.c.b16 %v2957, %v2955
    %v2998 = vpack.c.b16 %v2960, %v2958
    %v2999 = vpack.c.b16 %v2961, %v2959
    %v3000 = vpack.c.b16 %v2964, %v2962
    %v3001 = vpack.c.b16 %v2965, %v2963
    %v3002 = vpack.c.b16 %v2968, %v2966
    %v3003 = vpack.c.b16 %v2969, %v2967
    %v3004 = vpack.c.b16 %v2972, %v2970
    %v3005 = vpack.c.b16 %v2973, %v2971
    %v3006 = vpack.c.b16 %v2976, %v2974
    %v3007 = vpack.c.b16 %v2977, %v2975
    %v3008 = vpack.c.b16 %v2980, %v2978
    %v3009 = vpack.c.b16 %v2981, %v2979
    %v3010 = vpack.c.b16 %v2984, %v2982
    %v3011 = vpack.c.b16 %v2985, %v2983
    %v3012 = vpack.c.b16 %v2988, %v2986
    %v3013 = vpack.c.b16 %v2989, %v2987
    %v3039 = vsel %vm2272, %v2887, 0
    %v3042 = vsel %vm2272, %v2891, 0
    %3044 = vmatprep.subr.bf16.mxu0 %v2991
    %3045 = vmatpush1.bf16.msra.mxu0 %v2990
    %3046 = vmatprep.subr.bf16.mxu0 %v2993
    %3047 = vmatpush1.bf16.msra.mxu0 %v2992
    %3048 = vmatprep.subr.bf16.mxu0 %v2995
    %3049 = vmatpush1.bf16.msra.mxu0 %v2994
    %3050 = vmatprep.subr.bf16.mxu0 %v2997
    %3051 = vmatpush1.bf16.msra.mxu0 %v2996
    %3052 = vmatprep.subr.bf16.mxu0 %v2999
    %3053 = vmatpush1.bf16.msra.mxu0 %v2998
    %3054 = vmatprep.subr.bf16.mxu0 %v3001
    %3055 = vmatpush1.bf16.msra.mxu0 %v3000
    %3056 = vmatprep.subr.bf16.mxu0 %v3003
    %3057 = vmatpush1.bf16.msra.mxu0 %v3002
    %3058 = vmatprep.subr.bf16.mxu0 %v3005
    %3059 = vmatpush1.bf16.msra.mxu0 %v3004
    %3060 = vmatprep.subr.bf16.mxu0 %v3007
    %3061 = vmatpush1.bf16.msra.mxu0 %v3006
    %3062 = vmatprep.subr.bf16.mxu0 %v3009
    %3063 = vmatpush1.bf16.msra.mxu0 %v3008
    %3064 = vmatprep.subr.bf16.mxu0 %v3011
    %3065 = vmatpush1.bf16.msra.mxu0 %v3010
    %3066 = vmatprep.subr.bf16.mxu0 %v3013
    %3067 = vmatpush1.bf16.msra.mxu0 %v3012
    %3068 = vmatprep.subr.bf16.mxu0 0
    %3069 = vmatpush1.bf16.msra.mxu0 0
    %3070 = vmatprep.subr.bf16.mxu0 0
    %3071 = vmatpush1.bf16.msra.mxu0 0
    %3072 = vmatprep.subr.bf16.mxu0 0
    %3073 = vmatpush1.bf16.msra.mxu0 0
    %3074 = vmatprep.subr.bf16.mxu0 0
    %3075 = vmatpush1.bf16.msra.mxu0 0
    %3076 = vmatprep.mubr.bf16.mxu0 %v2599
    %3077 = vmatmul.mubr.bf16.gmra.mrb[0].mxu0 %v2438
    %v3078 = vpop.f32.mrb[0].mxu0
    %v3079 = vadd.f32 0.0, %v3078
    %v3080 = vpop.f32.mrb[0].mxu0
    %v3081 = vadd.f32 0.0, %v3080
    %v3082 = vpop.f32.mrb[0].mxu0
    %v3083 = vadd.f32 0.0, %v3082
    %v3084 = vpop.f32.mrb[0].mxu0
    %v3085 = vadd.f32 0.0, %v3084
    %3086 = vmatprep.mubr.bf16.mxu0 %v2602
    %3087 = vmatmul.mubr.bf16.gmra.mrb[0].mxu0 %v2443
    %v3088 = vpop.f32.mrb[0].mxu0
    %v3089 = vadd.f32 0.0, %v3088
    %v3090 = vpop.f32.mrb[0].mxu0
    %v3091 = vadd.f32 0.0, %v3090
    %v3092 = vpop.f32.mrb[0].mxu0
    %v3093 = vadd.f32 0.0, %v3092
    %v3094 = vpop.f32.mrb[0].mxu0
    %v3095 = vadd.f32 0.0, %v3094
    %3096 = vmatprep.mubr.bf16.mxu0 %v3039
    %3097 = vmatmul.mubr.bf16.gmra.mrb[0].mxu0 %v2884
    %v3098 = vpop.f32.mrb[0].mxu0
    %v3099 = vadd.f32 0.0, %v3098
    %v3100 = vpop.f32.mrb[0].mxu0
    %v3101 = vadd.f32 0.0, %v3100
    %v3102 = vpop.f32.mrb[0].mxu0
    %v3103 = vadd.f32 0.0, %v3102
    %v3104 = vpop.f32.mrb[0].mxu0
    %v3105 = vadd.f32 0.0, %v3104
    %3106 = vmatprep.mubr.bf16.mxu0 %v3042
    %3107 = vmatmul.mubr.bf16.gmra.mrb[0].mxu0 %v2889
    %v3108 = vpop.f32.mrb[0].mxu0
    %v3109 = vadd.f32 0.0, %v3108
    %v3110 = vpop.f32.mrb[0].mxu0
    %v3111 = vadd.f32 0.0, %v3110
    %v3112 = vpop.f32.mrb[0].mxu0
    %v3113 = vadd.f32 0.0, %v3112
    %v3114 = vpop.f32.mrb[0].mxu0
    %v3115 = vadd.f32 0.0, %v3114
    %3116 = vdwg.mxu0
    %v3117 = vadd.f32 %v2838, %v3079
    %v3118 = vadd.f32 %v2840, %v3081
    %v3119 = vadd.f32 %v2842, %v3083
    %v3120 = vadd.f32 %v2844, %v3085
    %v3121 = vadd.f32 %v2848, %v3089
    %v3122 = vadd.f32 %v2850, %v3091
    %v3123 = vadd.f32 %v2852, %v3093
    %v3124 = vadd.f32 %v2854, %v3095
    %v3125 = vadd.f32 %v2858, %v3099
    %v3126 = vadd.f32 %v2860, %v3101
    %v3127 = vadd.f32 %v2862, %v3103
    %v3128 = vadd.f32 %v2864, %v3105
    %v3129 = vadd.f32 %v2868, %v3109
    %v3130 = vadd.f32 %v2870, %v3111
    %v3131 = vadd.f32 %v2872, %v3113
    %v3132 = vadd.f32 %v2874, %v3115
    %v3133 = vld [vmem:[#allocation6 + $0x240] sm:$0xff]
    %v3134 = vld [vmem:[#allocation6 + $0x248] sm:$0xff]
    %v3135 = vld [vmem:[#allocation6 + $0x250] sm:$0xff]
    %v3136 = vld [vmem:[#allocation6 + $0x258] sm:$0xff]
    %v3137 = vld [vmem:[#allocation6 + $0x260] sm:$0xff]
    %v3138 = vld [vmem:[#allocation6 + $0x268] sm:$0xff]
    %v3139 = vld [vmem:[#allocation6 + $0x270] sm:$0xff]
    %v3140 = vld [vmem:[#allocation6 + $0x278] sm:$0xff]
    %v3141 = vld [vmem:[#allocation6 + $0x280] sm:$0xff]
    %v3142 = vld [vmem:[#allocation6 + $0x288] sm:$0xff]
    %v3143 = vld [vmem:[#allocation6 + $0x290] sm:$0xff]
    %v3144 = vld [vmem:[#allocation6 + $0x298] sm:$0xff]
    %v3145 = vld [vmem:[#allocation6 + $0x2a0] sm:$0xff]
    %v3146 = vld [vmem:[#allocation6 + $0x2a8] sm:$0xff]
    %v3147 = vld [vmem:[#allocation6 + $0x2b0] sm:$0xff]
    %v3148 = vld [vmem:[#allocation6 + $0x2b8] sm:$0xff]
    %v3149 = vld [vmem:[#allocation6 + $0x2c0] sm:$0xff]
    %v3150 = vld [vmem:[#allocation6 + $0x2c8] sm:$0xff]
    %v3151 = vld [vmem:[#allocation6 + $0x2d0] sm:$0xff]
    %v3152 = vld [vmem:[#allocation6 + $0x2d8] sm:$0xff]
    %v3153 = vld [vmem:[#allocation6 + $0x2e0] sm:$0xff]
    %v3154 = vld [vmem:[#allocation6 + $0x2e8] sm:$0xff]
    %v3155 = vld [vmem:[#allocation6 + $0x2f0] sm:$0xff]
    %v3156 = vld [vmem:[#allocation6 + $0x2f8] sm:$0xff]
    %v3181 = vunpack.c.l.b16 %v3133
    %v3182 = vunpack.c.h.b16 %v3133
    %v3183 = vunpack.c.l.b16 %v3134
    %v3184 = vunpack.c.h.b16 %v3134
    %v3185 = vunpack.c.l.b16 %v3135
    %v3186 = vunpack.c.h.b16 %v3135
    %v3187 = vunpack.c.l.b16 %v3136
    %v3188 = vunpack.c.h.b16 %v3136
    %v3189 = vunpack.c.l.b16 %v3137
    %v3190 = vunpack.c.h.b16 %v3137
    %v3191 = vunpack.c.l.b16 %v3138
    %v3192 = vunpack.c.h.b16 %v3138
    %v3193 = vunpack.c.l.b16 %v3139
    %v3194 = vunpack.c.h.b16 %v3139
    %v3195 = vunpack.c.l.b16 %v3140
    %v3196 = vunpack.c.h.b16 %v3140
    %v3197 = vunpack.c.l.b16 %v3141
    %v3198 = vunpack.c.h.b16 %v3141
    %v3199 = vunpack.c.l.b16 %v3142
    %v3200 = vunpack.c.h.b16 %v3142
    %v3201 = vunpack.c.l.b16 %v3143
    %v3202 = vunpack.c.h.b16 %v3143
    %v3203 = vunpack.c.l.b16 %v3144
    %v3204 = vunpack.c.h.b16 %v3144
    %v3205 = vunpack.c.l.b16 %v3145
    %v3206 = vunpack.c.h.b16 %v3145
    %v3207 = vunpack.c.l.b16 %v3146
    %v3208 = vunpack.c.h.b16 %v3146
    %v3209 = vunpack.c.l.b16 %v3147
    %v3210 = vunpack.c.h.b16 %v3147
    %v3211 = vunpack.c.l.b16 %v3148
    %v3212 = vunpack.c.h.b16 %v3148
    %v3213 = vunpack.c.l.b16 %v3149
    %v3214 = vunpack.c.h.b16 %v3149
    %v3215 = vunpack.c.l.b16 %v3150
    %v3216 = vunpack.c.h.b16 %v3150
    %v3217 = vunpack.c.l.b16 %v3151
    %v3218 = vunpack.c.h.b16 %v3151
    %v3219 = vunpack.c.l.b16 %v3152
    %v3220 = vunpack.c.h.b16 %v3152
    %v3221 = vunpack.c.l.b16 %v3153
    %v3222 = vunpack.c.h.b16 %v3153
    %v3223 = vunpack.c.l.b16 %v3154
    %v3224 = vunpack.c.h.b16 %v3154
    %v3225 = vunpack.c.l.b16 %v3155
    %v3226 = vunpack.c.h.b16 %v3155
    %v3227 = vunpack.c.l.b16 %v3156
    %v3228 = vunpack.c.h.b16 %v3156
    %v3229 = vpack.c.b16 %v3183, %v3181
    %v3230 = vpack.c.b16 %v3184, %v3182
    %v3231 = vpack.c.b16 %v3187, %v3185
    %v3232 = vpack.c.b16 %v3188, %v3186
    %v3233 = vpack.c.b16 %v3191, %v3189
    %v3234 = vpack.c.b16 %v3192, %v3190
    %v3235 = vpack.c.b16 %v3195, %v3193
    %v3236 = vpack.c.b16 %v3196, %v3194
    %v3237 = vpack.c.b16 %v3199, %v3197
    %v3238 = vpack.c.b16 %v3200, %v3198
    %v3239 = vpack.c.b16 %v3203, %v3201
    %v3240 = vpack.c.b16 %v3204, %v3202
    %v3241 = vpack.c.b16 %v3207, %v3205
    %v3242 = vpack.c.b16 %v3208, %v3206
    %v3243 = vpack.c.b16 %v3211, %v3209
    %v3244 = vpack.c.b16 %v3212, %v3210
    %v3245 = vpack.c.b16 %v3215, %v3213
    %v3246 = vpack.c.b16 %v3216, %v3214
    %v3247 = vpack.c.b16 %v3219, %v3217
    %v3248 = vpack.c.b16 %v3220, %v3218
    %v3249 = vpack.c.b16 %v3223, %v3221
    %v3250 = vpack.c.b16 %v3224, %v3222
    %v3251 = vpack.c.b16 %v3227, %v3225
    %v3252 = vpack.c.b16 %v3228, %v3226
    %v3278 = vsel %vm2272, %v2398, 0
    %3280 = vmatprep.subr.bf16.mxu0 %v3230
    %3281 = vmatpush1.bf16.msra.mxu0 %v3229
    %3282 = vmatprep.subr.bf16.mxu0 %v3232
    %3283 = vmatpush1.bf16.msra.mxu0 %v3231
    %3284 = vmatprep.subr.bf16.mxu0 %v3234
    %3285 = vmatpush1.bf16.msra.mxu0 %v3233
    %3286 = vmatprep.subr.bf16.mxu0 %v3236
    %3287 = vmatpush1.bf16.msra.mxu0 %v3235
    %3288 = vmatprep.subr.bf16.mxu0 %v3238
    %3289 = vmatpush1.bf16.msra.mxu0 %v3237
    %3290 = vmatprep.subr.bf16.mxu0 %v3240
    %3291 = vmatpush1.bf16.msra.mxu0 %v3239
    %3292 = vmatprep.subr.bf16.mxu0 %v3242
    %3293 = vmatpush1.bf16.msra.mxu0 %v3241
    %3294 = vmatprep.subr.bf16.mxu0 %v3244
    %3295 = vmatpush1.bf16.msra.mxu0 %v3243
    %3296 = vmatprep.subr.bf16.mxu0 %v3246
    %3297 = vmatpush1.bf16.msra.mxu0 %v3245
    %3298 = vmatprep.subr.bf16.mxu0 %v3248
    %3299 = vmatpush1.bf16.msra.mxu0 %v3247
    %3300 = vmatprep.subr.bf16.mxu0 %v3250
    %3301 = vmatpush1.bf16.msra.mxu0 %v3249
    %3302 = vmatprep.subr.bf16.mxu0 %v3252
    %3303 = vmatpush1.bf16.msra.mxu0 %v3251
    %3304 = vmatprep.subr.bf16.mxu0 0
    %3305 = vmatpush1.bf16.msra.mxu0 0
    %3306 = vmatprep.subr.bf16.mxu0 0
    %3307 = vmatpush1.bf16.msra.mxu0 0
    %3308 = vmatprep.subr.bf16.mxu0 0
    %3309 = vmatpush1.bf16.msra.mxu0 0
    %3310 = vmatprep.subr.bf16.mxu0 0
    %3311 = vmatpush1.bf16.msra.mxu0 0
    %3312 = vmatprep.mubr.bf16.mxu0 %v3039
    %3313 = vmatmul.mubr.bf16.gmra.mrb[0].mxu0 %v2884
    %v3314 = vpop.f32.mrb[0].mxu0
    %v3315 = vadd.f32 0.0, %v3314
    %v3316 = vpop.f32.mrb[0].mxu0
    %v3317 = vadd.f32 0.0, %v3316
    %v3318 = vpop.f32.mrb[0].mxu0
    %v3319 = vadd.f32 0.0, %v3318
    %v3320 = vpop.f32.mrb[0].mxu0
    %v3321 = vadd.f32 0.0, %v3320
    %3322 = vmatprep.mubr.bf16.mxu0 %v3042
    %3323 = vmatmul.mubr.bf16.gmra.mrb[0].mxu0 %v2889
    %v3324 = vpop.f32.mrb[0].mxu0
    %v3325 = vadd.f32 0.0, %v3324
    %v3326 = vpop.f32.mrb[0].mxu0
    %v3327 = vadd.f32 0.0, %v3326
    %v3328 = vpop.f32.mrb[0].mxu0
    %v3329 = vadd.f32 0.0, %v3328
    %v3330 = vpop.f32.mrb[0].mxu0
    %v3331 = vadd.f32 0.0, %v3330
    %3332 = vmatprep.mubr.bf16.mxu0 %v2801
    %3333 = vmatmul.mubr.bf16.gmra.mrb[0].mxu0 %v2395
    %v3334 = vpop.f32.mrb[0].mxu0
    %v3335 = vadd.f32 0.0, %v3334
    %v3336 = vpop.f32.mrb[0].mxu0
    %v3337 = vadd.f32 0.0, %v3336
    %v3338 = vpop.f32.mrb[0].mxu0
    %v3339 = vadd.f32 0.0, %v3338
    %v3340 = vpop.f32.mrb[0].mxu0
    %v3341 = vadd.f32 0.0, %v3340
    %3342 = vmatprep.mubr.bf16.mxu0 %v3278
    %3343 = vmatmul.mubr.bf16.gmra.mrb[0].mxu0 %v2397
    %v3344 = vpop.f32.mrb[0].mxu0
    %v3345 = vadd.f32 0.0, %v3344
    %v3346 = vpop.f32.mrb[0].mxu0
    %v3347 = vadd.f32 0.0, %v3346
    %v3348 = vpop.f32.mrb[0].mxu0
    %v3349 = vadd.f32 0.0, %v3348
    %v3350 = vpop.f32.mrb[0].mxu0
    %v3351 = vadd.f32 0.0, %v3350
    %3352 = vdwg.mxu0
    %v3353 = vadd.f32 %v3117, %v3315
    %v3354 = vadd.f32 %v3118, %v3317
    %v3355 = vadd.f32 %v3119, %v3319
    %v3356 = vadd.f32 %v3120, %v3321
    %v3357 = vadd.f32 %v3121, %v3325
    %v3358 = vadd.f32 %v3122, %v3327
    %v3359 = vadd.f32 %v3123, %v3329
    %v3360 = vadd.f32 %v3124, %v3331
    %v3361 = vadd.f32 %v3125, %v3335
    %v3362 = vadd.f32 %v3126, %v3337
    %v3363 = vadd.f32 %v3127, %v3339
    %v3364 = vadd.f32 %v3128, %v3341
    %v3365 = vadd.f32 %v3129, %v3345
    %v3366 = vadd.f32 %v3130, %v3347
    %v3367 = vadd.f32 %v3131, %v3349
    %v3368 = vadd.f32 %v3132, %v3351
    %v3369 = vld [vmem:[#allocation6 + $0x300] sm:$0xff]
    %v3370 = vld [vmem:[#allocation6 + $0x308] sm:$0xff]
    %v3371 = vld [vmem:[#allocation6 + $0x310] sm:$0xff]
    %v3372 = vld [vmem:[#allocation6 + $0x318] sm:$0xff]
    %v3373 = vld [vmem:[#allocation6 + $0x320] sm:$0xff]
    %v3374 = vld [vmem:[#allocation6 + $0x328] sm:$0xff]
    %v3375 = vld [vmem:[#allocation6 + $0x330] sm:$0xff]
    %v3376 = vld [vmem:[#allocation6 + $0x338] sm:$0xff]
    %v3377 = vld [vmem:[#allocation6 + $0x340] sm:$0xff]
    %v3378 = vld [vmem:[#allocation6 + $0x348] sm:$0xff]
    %v3379 = vld [vmem:[#allocation6 + $0x350] sm:$0xff]
    %v3380 = vld [vmem:[#allocation6 + $0x358] sm:$0xff]
    %v3381 = vld [vmem:[#allocation6 + $0x360] sm:$0xff]
    %v3382 = vld [vmem:[#allocation6 + $0x368] sm:$0xff]
    %v3383 = vld [vmem:[#allocation6 + $0x370] sm:$0xff]
    %v3384 = vld [vmem:[#allocation6 + $0x378] sm:$0xff]
    %v3385 = vld [vmem:[#allocation6 + $0x380] sm:$0xff]
    %v3386 = vld [vmem:[#allocation6 + $0x388] sm:$0xff]
    %v3387 = vld [vmem:[#allocation6 + $0x390] sm:$0xff]
    %v3388 = vld [vmem:[#allocation6 + $0x398] sm:$0xff]
    %v3389 = vld [vmem:[#allocation6 + $0x3a0] sm:$0xff]
    %v3390 = vld [vmem:[#allocation6 + $0x3a8] sm:$0xff]
    %v3391 = vld [vmem:[#allocation6 + $0x3b0] sm:$0xff]
    %v3392 = vld [vmem:[#allocation6 + $0x3b8] sm:$0xff]
    %v3417 = vunpack.c.l.b16 %v3369
    %v3418 = vunpack.c.h.b16 %v3369
    %v3419 = vunpack.c.l.b16 %v3370
    %v3420 = vunpack.c.h.b16 %v3370
    %v3421 = vunpack.c.l.b16 %v3371
    %v3422 = vunpack.c.h.b16 %v3371
    %v3423 = vunpack.c.l.b16 %v3372
    %v3424 = vunpack.c.h.b16 %v3372
    %v3425 = vunpack.c.l.b16 %v3373
    %v3426 = vunpack.c.h.b16 %v3373
    %v3427 = vunpack.c.l.b16 %v3374
    %v3428 = vunpack.c.h.b16 %v3374
    %v3429 = vunpack.c.l.b16 %v3375
    %v3430 = vunpack.c.h.b16 %v3375
    %v3431 = vunpack.c.l.b16 %v3376
    %v3432 = vunpack.c.h.b16 %v3376
    %v3433 = vunpack.c.l.b16 %v3377
    %v3434 = vunpack.c.h.b16 %v3377
    %v3435 = vunpack.c.l.b16 %v3378
    %v3436 = vunpack.c.h.b16 %v3378
    %v3437 = vunpack.c.l.b16 %v3379
    %v3438 = vunpack.c.h.b16 %v3379
    %v3439 = vunpack.c.l.b16 %v3380
    %v3440 = vunpack.c.h.b16 %v3380
    %v3441 = vunpack.c.l.b16 %v3381
    %v3442 = vunpack.c.h.b16 %v3381
    %v3443 = vunpack.c.l.b16 %v3382
    %v3444 = vunpack.c.h.b16 %v3382
    %v3445 = vunpack.c.l.b16 %v3383
    %v3446 = vunpack.c.h.b16 %v3383
    %v3447 = vunpack.c.l.b16 %v3384
    %v3448 = vunpack.c.h.b16 %v3384
    %v3449 = vunpack.c.l.b16 %v3385
    %v3450 = vunpack.c.h.b16 %v3385
    %v3451 = vunpack.c.l.b16 %v3386
    %v3452 = vunpack.c.h.b16 %v3386
    %v3453 = vunpack.c.l.b16 %v3387
    %v3454 = vunpack.c.h.b16 %v3387
    %v3455 = vunpack.c.l.b16 %v3388
    %v3456 = vunpack.c.h.b16 %v3388
    %v3457 = vunpack.c.l.b16 %v3389
    %v3458 = vunpack.c.h.b16 %v3389
    %v3459 = vunpack.c.l.b16 %v3390
    %v3460 = vunpack.c.h.b16 %v3390
    %v3461 = vunpack.c.l.b16 %v3391
    %v3462 = vunpack.c.h.b16 %v3391
    %v3463 = vunpack.c.l.b16 %v3392
    %v3464 = vunpack.c.h.b16 %v3392
    %v3465 = vpack.c.b16 %v3419, %v3417
    %v3466 = vpack.c.b16 %v3420, %v3418
    %v3467 = vpack.c.b16 %v3423, %v3421
    %v3468 = vpack.c.b16 %v3424, %v3422
    %v3469 = vpack.c.b16 %v3427, %v3425
    %v3470 = vpack.c.b16 %v3428, %v3426
    %v3471 = vpack.c.b16 %v3431, %v3429
    %v3472 = vpack.c.b16 %v3432, %v3430
    %v3473 = vpack.c.b16 %v3435, %v3433
    %v3474 = vpack.c.b16 %v3436, %v3434
    %v3475 = vpack.c.b16 %v3439, %v3437
    %v3476 = vpack.c.b16 %v3440, %v3438
    %v3477 = vpack.c.b16 %v3443, %v3441
    %v3478 = vpack.c.b16 %v3444, %v3442
    %v3479 = vpack.c.b16 %v3447, %v3445
    %v3480 = vpack.c.b16 %v3448, %v3446
    %v3481 = vpack.c.b16 %v3451, %v3449
    %v3482 = vpack.c.b16 %v3452, %v3450
    %v3483 = vpack.c.b16 %v3455, %v3453
    %v3484 = vpack.c.b16 %v3456, %v3454
    %v3485 = vpack.c.b16 %v3459, %v3457
    %v3486 = vpack.c.b16 %v3460, %v3458
    %v3487 = vpack.c.b16 %v3463, %v3461
    %v3488 = vpack.c.b16 %v3464, %v3462
    %v3514 = vsel %vm2272, %v2404, 0
    %3516 = vmatprep.subr.bf16.mxu0 %v3466
    %3517 = vmatpush1.bf16.msra.mxu0 %v3465
    %3518 = vmatprep.subr.bf16.mxu0 %v3468
    %3519 = vmatpush1.bf16.msra.mxu0 %v3467
    %3520 = vmatprep.subr.bf16.mxu0 %v3470
    %3521 = vmatpush1.bf16.msra.mxu0 %v3469
    %3522 = vmatprep.subr.bf16.mxu0 %v3472
    %3523 = vmatpush1.bf16.msra.mxu0 %v3471
    %3524 = vmatprep.subr.bf16.mxu0 %v3474
    %3525 = vmatpush1.bf16.msra.mxu0 %v3473
    %3526 = vmatprep.subr.bf16.mxu0 %v3476
    %3527 = vmatpush1.bf16.msra.mxu0 %v3475
    %3528 = vmatprep.subr.bf16.mxu0 %v3478
    %3529 = vmatpush1.bf16.msra.mxu0 %v3477
    %3530 = vmatprep.subr.bf16.mxu0 %v3480
    %3531 = vmatpush1.bf16.msra.mxu0 %v3479
    %3532 = vmatprep.subr.bf16.mxu0 %v3482
    %3533 = vmatpush1.bf16.msra.mxu0 %v3481
    %3534 = vmatprep.subr.bf16.mxu0 %v3484
    %3535 = vmatpush1.bf16.msra.mxu0 %v3483
    %3536 = vmatprep.subr.bf16.mxu0 %v3486
    %3537 = vmatpush1.bf16.msra.mxu0 %v3485
    %3538 = vmatprep.subr.bf16.mxu0 %v3488
    %3539 = vmatpush1.bf16.msra.mxu0 %v3487
    %3540 = vmatprep.subr.bf16.mxu0 0
    %3541 = vmatpush1.bf16.msra.mxu0 0
    %3542 = vmatprep.subr.bf16.mxu0 0
    %3543 = vmatpush1.bf16.msra.mxu0 0
    %3544 = vmatprep.subr.bf16.mxu0 0
    %3545 = vmatpush1.bf16.msra.mxu0 0
    %3546 = vmatprep.subr.bf16.mxu0 0
    %3547 = vmatpush1.bf16.msra.mxu0 0
    %3548 = vmatprep.mubr.bf16.mxu0 %v2801
    %3549 = vmatmul.mubr.bf16.gmra.mrb[0].mxu0 %v2395
    %v3550 = vpop.f32.mrb[0].mxu0
    %v3551 = vadd.f32 0.0, %v3550
    %v3552 = vpop.f32.mrb[0].mxu0
    %v3553 = vadd.f32 0.0, %v3552
    %v3554 = vpop.f32.mrb[0].mxu0
    %v3555 = vadd.f32 0.0, %v3554
    %v3556 = vpop.f32.mrb[0].mxu0
    %v3557 = vadd.f32 0.0, %v3556
    %3558 = vmatprep.mubr.bf16.mxu0 %v3278
    %3559 = vmatmul.mubr.bf16.gmra.mrb[0].mxu0 %v2397
    %v3560 = vpop.f32.mrb[0].mxu0
    %v3561 = vadd.f32 0.0, %v3560
    %v3562 = vpop.f32.mrb[0].mxu0
    %v3563 = vadd.f32 0.0, %v3562
    %v3564 = vpop.f32.mrb[0].mxu0
    %v3565 = vadd.f32 0.0, %v3564
    %v3566 = vpop.f32.mrb[0].mxu0
    %v3567 = vadd.f32 0.0, %v3566
    %3568 = vmatprep.mubr.bf16.mxu0 %v2596
    %3569 = vmatmul.mubr.bf16.gmra.mrb[0].mxu0 %v2401
    %v3570 = vpop.f32.mrb[0].mxu0
    %v3571 = vadd.f32 0.0, %v3570
    %v3572 = vpop.f32.mrb[0].mxu0
    %v3573 = vadd.f32 0.0, %v3572
    %v3574 = vpop.f32.mrb[0].mxu0
    %v3575 = vadd.f32 0.0, %v3574
    %v3576 = vpop.f32.mrb[0].mxu0
    %v3577 = vadd.f32 0.0, %v3576
    %3578 = vmatprep.mubr.bf16.mxu0 %v3514
    %3579 = vmatmul.mubr.bf16.gmra.mrb[0].mxu0 %v2403
    %v3580 = vpop.f32.mrb[0].mxu0
    %v3581 = vadd.f32 0.0, %v3580
    %v3582 = vpop.f32.mrb[0].mxu0
    %v3583 = vadd.f32 0.0, %v3582
    %v3584 = vpop.f32.mrb[0].mxu0
    %v3585 = vadd.f32 0.0, %v3584
    %v3586 = vpop.f32.mrb[0].mxu0
    %v3587 = vadd.f32 0.0, %v3586
    %3588 = vdwg.mxu0
    %v3589 = vadd.f32 %v3353, %v3551
    %v3590 = vadd.f32 %v3354, %v3553
    %v3591 = vadd.f32 %v3355, %v3555
    %v3592 = vadd.f32 %v3356, %v3557
    %v3593 = vadd.f32 %v3357, %v3561
    %v3594 = vadd.f32 %v3358, %v3563
    %v3595 = vadd.f32 %v3359, %v3565
    %v3596 = vadd.f32 %v3360, %v3567
    %v3597 = vadd.f32 %v3361, %v3571
    %v3598 = vadd.f32 %v3362, %v3573
    %v3599 = vadd.f32 %v3363, %v3575
    %v3600 = vadd.f32 %v3364, %v3577
    %v3601 = vadd.f32 %v3365, %v3581
    %v3602 = vadd.f32 %v3366, %v3583
    %v3603 = vadd.f32 %v3367, %v3585
    %v3604 = vadd.f32 %v3368, %v3587
    %v3605 = vmax.f32 %v3589, %v3597
    %v3606 = vmax.f32 %v3590, %v3598
    %v3607 = vmax.f32 %v3591, %v3599
    %v3608 = vmax.f32 %v3592, %v3600
    %v3609 = vmax.f32 %v3593, %v3601
    %v3610 = vmax.f32 %v3594, %v3602
    %v3611 = vmax.f32 %v3595, %v3603
    %v3612 = vmax.f32 %v3596, %v3604
    %v3613 = vmax.f32 %v3605, %v3606
    %v3614 = vmax.f32 %v3607, %v3608
    %v3615 = vmax.f32 %v3609, %v3610
    %v3616 = vmax.f32 %v3611, %v3612
    %v3617 = vld [vmem:[#allocation7] sm:$0x1]
    %v3619 = vlaneseq
    %v3620 = vshrl.u32 %v3619, 7
    %v3621 = vsub.s32 0, %v3620
    %v3622 = vrot.slane %v3617, %v3621
    %v3624 = vadd.f32 %v3613, %v3622
    %v3625 = vadd.f32 %v3614, %v3622
    %v3626 = vadd.f32 %v3615, %v3622
    %v3627 = vadd.f32 %v3616, %v3622
    %v3628 = vmax.f32 %v3624, 0.0
    %v3629 = vmax.f32 %v3625, 0.0
    %v3630 = vmax.f32 %v3626, 0.0
    %v3631 = vmax.f32 %v3627, 0.0
    %v3632 = vpack.c.bf16 %v3629, %v3628
    %v3633 = vpack.c.bf16 %v3631, %v3630
    %v3635 = vrot.slane %v3632, 4
    %v3638 = vrot.slane %v3633, 4
    %v3640 = vld [vmem:[%s5] sm:$0xf]
    %v3641 = vld [vmem:[%s5 + $0x4] sm:$0xf]
    %v3642 = vld [vmem:[%s5 + $0x8] sm:$0xf]
    %v3643 = vld [vmem:[%s5 + $0xc] sm:$0xf]
    %v3644 = vld [vmem:[%s5 + $0x10] sm:$0xf]
    %v3645 = vld [vmem:[%s5 + $0x14] sm:$0xf]
    %v3646 = vld [vmem:[%s5 + $0x18] sm:$0xf]
    %v3647 = vld [vmem:[%s5 + $0x1c] sm:$0xf]
    %v3648 = vld [vmem:[%s5 + $0x20] sm:$0xf]
    %v3649 = vld [vmem:[%s5 + $0x24] sm:$0xf]
    %v3650 = vld [vmem:[%s5 + $0x28] sm:$0xf]
    %v3651 = vld [vmem:[%s5 + $0x2c] sm:$0xf]
    %v3652 = vld [vmem:[%s5 + $0x30] sm:$0xf]
    %v3653 = vld [vmem:[%s5 + $0x34] sm:$0xf]
    %v3654 = vld [vmem:[%s5 + $0x38] sm:$0xf]
    %v3655 = vld [vmem:[%s5 + $0x3c] sm:$0xf]
    %v3656 = vld [vmem:[%s5 + $0x40] sm:$0xf]
    %v3657 = vld [vmem:[%s5 + $0x44] sm:$0xf]
    %v3658 = vld [vmem:[%s5 + $0x48] sm:$0xf]
    %v3659 = vld [vmem:[%s5 + $0x4c] sm:$0xf]
    %v3660 = vld [vmem:[%s5 + $0x50] sm:$0xf]
    %v3661 = vld [vmem:[%s5 + $0x54] sm:$0xf]
    %v3662 = vld [vmem:[%s5 + $0x58] sm:$0xf]
    %v3663 = vld [vmem:[%s5 + $0x5c] sm:$0xf]
    %v3664 = vld [vmem:[%s5 + $0x60] sm:$0xf]
    %v3665 = vld [vmem:[%s5 + $0x64] sm:$0xf]
    %v3666 = vld [vmem:[%s5 + $0x68] sm:$0xf]
    %v3667 = vld [vmem:[%s5 + $0x6c] sm:$0xf]
    %v3668 = vld [vmem:[%s5 + $0x70] sm:$0xf]
    %v3669 = vld [vmem:[%s5 + $0x74] sm:$0xf]
    %v3670 = vld [vmem:[%s5 + $0x78] sm:$0xf]
    %v3671 = vld [vmem:[%s5 + $0x7c] sm:$0xf]
    %v3672 = vld [vmem:[%s5 + $0x80] sm:$0xf]
    %v3673 = vld [vmem:[%s5 + $0x84] sm:$0xf]
    %v3674 = vld [vmem:[%s5 + $0x88] sm:$0xf]
    %v3675 = vld [vmem:[%s5 + $0x8c] sm:$0xf]
    %v3676 = vld [vmem:[%s5 + $0x90] sm:$0xf]
    %v3677 = vld [vmem:[%s5 + $0x94] sm:$0xf]
    %v3678 = vld [vmem:[%s5 + $0x98] sm:$0xf]
    %v3679 = vld [vmem:[%s5 + $0x9c] sm:$0xf]
    %v3680 = vld [vmem:[%s5 + $0xa0] sm:$0xf]
    %v3681 = vld [vmem:[%s5 + $0xa4] sm:$0xf]
    %v3682 = vld [vmem:[%s5 + $0xa8] sm:$0xf]
    %v3683 = vld [vmem:[%s5 + $0xac] sm:$0xf]
    %v3684 = vld [vmem:[%s5 + $0xb0] sm:$0xf]
    %v3685 = vld [vmem:[%s5 + $0xb4] sm:$0xf]
    %v3686 = vld [vmem:[%s5 + $0xb8] sm:$0xf]
    %v3687 = vld [vmem:[%s5 + $0xbc] sm:$0xf]
    %v3688 = vld [vmem:[%s5 + $0xc0] sm:$0xf]
    %v3689 = vld [vmem:[%s5 + $0xc4] sm:$0xf]
    %v3690 = vld [vmem:[%s5 + $0xc8] sm:$0xf]
    %v3691 = vld [vmem:[%s5 + $0xcc] sm:$0xf]
    %v3692 = vld [vmem:[%s5 + $0xd0] sm:$0xf]
    %v3693 = vld [vmem:[%s5 + $0xd4] sm:$0xf]
    %v3694 = vld [vmem:[%s5 + $0xd8] sm:$0xf]
    %v3695 = vld [vmem:[%s5 + $0xdc] sm:$0xf]
    %v3696 = vld [vmem:[%s5 + $0xe0] sm:$0xf]
    %v3697 = vld [vmem:[%s5 + $0xe4] sm:$0xf]
    %v3698 = vld [vmem:[%s5 + $0xe8] sm:$0xf]
    %v3699 = vld [vmem:[%s5 + $0xec] sm:$0xf]
    %v3700 = vld [vmem:[%s5 + $0xf0] sm:$0xf]
    %v3701 = vld [vmem:[%s5 + $0xf4] sm:$0xf]
    %v3702 = vld [vmem:[%s5 + $0xf8] sm:$0xf]
    %v3703 = vld [vmem:[%s5 + $0xfc] sm:$0xf]
    %v3704 = vld [vmem:[#allocation9] sm:$0x1]
    %v3706 = vlaneseq
    %v3707 = vshrl.u32 %v3706, 7
    %v3708 = vsub.s32 0, %v3707
    %v3709 = vrot.slane %v3704, %v3708
    %v3775 = vunpack.c.l.b16 %v3640
    %v3776 = vunpack.c.l.b16 %v3641
    %v3777 = vunpack.c.l.b16 %v3642
    %v3778 = vunpack.c.l.b16 %v3643
    %v3779 = vunpack.c.l.b16 %v3644
    %v3780 = vunpack.c.l.b16 %v3645
    %v3781 = vunpack.c.l.b16 %v3646
    %v3782 = vunpack.c.l.b16 %v3647
    %v3783 = vunpack.c.l.b16 %v3648
    %v3784 = vunpack.c.l.b16 %v3649
    %v3785 = vunpack.c.l.b16 %v3650
    %v3786 = vunpack.c.l.b16 %v3651
    %v3787 = vunpack.c.l.b16 %v3652
    %v3788 = vunpack.c.l.b16 %v3653
    %v3789 = vunpack.c.l.b16 %v3654
    %v3790 = vunpack.c.l.b16 %v3655
    %v3791 = vunpack.c.l.b16 %v3656
    %v3792 = vunpack.c.l.b16 %v3657
    %v3793 = vunpack.c.l.b16 %v3658
    %v3794 = vunpack.c.l.b16 %v3659
    %v3795 = vunpack.c.l.b16 %v3660
    %v3796 = vunpack.c.l.b16 %v3661
    %v3797 = vunpack.c.l.b16 %v3662
    %v3798 = vunpack.c.l.b16 %v3663
    %v3799 = vunpack.c.l.b16 %v3664
    %v3800 = vunpack.c.l.b16 %v3665
    %v3801 = vunpack.c.l.b16 %v3666
    %v3802 = vunpack.c.l.b16 %v3667
    %v3803 = vunpack.c.l.b16 %v3668
    %v3804 = vunpack.c.l.b16 %v3669
    %v3805 = vunpack.c.l.b16 %v3670
    %v3806 = vunpack.c.l.b16 %v3671
    %v3807 = vunpack.c.l.b16 %v3672
    %v3808 = vunpack.c.l.b16 %v3673
    %v3809 = vunpack.c.l.b16 %v3674
    %v3810 = vunpack.c.l.b16 %v3675
    %v3811 = vunpack.c.l.b16 %v3676
    %v3812 = vunpack.c.l.b16 %v3677
    %v3813 = vunpack.c.l.b16 %v3678
    %v3814 = vunpack.c.l.b16 %v3679
    %v3815 = vunpack.c.l.b16 %v3680
    %v3816 = vunpack.c.l.b16 %v3681
    %v3817 = vunpack.c.l.b16 %v3682
    %v3818 = vunpack.c.l.b16 %v3683
    %v3819 = vunpack.c.l.b16 %v3684
    %v3820 = vunpack.c.l.b16 %v3685
    %v3821 = vunpack.c.l.b16 %v3686
    %v3822 = vunpack.c.l.b16 %v3687
    %v3823 = vunpack.c.l.b16 %v3688
    %v3824 = vunpack.c.l.b16 %v3689
    %v3825 = vunpack.c.l.b16 %v3690
    %v3826 = vunpack.c.l.b16 %v3691
    %v3827 = vunpack.c.l.b16 %v3692
    %v3828 = vunpack.c.l.b16 %v3693
    %v3829 = vunpack.c.l.b16 %v3694
    %v3830 = vunpack.c.l.b16 %v3695
    %v3831 = vunpack.c.l.b16 %v3696
    %v3832 = vunpack.c.l.b16 %v3697
    %v3833 = vunpack.c.l.b16 %v3698
    %v3834 = vunpack.c.l.b16 %v3699
    %v3835 = vunpack.c.l.b16 %v3700
    %v3836 = vunpack.c.l.b16 %v3701
    %v3837 = vunpack.c.l.b16 %v3702
    %v3838 = vunpack.c.l.b16 %v3703
    %v3839 = vpack.c.b16 %v3776, %v3775
    %v3840 = vpack.c.b16 %v3778, %v3777
    %v3841 = vpack.c.b16 %v3780, %v3779
    %v3842 = vpack.c.b16 %v3782, %v3781
    %v3843 = vpack.c.b16 %v3784, %v3783
    %v3844 = vpack.c.b16 %v3786, %v3785
    %v3845 = vpack.c.b16 %v3788, %v3787
    %v3846 = vpack.c.b16 %v3790, %v3789
    %v3847 = vpack.c.b16 %v3792, %v3791
    %v3848 = vpack.c.b16 %v3794, %v3793
    %v3849 = vpack.c.b16 %v3796, %v3795
    %v3850 = vpack.c.b16 %v3798, %v3797
    %v3851 = vpack.c.b16 %v3800, %v3799
    %v3852 = vpack.c.b16 %v3802, %v3801
    %v3853 = vpack.c.b16 %v3804, %v3803
    %v3854 = vpack.c.b16 %v3806, %v3805
    %v3855 = vpack.c.b16 %v3808, %v3807
    %v3856 = vpack.c.b16 %v3810, %v3809
    %v3857 = vpack.c.b16 %v3812, %v3811
    %v3858 = vpack.c.b16 %v3814, %v3813
    %v3859 = vpack.c.b16 %v3816, %v3815
    %v3860 = vpack.c.b16 %v3818, %v3817
    %v3861 = vpack.c.b16 %v3820, %v3819
    %v3862 = vpack.c.b16 %v3822, %v3821
    %v3863 = vpack.c.b16 %v3824, %v3823
    %v3864 = vpack.c.b16 %v3826, %v3825
    %v3865 = vpack.c.b16 %v3828, %v3827
    %v3866 = vpack.c.b16 %v3830, %v3829
    %v3867 = vpack.c.b16 %v3832, %v3831
    %v3868 = vpack.c.b16 %v3834, %v3833
    %v3869 = vpack.c.b16 %v3836, %v3835
    %v3870 = vpack.c.b16 %v3838, %v3837
    %3903 = vmatprep.subr.bf16.mxu0 0
    %3904 = vmatpush1.bf16.msra.mxu0 %v3839
    %3905 = vmatprep.subr.bf16.mxu0 0
    %3906 = vmatpush1.bf16.msra.mxu0 %v3840
    %3907 = vmatprep.subr.bf16.mxu0 0
    %3908 = vmatpush1.bf16.msra.mxu0 %v3841
    %3909 = vmatprep.subr.bf16.mxu0 0
    %3910 = vmatpush1.bf16.msra.mxu0 %v3842
    %3911 = vmatprep.subr.bf16.mxu0 0
    %3912 = vmatpush1.bf16.msra.mxu0 %v3843
    %3913 = vmatprep.subr.bf16.mxu0 0
    %3914 = vmatpush1.bf16.msra.mxu0 %v3844
    %3915 = vmatprep.subr.bf16.mxu0 0
    %3916 = vmatpush1.bf16.msra.mxu0 %v3845
    %3917 = vmatprep.subr.bf16.mxu0 0
    %3918 = vmatpush1.bf16.msra.mxu0 %v3846
    %3919 = vmatprep.subr.bf16.mxu0 0
    %3920 = vmatpush1.bf16.msra.mxu0 %v3847
    %3921 = vmatprep.subr.bf16.mxu0 0
    %3922 = vmatpush1.bf16.msra.mxu0 %v3848
    %3923 = vmatprep.subr.bf16.mxu0 0
    %3924 = vmatpush1.bf16.msra.mxu0 %v3849
    %3925 = vmatprep.subr.bf16.mxu0 0
    %3926 = vmatpush1.bf16.msra.mxu0 %v3850
    %3927 = vmatprep.subr.bf16.mxu0 0
    %3928 = vmatpush1.bf16.msra.mxu0 %v3851
    %3929 = vmatprep.subr.bf16.mxu0 0
    %3930 = vmatpush1.bf16.msra.mxu0 %v3852
    %3931 = vmatprep.subr.bf16.mxu0 0
    %3932 = vmatpush1.bf16.msra.mxu0 %v3853
    %3933 = vmatprep.subr.bf16.mxu0 0
    %3934 = vmatpush1.bf16.msra.mxu0 %v3854
    %3935 = vmatprep.mubr.bf16.mxu0 %v3635
    %3936 = vmatmul.mubr.bf16.gmra.mrb[0].mxu0 %v3632
    %v3937 = vpop.f32.mrb[0].mxu0
    %v3938 = vadd.f32 %v3709, %v3937
    %v3939 = vpop.f32.mrb[0].mxu0
    %v3940 = vpop.f32.mrb[0].mxu0
    %v3941 = vpop.f32.mrb[0].mxu0
    %3942 = vdwg.mxu0
    %3943 = vmatprep.subr.bf16.mxu0 0
    %3944 = vmatpush1.bf16.msra.mxu0 %v3855
    %3945 = vmatprep.subr.bf16.mxu0 0
    %3946 = vmatpush1.bf16.msra.mxu0 %v3856
    %3947 = vmatprep.subr.bf16.mxu0 0
    %3948 = vmatpush1.bf16.msra.mxu0 %v3857
    %3949 = vmatprep.subr.bf16.mxu0 0
    %3950 = vmatpush1.bf16.msra.mxu0 %v3858
    %3951 = vmatprep.subr.bf16.mxu0 0
    %3952 = vmatpush1.bf16.msra.mxu0 %v3859
    %3953 = vmatprep.subr.bf16.mxu0 0
    %3954 = vmatpush1.bf16.msra.mxu0 %v3860
    %3955 = vmatprep.subr.bf16.mxu0 0
    %3956 = vmatpush1.bf16.msra.mxu0 %v3861
    %3957 = vmatprep.subr.bf16.mxu0 0
    %3958 = vmatpush1.bf16.msra.mxu0 %v3862
    %3959 = vmatprep.subr.bf16.mxu0 0
    %3960 = vmatpush1.bf16.msra.mxu0 %v3863
    %3961 = vmatprep.subr.bf16.mxu0 0
    %3962 = vmatpush1.bf16.msra.mxu0 %v3864
    %3963 = vmatprep.subr.bf16.mxu0 0
    %3964 = vmatpush1.bf16.msra.mxu0 %v3865
    %3965 = vmatprep.subr.bf16.mxu0 0
    %3966 = vmatpush1.bf16.msra.mxu0 %v3866
    %3967 = vmatprep.subr.bf16.mxu0 0
    %3968 = vmatpush1.bf16.msra.mxu0 %v3867
    %3969 = vmatprep.subr.bf16.mxu0 0
    %3970 = vmatpush1.bf16.msra.mxu0 %v3868
    %3971 = vmatprep.subr.bf16.mxu0 0
    %3972 = vmatpush1.bf16.msra.mxu0 %v3869
    %3973 = vmatprep.subr.bf16.mxu0 0
    %3974 = vmatpush1.bf16.msra.mxu0 %v3870
    %3975 = vmatprep.mubr.bf16.mxu0 %v3638
    %3976 = vmatmul.mubr.bf16.gmra.mrb[0].mxu0 %v3633
    %v3977 = vpop.f32.mrb[0].mxu0
    %v3978 = vadd.f32 %v3938, %v3977
    %v3979 = vpop.f32.mrb[0].mxu0
    %v3980 = vpop.f32.mrb[0].mxu0
    %v3981 = vpop.f32.mrb[0].mxu0
    %3982 = vdwg.mxu0
    %v3983 = vmax.f32 %v3978, 0.0
    %v3984 = vpack.c.bf16 %v3983, %v3983
    %v3985 = vld [vmem:[%s7] sm:$0xf]
    %v3986 = vld [vmem:[%s7 + $0x4] sm:$0xf]
    %v3987 = vld [vmem:[%s7 + $0x8] sm:$0xf]
    %v3988 = vld [vmem:[%s7 + $0xc] sm:$0xf]
    %v3989 = vld [vmem:[%s7 + $0x10] sm:$0xf]
    %v3990 = vld [vmem:[%s7 + $0x14] sm:$0xf]
    %v3991 = vld [vmem:[%s7 + $0x18] sm:$0xf]
    %v3992 = vld [vmem:[%s7 + $0x1c] sm:$0xf]
    %v3993 = vld [vmem:[%s7 + $0x20] sm:$0xf]
    %v3994 = vld [vmem:[%s7 + $0x24] sm:$0xf]
    %v3995 = vld [vmem:[%s7 + $0x28] sm:$0xf]
    %v3996 = vld [vmem:[%s7 + $0x2c] sm:$0xf]
    %v3997 = vld [vmem:[%s7 + $0x30] sm:$0xf]
    %v3998 = vld [vmem:[%s7 + $0x34] sm:$0xf]
    %v3999 = vld [vmem:[%s7 + $0x38] sm:$0xf]
    %v4000 = vld [vmem:[%s7 + $0x3c] sm:$0xf]
    %v4001 = vld [vmem:[#allocation10] sm:$0x1]
    %v4003 = vlaneseq
    %v4004 = vshrl.u32 %v4003, 7
    %v4005 = vsub.s32 0, %v4004
    %v4006 = vrot.slane %v4001, %v4005
    %v4024 = vunpack.c.l.b16 %v3985
    %v4025 = vunpack.c.l.b16 %v3986
    %v4026 = vunpack.c.l.b16 %v3987
    %v4027 = vunpack.c.l.b16 %v3988
    %v4028 = vunpack.c.l.b16 %v3989
    %v4029 = vunpack.c.l.b16 %v3990
    %v4030 = vunpack.c.l.b16 %v3991
    %v4031 = vunpack.c.l.b16 %v3992
    %v4032 = vunpack.c.l.b16 %v3993
    %v4033 = vunpack.c.l.b16 %v3994
    %v4034 = vunpack.c.l.b16 %v3995
    %v4035 = vunpack.c.l.b16 %v3996
    %v4036 = vunpack.c.l.b16 %v3997
    %v4037 = vunpack.c.l.b16 %v3998
    %v4038 = vunpack.c.l.b16 %v3999
    %v4039 = vunpack.c.l.b16 %v4000
    %v4040 = vpack.c.b16 %v4025, %v4024
    %v4041 = vpack.c.b16 %v4027, %v4026
    %v4042 = vpack.c.b16 %v4029, %v4028
    %v4043 = vpack.c.b16 %v4031, %v4030
    %v4044 = vpack.c.b16 %v4033, %v4032
    %v4045 = vpack.c.b16 %v4035, %v4034
    %v4046 = vpack.c.b16 %v4037, %v4036
    %v4047 = vpack.c.b16 %v4039, %v4038
    %4056 = vmatprep.subr.bf16.mxu0 0
    %4057 = vmatpush1.bf16.msra.mxu0 %v4040
    %4058 = vmatprep.subr.bf16.mxu0 0
    %4059 = vmatpush1.bf16.msra.mxu0 %v4041
    %4060 = vmatprep.subr.bf16.mxu0 0
    %4061 = vmatpush1.bf16.msra.mxu0 %v4042
    %4062 = vmatprep.subr.bf16.mxu0 0
    %4063 = vmatpush1.bf16.msra.mxu0 %v4043
    %4064 = vmatprep.subr.bf16.mxu0 0
    %4065 = vmatpush1.bf16.msra.mxu0 %v4044
    %4066 = vmatprep.subr.bf16.mxu0 0
    %4067 = vmatpush1.bf16.msra.mxu0 %v4045
    %4068 = vmatprep.subr.bf16.mxu0 0
    %4069 = vmatpush1.bf16.msra.mxu0 %v4046
    %4070 = vmatprep.subr.bf16.mxu0 0
    %4071 = vmatpush1.bf16.msra.mxu0 %v4047
    %4072 = vmatprep.subr.bf16.mxu0 0
    %4073 = vmatpush1.bf16.msra.mxu0 0
    %4074 = vmatprep.subr.bf16.mxu0 0
    %4075 = vmatpush1.bf16.msra.mxu0 0
    %4076 = vmatprep.subr.bf16.mxu0 0
    %4077 = vmatpush1.bf16.msra.mxu0 0
    %4078 = vmatprep.subr.bf16.mxu0 0
    %4079 = vmatpush1.bf16.msra.mxu0 0
    %4080 = vmatprep.subr.bf16.mxu0 0
    %4081 = vmatpush1.bf16.msra.mxu0 0
    %4082 = vmatprep.subr.bf16.mxu0 0
    %4083 = vmatpush1.bf16.msra.mxu0 0
    %4084 = vmatprep.subr.bf16.mxu0 0
    %4085 = vmatpush1.bf16.msra.mxu0 0
    %4086 = vmatprep.subr.bf16.mxu0 0
    %4087 = vmatpush1.bf16.msra.mxu0 0
    %4088 = vmatprep.mubr.bf16.mxu0 0
    %4089 = vmatmul.mubr.bf16.gmra.mrb[0].mxu0 %v3984
    %v4090 = vpop.f32.mrb[0].mxu0
    %v4091 = vadd.f32 %v4006, %v4090
    %v4092 = vpop.f32.mrb[0].mxu0
    %v4093 = vpop.f32.mrb[0].mxu0
    %v4094 = vpop.f32.mrb[0].mxu0
    %4095 = vdwg.mxu0
    %4096 = vst [vmem:[%s9] sm:$0xff] %v4091
    // Predicated region
    $region62: #{simplenet_forward.1} parent=1 // pred_check
      _
    $region63: #{simplenet_forward.1} parent=1 // pred_check_branch
      %4098 = sbr.rel (0) target = $region65
    $region64: #{simplenet_forward.1} parent=1 // pred_region
      _
    $region65: #{simplenet_forward.1} parent=1 // pred_fallthru
      _
    // Predicated region
    $region66: #{simplenet_forward.1} parent=1 // pred_check
      _
    $region67: #{simplenet_forward.1} parent=1 // pred_check_branch
      %4100 = sbr.rel (0) target = $region69
    $region68: #{simplenet_forward.1} parent=1 // pred_region
      _
    $region69: #{simplenet_forward.1} parent=1 // pred_fallthru
      _
    %4101 = vsyncpa [#allocation3], 1
    %4102 = vsyncpa [#allocation5], 1
    %4103 = vsyncpa [#allocation8], 1
    %4104 = vsyncpa [#allocation11], 1

</llo_original>
